<compile_context>
chip_gen: v6e
topology: v6e:2x2x1
jax: 0.10.0
libtpu: 0.0.40
codegen_flags: <defaults>
</compile_context>

<pallas_src>
import jax
import jax.numpy as jnp
from jax.experimental import pallas as pl
from jax.experimental.pallas import tpu as pltpu


# ----------------------------------------------------------------------------
# Fused Inception kernel (one grid step per batch element)
# ----------------------------------------------------------------------------
def _make_inception_kernel(H, W, Cin, ch1x1, ch3x3red):
    HW = H * W
    WPAD = 8  # sublane-aligned spatial padding on W (>= any conv/pool halo)

    def pad_hw(v, hpad, fill):
        # v: (H, W, C) -> (H + 2*hpad, W + 2*WPAD, C).
        # W-axis concat operands are (WPAD, W, WPAD) = multiples of 8 (aligned
        # sublane concat); the H axis is the untiled outer dim.
        C = v.shape[-1]
        side = jnp.full((H, WPAD, C), fill, jnp.float32)
        v = jnp.concatenate([side, v, side], axis=1)
        top = jnp.full((hpad, W + 2 * WPAD, C), fill, jnp.float32)
        return jnp.concatenate([top, v, top], axis=0)

    def conv_relu_im2col(v, K, w_ref, b_ref):
        # v: (H, W, Cred); w_ref: (K*K*Cred, Cout), rows ordered (dy, dx, cin).
        Cred = v.shape[-1]
        p = (K - 1) // 2
        vp = pad_hw(v, p, 0.0)
        cols = []
        for dy in range(K):
            for dx in range(K):
                x0 = WPAD - p + dx
                cols.append(vp[dy:dy + H, x0:x0 + W, :].reshape(HW, Cred))
        patch = jnp.concatenate(cols, axis=-1)           # (HW, K*K*Cred)
        y = jnp.dot(patch, w_ref[...], preferred_element_type=jnp.float32)
        return jnp.maximum(y + b_ref[...], 0.0)

    def kernel(x_ref, w1_ref, b1_ref, w3_ref, b3_ref, w5_ref, b5_ref,
               wp_ref, bp_ref, o_ref):
        x = x_ref[0]                                      # (HW, Cin), channels on lanes

        # ---- Fused 1x1 convs (branch1 + branch2/branch3 reduces): one matmul.
        r = jnp.dot(x, w1_ref[...], preferred_element_type=jnp.float32)
        r = jnp.maximum(r + b1_ref[...], 0.0)             # (HW, ch1x1+ch3x3red+ch5x5red)
        y1 = r[:, :ch1x1]

        # ---- branch2: 3x3 conv (pad=1) on the reduced activations.
        r2 = r[:, ch1x1:ch1x1 + ch3x3red].reshape(H, W, ch3x3red)
        y3 = conv_relu_im2col(r2, 3, w3_ref, b3_ref)

        # ---- branch3: 5x5 conv (pad=2) on the reduced activations.
        r3 = r[:, ch1x1 + ch3x3red:].reshape(H, W, r.shape[-1] - ch1x1 - ch3x3red)
        y5 = conv_relu_im2col(r3, 5, w5_ref, b5_ref)

        # ---- branch4: 3x3/s1/p1 max-pool (-inf padding, PyTorch semantics) + 1x1 proj.
        xp = pad_hw(x.reshape(H, W, Cin), 1, -jnp.inf)
        m = jnp.full((H, W, Cin), -jnp.inf, jnp.float32)
        for dy in range(3):
            for dx in range(3):
                x0 = WPAD - 1 + dx
                m = jnp.maximum(m, xp[dy:dy + H, x0:x0 + W, :])
        yp = jnp.dot(m.reshape(HW, Cin), wp_ref[...],
                     preferred_element_type=jnp.float32)
        yp = jnp.maximum(yp + bp_ref[...], 0.0)

        # ---- Channel concat in-register, single channels-last store.
        o_ref[0] = jnp.concatenate([y1, y3, y5, yp], axis=-1)

    return kernel


# ----------------------------------------------------------------------------
# Parameters
# ----------------------------------------------------------------------------
def init_inception_params(key, in_channels, ch1x1, ch3x3red, ch3x3,
                          ch5x5red, ch5x5, pool_proj):
    """Deterministic init. Conv weights stored as (K, K, Cin, Cout) (HWIO)."""
    def conv_p(k, K, cin, cout):
        kw, kb = jax.random.split(k)
        scale = 1.0 / jnp.sqrt(K * K * cin)
        w = jax.random.uniform(kw, (K, K, cin, cout), jnp.float32, -scale, scale)
        b = jax.random.uniform(kb, (cout,), jnp.float32, -scale, scale)
        return w, b

    keys = jax.random.split(key, 6)
    return {
        "b1": conv_p(keys[0], 1, in_channels, ch1x1),
        "b2a": conv_p(keys[1], 1, in_channels, ch3x3red),
        "b2b": conv_p(keys[2], 3, ch3x3red, ch3x3),
        "b3a": conv_p(keys[3], 1, in_channels, ch5x5red),
        "b3b": conv_p(keys[4], 5, ch5x5red, ch5x5),
        "b4": conv_p(keys[5], 1, in_channels, pool_proj),
    }


# ----------------------------------------------------------------------------
# Forward pass (single pallas_call)
# ----------------------------------------------------------------------------
@jax.jit
def inception_forward(params, x_nchw):
    N, Cin, H, W = x_nchw.shape
    HW = H * W

    w_b1, bias_b1 = params["b1"]
    w_b2a, bias_b2a = params["b2a"]
    w_b2b, bias_b2b = params["b2b"]
    w_b3a, bias_b3a = params["b3a"]
    w_b3b, bias_b3b = params["b3b"]
    w_b4, bias_b4 = params["b4"]

    ch1x1, ch3x3red, ch3x3 = w_b1.shape[-1], w_b2a.shape[-1], w_b2b.shape[-1]
    ch5x5red, ch5x5, pool_proj = w_b3a.shape[-1], w_b3b.shape[-1], w_b4.shape[-1]
    c_red = ch1x1 + ch3x3red + ch5x5red
    c_out = ch1x1 + ch3x3 + ch5x5 + pool_proj

    # NCHW -> (N, H*W, Cin): channels on TPU lanes, flattened spatial as MXU rows.
    x = jnp.transpose(x_nchw, (0, 2, 3, 1)).reshape(N, HW, Cin).astype(jnp.float32)

    # Fuse / pre-flatten weights once (tiny XLA ops under jit).
    w1 = jnp.concatenate([w_b1.reshape(Cin, ch1x1),
                          w_b2a.reshape(Cin, ch3x3red),
                          w_b3a.reshape(Cin, ch5x5red)], axis=-1)       # (Cin, c_red)
    b1 = jnp.concatenate([bias_b1, bias_b2a, bias_b3a]).reshape(1, c_red)
    w3 = w_b2b.reshape(9 * ch3x3red, ch3x3)        # rows ordered (dy, dx, cin)
    b3 = bias_b2b.reshape(1, ch3x3)
    w5 = w_b3b.reshape(25 * ch5x5red, ch5x5)
    b5 = bias_b3b.reshape(1, ch5x5)
    wp = w_b4.reshape(Cin, pool_proj)
    bp = bias_b4.reshape(1, pool_proj)

    kernel = _make_inception_kernel(H, W, Cin, ch1x1, ch3x3red)
    const = lambda n: (0, 0)

    out = pl.pallas_call(
        kernel,
        out_shape=jax.ShapeDtypeStruct((N, HW, c_out), jnp.float32),
        grid=(N,),
        in_specs=[
            pl.BlockSpec((1, HW, Cin), lambda n: (n, 0, 0)),
            pl.BlockSpec((Cin, c_red), const),
            pl.BlockSpec((1, c_red), const),
            pl.BlockSpec((9 * ch3x3red, ch3x3), const),
            pl.BlockSpec((1, ch3x3), const),
            pl.BlockSpec((25 * ch5x5red, ch5x5), const),
            pl.BlockSpec((1, ch5x5), const),
            pl.BlockSpec((Cin, pool_proj), const),
            pl.BlockSpec((1, pool_proj), const),
        ],
        out_specs=pl.BlockSpec((1, HW, c_out), lambda n: (n, 0, 0)),
        compiler_params=pltpu.CompilerParams(
            dimension_semantics=("parallel",)),
    )(x, w1, b1, w3, b3, w5, b5, wp, bp)

    # (N, H*W, C_total) -> NHWC (metadata-only reshape) -> NCHW like PyTorch.
    return jnp.transpose(out.reshape(N, H, W, c_out), (0, 3, 1, 2))


# ----------------------------------------------------------------------------
# Pure-JAX (XLA) reference for correctness checking
# ----------------------------------------------------------------------------
def _reference_forward(params, x_nchw):
    x = jnp.transpose(x_nchw, (0, 2, 3, 1)).astype(jnp.float32)   # NHWC

    def conv(v, w, b, pad):
        y = jax.lax.conv_general_dilated(
            v, w, window_strides=(1, 1), padding=[(pad, pad), (pad, pad)],
            dimension_numbers=("NHWC", "HWIO", "NHWC"),
            precision=jax.lax.Precision.HIGHEST)
        return jnp.maximum(y + b, 0.0)

    b1 = conv(x, *params["b1"], 0)
    b2 = conv(conv(x, *params["b2a"], 0), *params["b2b"], 1)
    b3 = conv(conv(x, *params["b3a"], 0), *params["b3b"], 2)
    pooled = jax.lax.reduce_window(
        x, -jnp.inf, jax.lax.max, (1, 3, 3, 1), (1, 1, 1, 1),
        [(0, 0), (1, 1), (1, 1), (0, 0)])
    b4 = conv(pooled, *params["b4"], 0)
    out = jnp.concatenate([b1, b2, b3, b4], axis=-1)
    return jnp.transpose(out, (0, 3, 1, 2))


if __name__ == "__main__":
    key = jax.random.PRNGKey(0)
    k_param, k_x = jax.random.split(key)

    # Small shapes: batch=2, in_channels=4, spatial=16x16
    in_channels, H, W, N = 4, 16, 16, 2
    ch1x1, ch3x3red, ch3x3, ch5x5red, ch5x5, pool_proj = 8, 4, 8, 4, 8, 8

    params = init_inception_params(
        k_param, in_channels, ch1x1, ch3x3red, ch3x3, ch5x5red, ch5x5, pool_proj
    )
    x = jax.random.normal(k_x, (N, in_channels, H, W), jnp.float32)  # NCHW input

    out = inception_forward(params, x)
    jax.block_until_ready(out)

    expected_c = ch1x1 + ch3x3 + ch5x5 + pool_proj
    assert out.shape == (N, expected_c, H, W), out.shape
    assert jnp.all(jnp.isfinite(out)), "non-finite output"
    assert jnp.all(out >= 0.0), "ReLU output must be non-negative"

    ref = _reference_forward(params, x)
    max_err = float(jnp.max(jnp.abs(out - ref)))
    assert max_err < 1e-1, f"mismatch vs XLA reference (max abs err {max_err})"
    print("KERNEL_OK")
</pallas_src>

<mosaic_0001>
module attributes {stable_mosaic.version = 11 : i64} {
  func.func @kernel(%arg0: i32, %arg1: memref<1x256x4xf32, #tpu.memory_space<vmem>>, %arg2: memref<4x16xf32, #tpu.memory_space<vmem>>, %arg3: memref<1x16xf32, #tpu.memory_space<vmem>>, %arg4: memref<36x8xf32, #tpu.memory_space<vmem>>, %arg5: memref<1x8xf32, #tpu.memory_space<vmem>>, %arg6: memref<100x8xf32, #tpu.memory_space<vmem>>, %arg7: memref<1x8xf32, #tpu.memory_space<vmem>>, %arg8: memref<4x8xf32, #tpu.memory_space<vmem>>, %arg9: memref<1x8xf32, #tpu.memory_space<vmem>>, %arg10: memref<1x256x32xf32, #tpu.memory_space<vmem>>) attributes {dimension_semantics = [#tpu.dimension_semantics<parallel>], iteration_bounds = array<i64: 2>, scalar_prefetch = 0 : i64, scratch_operands = 0 : i64, tpu.core_type = #tpu.core_type<tc>, window_params = [{transform_indices = @transform_0, window_bounds = array<i64: 1, 256, 4>}, {pipeline_mode = #tpu.pipeline_mode<synchronous>, transform_indices = @transform_1, window_bounds = array<i64: 4, 16>}, {pipeline_mode = #tpu.pipeline_mode<synchronous>, transform_indices = @transform_2, window_bounds = array<i64: 1, 16>}, {pipeline_mode = #tpu.pipeline_mode<synchronous>, transform_indices = @transform_3, window_bounds = array<i64: 36, 8>}, {pipeline_mode = #tpu.pipeline_mode<synchronous>, transform_indices = @transform_4, window_bounds = array<i64: 1, 8>}, {pipeline_mode = #tpu.pipeline_mode<synchronous>, transform_indices = @transform_5, window_bounds = array<i64: 100, 8>}, {pipeline_mode = #tpu.pipeline_mode<synchronous>, transform_indices = @transform_6, window_bounds = array<i64: 1, 8>}, {pipeline_mode = #tpu.pipeline_mode<synchronous>, transform_indices = @transform_7, window_bounds = array<i64: 4, 8>}, {pipeline_mode = #tpu.pipeline_mode<synchronous>, transform_indices = @transform_8, window_bounds = array<i64: 1, 8>}, {transform_indices = @transform_9, window_bounds = array<i64: 1, 256, 32>}]} {
    %c0 = arith.constant 0 : index
    %c0_0 = arith.constant 0 : index
    %c0_1 = arith.constant 0 : index
    %0 = vector.load %arg1[%c0, %c0_0, %c0_1] : memref<1x256x4xf32, #tpu.memory_space<vmem>>, vector<1x256x4xf32>
    %1 = vector.shape_cast %0 : vector<1x256x4xf32> to vector<256x4xf32>
    %c0_2 = arith.constant 0 : index
    %c0_3 = arith.constant 0 : index
    %2 = vector.load %arg2[%c0_2, %c0_3] : memref<4x16xf32, #tpu.memory_space<vmem>>, vector<4x16xf32>
    %cst = arith.constant dense<0.000000e+00> : vector<256x16xf32>
    %3 = tpu.matmul %1, %2, %cst {dimension_numbers = #tpu.dot_dimension_numbers<[1], [0], [0], [1], [0, 0, 1, 1], [], []>} : vector<256x4xf32>, vector<4x16xf32>, vector<256x16xf32> -> vector<256x16xf32>
    %c0_4 = arith.constant 0 : index
    %c0_5 = arith.constant 0 : index
    %4 = vector.load %arg3[%c0_4, %c0_5] : memref<1x16xf32, #tpu.memory_space<vmem>>, vector<1x16xf32>
    %5 = vector.broadcast %4 : vector<1x16xf32> to vector<256x16xf32>
    %6 = arith.addf %3, %5 : vector<256x16xf32>
    %cst_6 = arith.constant 0.000000e+00 : f32
    %7 = vector.broadcast %cst_6 : f32 to vector<256x16xf32>
    %8 = arith.maximumf %6, %7 : vector<256x16xf32>
    %9 = vector.extract_strided_slice %8 {offsets = [0, 0], sizes = [256, 8], strides = [1, 1]} : vector<256x16xf32> to vector<256x8xf32>
    %10 = vector.extract_strided_slice %8 {offsets = [0, 8], sizes = [256, 4], strides = [1, 1]} : vector<256x16xf32> to vector<256x4xf32>
    %11 = vector.shape_cast %10 : vector<256x4xf32> to vector<16x16x4xf32>
    %cst_7 = arith.constant 0.000000e+00 : f32
    %12 = vector.broadcast %cst_7 : f32 to vector<16x8x4xf32>
    %13 = tpu.concatenate %12, %11, %12 in 1 : vector<16x8x4xf32>, vector<16x16x4xf32>, vector<16x8x4xf32> -> vector<16x32x4xf32>
    %cst_8 = arith.constant 0.000000e+00 : f32
    %14 = vector.broadcast %cst_8 : f32 to vector<1x32x4xf32>
    %15 = tpu.concatenate %14, %13, %14 in 0 : vector<1x32x4xf32>, vector<16x32x4xf32>, vector<1x32x4xf32> -> vector<18x32x4xf32>
    %16 = vector.extract_strided_slice %15 {offsets = [0, 7, 0], sizes = [16, 16, 4], strides = [1, 1, 1]} : vector<18x32x4xf32> to vector<16x16x4xf32>
    %17 = vector.shape_cast %16 : vector<16x16x4xf32> to vector<256x4xf32>
    %18 = vector.extract_strided_slice %15 {offsets = [0, 8, 0], sizes = [16, 16, 4], strides = [1, 1, 1]} : vector<18x32x4xf32> to vector<16x16x4xf32>
    %19 = vector.shape_cast %18 : vector<16x16x4xf32> to vector<256x4xf32>
    %20 = vector.extract_strided_slice %15 {offsets = [0, 9, 0], sizes = [16, 16, 4], strides = [1, 1, 1]} : vector<18x32x4xf32> to vector<16x16x4xf32>
    %21 = vector.shape_cast %20 : vector<16x16x4xf32> to vector<256x4xf32>
    %22 = vector.extract_strided_slice %15 {offsets = [1, 7, 0], sizes = [16, 16, 4], strides = [1, 1, 1]} : vector<18x32x4xf32> to vector<16x16x4xf32>
    %23 = vector.shape_cast %22 : vector<16x16x4xf32> to vector<256x4xf32>
    %24 = vector.extract_strided_slice %15 {offsets = [1, 8, 0], sizes = [16, 16, 4], strides = [1, 1, 1]} : vector<18x32x4xf32> to vector<16x16x4xf32>
    %25 = vector.shape_cast %24 : vector<16x16x4xf32> to vector<256x4xf32>
    %26 = vector.extract_strided_slice %15 {offsets = [1, 9, 0], sizes = [16, 16, 4], strides = [1, 1, 1]} : vector<18x32x4xf32> to vector<16x16x4xf32>
    %27 = vector.shape_cast %26 : vector<16x16x4xf32> to vector<256x4xf32>
    %28 = vector.extract_strided_slice %15 {offsets = [2, 7, 0], sizes = [16, 16, 4], strides = [1, 1, 1]} : vector<18x32x4xf32> to vector<16x16x4xf32>
    %29 = vector.shape_cast %28 : vector<16x16x4xf32> to vector<256x4xf32>
    %30 = vector.extract_strided_slice %15 {offsets = [2, 8, 0], sizes = [16, 16, 4], strides = [1, 1, 1]} : vector<18x32x4xf32> to vector<16x16x4xf32>
    %31 = vector.shape_cast %30 : vector<16x16x4xf32> to vector<256x4xf32>
    %32 = vector.extract_strided_slice %15 {offsets = [2, 9, 0], sizes = [16, 16, 4], strides = [1, 1, 1]} : vector<18x32x4xf32> to vector<16x16x4xf32>
    %33 = vector.shape_cast %32 : vector<16x16x4xf32> to vector<256x4xf32>
    %34 = tpu.concatenate %17, %19, %21, %23, %25, %27, %29, %31, %33 in 1 : vector<256x4xf32>, vector<256x4xf32>, vector<256x4xf32>, vector<256x4xf32>, vector<256x4xf32>, vector<256x4xf32>, vector<256x4xf32>, vector<256x4xf32>, vector<256x4xf32> -> vector<256x36xf32>
    %c0_9 = arith.constant 0 : index
    %c0_10 = arith.constant 0 : index
    %35 = vector.load %arg4[%c0_9, %c0_10] : memref<36x8xf32, #tpu.memory_space<vmem>>, vector<36x8xf32>
    %cst_11 = arith.constant dense<0.000000e+00> : vector<256x8xf32>
    %36 = tpu.matmul %34, %35, %cst_11 {dimension_numbers = #tpu.dot_dimension_numbers<[1], [0], [0], [1], [0, 0, 1, 1], [], []>} : vector<256x36xf32>, vector<36x8xf32>, vector<256x8xf32> -> vector<256x8xf32>
    %c0_12 = arith.constant 0 : index
    %c0_13 = arith.constant 0 : index
    %37 = vector.load %arg5[%c0_12, %c0_13] : memref<1x8xf32, #tpu.memory_space<vmem>>, vector<1x8xf32>
    %38 = vector.broadcast %37 : vector<1x8xf32> to vector<256x8xf32>
    %39 = arith.addf %36, %38 : vector<256x8xf32>
    %cst_14 = arith.constant 0.000000e+00 : f32
    %40 = vector.broadcast %cst_14 : f32 to vector<256x8xf32>
    %41 = arith.maximumf %39, %40 : vector<256x8xf32>
    %42 = vector.extract_strided_slice %8 {offsets = [0, 12], sizes = [256, 4], strides = [1, 1]} : vector<256x16xf32> to vector<256x4xf32>
    %43 = vector.shape_cast %42 : vector<256x4xf32> to vector<16x16x4xf32>
    %cst_15 = arith.constant 0.000000e+00 : f32
    %44 = vector.broadcast %cst_15 : f32 to vector<16x8x4xf32>
    %45 = tpu.concatenate %44, %43, %44 in 1 : vector<16x8x4xf32>, vector<16x16x4xf32>, vector<16x8x4xf32> -> vector<16x32x4xf32>
    %cst_16 = arith.constant 0.000000e+00 : f32
    %46 = vector.broadcast %cst_16 : f32 to vector<2x32x4xf32>
    %47 = tpu.concatenate %46, %45, %46 in 0 : vector<2x32x4xf32>, vector<16x32x4xf32>, vector<2x32x4xf32> -> vector<20x32x4xf32>
    %48 = vector.extract_strided_slice %47 {offsets = [0, 6, 0], sizes = [16, 16, 4], strides = [1, 1, 1]} : vector<20x32x4xf32> to vector<16x16x4xf32>
    %49 = vector.shape_cast %48 : vector<16x16x4xf32> to vector<256x4xf32>
    %50 = vector.extract_strided_slice %47 {offsets = [0, 7, 0], sizes = [16, 16, 4], strides = [1, 1, 1]} : vector<20x32x4xf32> to vector<16x16x4xf32>
    %51 = vector.shape_cast %50 : vector<16x16x4xf32> to vector<256x4xf32>
    %52 = vector.extract_strided_slice %47 {offsets = [0, 8, 0], sizes = [16, 16, 4], strides = [1, 1, 1]} : vector<20x32x4xf32> to vector<16x16x4xf32>
    %53 = vector.shape_cast %52 : vector<16x16x4xf32> to vector<256x4xf32>
    %54 = vector.extract_strided_slice %47 {offsets = [0, 9, 0], sizes = [16, 16, 4], strides = [1, 1, 1]} : vector<20x32x4xf32> to vector<16x16x4xf32>
    %55 = vector.shape_cast %54 : vector<16x16x4xf32> to vector<256x4xf32>
    %56 = vector.extract_strided_slice %47 {offsets = [0, 10, 0], sizes = [16, 16, 4], strides = [1, 1, 1]} : vector<20x32x4xf32> to vector<16x16x4xf32>
    %57 = vector.shape_cast %56 : vector<16x16x4xf32> to vector<256x4xf32>
    %58 = vector.extract_strided_slice %47 {offsets = [1, 6, 0], sizes = [16, 16, 4], strides = [1, 1, 1]} : vector<20x32x4xf32> to vector<16x16x4xf32>
    %59 = vector.shape_cast %58 : vector<16x16x4xf32> to vector<256x4xf32>
    %60 = vector.extract_strided_slice %47 {offsets = [1, 7, 0], sizes = [16, 16, 4], strides = [1, 1, 1]} : vector<20x32x4xf32> to vector<16x16x4xf32>
    %61 = vector.shape_cast %60 : vector<16x16x4xf32> to vector<256x4xf32>
    %62 = vector.extract_strided_slice %47 {offsets = [1, 8, 0], sizes = [16, 16, 4], strides = [1, 1, 1]} : vector<20x32x4xf32> to vector<16x16x4xf32>
    %63 = vector.shape_cast %62 : vector<16x16x4xf32> to vector<256x4xf32>
    %64 = vector.extract_strided_slice %47 {offsets = [1, 9, 0], sizes = [16, 16, 4], strides = [1, 1, 1]} : vector<20x32x4xf32> to vector<16x16x4xf32>
    %65 = vector.shape_cast %64 : vector<16x16x4xf32> to vector<256x4xf32>
    %66 = vector.extract_strided_slice %47 {offsets = [1, 10, 0], sizes = [16, 16, 4], strides = [1, 1, 1]} : vector<20x32x4xf32> to vector<16x16x4xf32>
    %67 = vector.shape_cast %66 : vector<16x16x4xf32> to vector<256x4xf32>
    %68 = vector.extract_strided_slice %47 {offsets = [2, 6, 0], sizes = [16, 16, 4], strides = [1, 1, 1]} : vector<20x32x4xf32> to vector<16x16x4xf32>
    %69 = vector.shape_cast %68 : vector<16x16x4xf32> to vector<256x4xf32>
    %70 = vector.extract_strided_slice %47 {offsets = [2, 7, 0], sizes = [16, 16, 4], strides = [1, 1, 1]} : vector<20x32x4xf32> to vector<16x16x4xf32>
    %71 = vector.shape_cast %70 : vector<16x16x4xf32> to vector<256x4xf32>
    %72 = vector.extract_strided_slice %47 {offsets = [2, 8, 0], sizes = [16, 16, 4], strides = [1, 1, 1]} : vector<20x32x4xf32> to vector<16x16x4xf32>
    %73 = vector.shape_cast %72 : vector<16x16x4xf32> to vector<256x4xf32>
    %74 = vector.extract_strided_slice %47 {offsets = [2, 9, 0], sizes = [16, 16, 4], strides = [1, 1, 1]} : vector<20x32x4xf32> to vector<16x16x4xf32>
    %75 = vector.shape_cast %74 : vector<16x16x4xf32> to vector<256x4xf32>
    %76 = vector.extract_strided_slice %47 {offsets = [2, 10, 0], sizes = [16, 16, 4], strides = [1, 1, 1]} : vector<20x32x4xf32> to vector<16x16x4xf32>
    %77 = vector.shape_cast %76 : vector<16x16x4xf32> to vector<256x4xf32>
    %78 = vector.extract_strided_slice %47 {offsets = [3, 6, 0], sizes = [16, 16, 4], strides = [1, 1, 1]} : vector<20x32x4xf32> to vector<16x16x4xf32>
    %79 = vector.shape_cast %78 : vector<16x16x4xf32> to vector<256x4xf32>
    %80 = vector.extract_strided_slice %47 {offsets = [3, 7, 0], sizes = [16, 16, 4], strides = [1, 1, 1]} : vector<20x32x4xf32> to vector<16x16x4xf32>
    %81 = vector.shape_cast %80 : vector<16x16x4xf32> to vector<256x4xf32>
    %82 = vector.extract_strided_slice %47 {offsets = [3, 8, 0], sizes = [16, 16, 4], strides = [1, 1, 1]} : vector<20x32x4xf32> to vector<16x16x4xf32>
    %83 = vector.shape_cast %82 : vector<16x16x4xf32> to vector<256x4xf32>
    %84 = vector.extract_strided_slice %47 {offsets = [3, 9, 0], sizes = [16, 16, 4], strides = [1, 1, 1]} : vector<20x32x4xf32> to vector<16x16x4xf32>
    %85 = vector.shape_cast %84 : vector<16x16x4xf32> to vector<256x4xf32>
    %86 = vector.extract_strided_slice %47 {offsets = [3, 10, 0], sizes = [16, 16, 4], strides = [1, 1, 1]} : vector<20x32x4xf32> to vector<16x16x4xf32>
    %87 = vector.shape_cast %86 : vector<16x16x4xf32> to vector<256x4xf32>
    %88 = vector.extract_strided_slice %47 {offsets = [4, 6, 0], sizes = [16, 16, 4], strides = [1, 1, 1]} : vector<20x32x4xf32> to vector<16x16x4xf32>
    %89 = vector.shape_cast %88 : vector<16x16x4xf32> to vector<256x4xf32>
    %90 = vector.extract_strided_slice %47 {offsets = [4, 7, 0], sizes = [16, 16, 4], strides = [1, 1, 1]} : vector<20x32x4xf32> to vector<16x16x4xf32>
    %91 = vector.shape_cast %90 : vector<16x16x4xf32> to vector<256x4xf32>
    %92 = vector.extract_strided_slice %47 {offsets = [4, 8, 0], sizes = [16, 16, 4], strides = [1, 1, 1]} : vector<20x32x4xf32> to vector<16x16x4xf32>
    %93 = vector.shape_cast %92 : vector<16x16x4xf32> to vector<256x4xf32>
    %94 = vector.extract_strided_slice %47 {offsets = [4, 9, 0], sizes = [16, 16, 4], strides = [1, 1, 1]} : vector<20x32x4xf32> to vector<16x16x4xf32>
    %95 = vector.shape_cast %94 : vector<16x16x4xf32> to vector<256x4xf32>
    %96 = vector.extract_strided_slice %47 {offsets = [4, 10, 0], sizes = [16, 16, 4], strides = [1, 1, 1]} : vector<20x32x4xf32> to vector<16x16x4xf32>
    %97 = vector.shape_cast %96 : vector<16x16x4xf32> to vector<256x4xf32>
    %98 = tpu.concatenate %49, %51, %53, %55, %57, %59, %61, %63, %65, %67, %69, %71, %73, %75, %77, %79 in 1 : vector<256x4xf32>, vector<256x4xf32>, vector<256x4xf32>, vector<256x4xf32>, vector<256x4xf32>, vector<256x4xf32>, vector<256x4xf32>, vector<256x4xf32>, vector<256x4xf32>, vector<256x4xf32>, vector<256x4xf32>, vector<256x4xf32>, vector<256x4xf32>, vector<256x4xf32>, vector<256x4xf32>, vector<256x4xf32> -> vector<256x64xf32>
    %99 = tpu.concatenate %81, %83, %85, %87, %89, %91, %93, %95, %97 in 1 : vector<256x4xf32>, vector<256x4xf32>, vector<256x4xf32>, vector<256x4xf32>, vector<256x4xf32>, vector<256x4xf32>, vector<256x4xf32>, vector<256x4xf32>, vector<256x4xf32> -> vector<256x36xf32>
    %100 = tpu.concatenate %98, %99 in 1 : vector<256x64xf32>, vector<256x36xf32> -> vector<256x100xf32>
    %c0_17 = arith.constant 0 : index
    %c0_18 = arith.constant 0 : index
    %101 = vector.load %arg6[%c0_17, %c0_18] : memref<100x8xf32, #tpu.memory_space<vmem>>, vector<100x8xf32>
    %cst_19 = arith.constant dense<0.000000e+00> : vector<256x8xf32>
    %102 = tpu.matmul %100, %101, %cst_19 {dimension_numbers = #tpu.dot_dimension_numbers<[1], [0], [0], [1], [0, 0, 1, 1], [], []>} : vector<256x100xf32>, vector<100x8xf32>, vector<256x8xf32> -> vector<256x8xf32>
    %c0_20 = arith.constant 0 : index
    %c0_21 = arith.constant 0 : index
    %103 = vector.load %arg7[%c0_20, %c0_21] : memref<1x8xf32, #tpu.memory_space<vmem>>, vector<1x8xf32>
    %104 = vector.broadcast %103 : vector<1x8xf32> to vector<256x8xf32>
    %105 = arith.addf %102, %104 : vector<256x8xf32>
    %cst_22 = arith.constant 0.000000e+00 : f32
    %106 = vector.broadcast %cst_22 : f32 to vector<256x8xf32>
    %107 = arith.maximumf %105, %106 : vector<256x8xf32>
    %108 = vector.shape_cast %1 : vector<256x4xf32> to vector<16x16x4xf32>
    %cst_23 = arith.constant 0xFF800000 : f32
    %109 = vector.broadcast %cst_23 : f32 to vector<16x8x4xf32>
    %110 = tpu.concatenate %109, %108, %109 in 1 : vector<16x8x4xf32>, vector<16x16x4xf32>, vector<16x8x4xf32> -> vector<16x32x4xf32>
    %cst_24 = arith.constant 0xFF800000 : f32
    %111 = vector.broadcast %cst_24 : f32 to vector<1x32x4xf32>
    %112 = tpu.concatenate %111, %110, %111 in 0 : vector<1x32x4xf32>, vector<16x32x4xf32>, vector<1x32x4xf32> -> vector<18x32x4xf32>
    %cst_25 = arith.constant 0xFF800000 : f32
    %113 = vector.broadcast %cst_25 : f32 to vector<16x16x4xf32>
    %114 = vector.extract_strided_slice %112 {offsets = [0, 7, 0], sizes = [16, 16, 4], strides = [1, 1, 1]} : vector<18x32x4xf32> to vector<16x16x4xf32>
    %115 = arith.maximumf %113, %114 : vector<16x16x4xf32>
    %116 = vector.extract_strided_slice %112 {offsets = [0, 8, 0], sizes = [16, 16, 4], strides = [1, 1, 1]} : vector<18x32x4xf32> to vector<16x16x4xf32>
    %117 = arith.maximumf %115, %116 : vector<16x16x4xf32>
    %118 = vector.extract_strided_slice %112 {offsets = [0, 9, 0], sizes = [16, 16, 4], strides = [1, 1, 1]} : vector<18x32x4xf32> to vector<16x16x4xf32>
    %119 = arith.maximumf %117, %118 : vector<16x16x4xf32>
    %120 = vector.extract_strided_slice %112 {offsets = [1, 7, 0], sizes = [16, 16, 4], strides = [1, 1, 1]} : vector<18x32x4xf32> to vector<16x16x4xf32>
    %121 = arith.maximumf %119, %120 : vector<16x16x4xf32>
    %122 = vector.extract_strided_slice %112 {offsets = [1, 8, 0], sizes = [16, 16, 4], strides = [1, 1, 1]} : vector<18x32x4xf32> to vector<16x16x4xf32>
    %123 = arith.maximumf %121, %122 : vector<16x16x4xf32>
    %124 = vector.extract_strided_slice %112 {offsets = [1, 9, 0], sizes = [16, 16, 4], strides = [1, 1, 1]} : vector<18x32x4xf32> to vector<16x16x4xf32>
    %125 = arith.maximumf %123, %124 : vector<16x16x4xf32>
    %126 = vector.extract_strided_slice %112 {offsets = [2, 7, 0], sizes = [16, 16, 4], strides = [1, 1, 1]} : vector<18x32x4xf32> to vector<16x16x4xf32>
    %127 = arith.maximumf %125, %126 : vector<16x16x4xf32>
    %128 = vector.extract_strided_slice %112 {offsets = [2, 8, 0], sizes = [16, 16, 4], strides = [1, 1, 1]} : vector<18x32x4xf32> to vector<16x16x4xf32>
    %129 = arith.maximumf %127, %128 : vector<16x16x4xf32>
    %130 = vector.extract_strided_slice %112 {offsets = [2, 9, 0], sizes = [16, 16, 4], strides = [1, 1, 1]} : vector<18x32x4xf32> to vector<16x16x4xf32>
    %131 = arith.maximumf %129, %130 : vector<16x16x4xf32>
    %132 = vector.shape_cast %131 : vector<16x16x4xf32> to vector<256x4xf32>
    %c0_26 = arith.constant 0 : index
    %c0_27 = arith.constant 0 : index
    %133 = vector.load %arg8[%c0_26, %c0_27] : memref<4x8xf32, #tpu.memory_space<vmem>>, vector<4x8xf32>
    %cst_28 = arith.constant dense<0.000000e+00> : vector<256x8xf32>
    %134 = tpu.matmul %132, %133, %cst_28 {dimension_numbers = #tpu.dot_dimension_numbers<[1], [0], [0], [1], [0, 0, 1, 1], [], []>} : vector<256x4xf32>, vector<4x8xf32>, vector<256x8xf32> -> vector<256x8xf32>
    %c0_29 = arith.constant 0 : index
    %c0_30 = arith.constant 0 : index
    %135 = vector.load %arg9[%c0_29, %c0_30] : memref<1x8xf32, #tpu.memory_space<vmem>>, vector<1x8xf32>
    %136 = vector.broadcast %135 : vector<1x8xf32> to vector<256x8xf32>
    %137 = arith.addf %134, %136 : vector<256x8xf32>
    %cst_31 = arith.constant 0.000000e+00 : f32
    %138 = vector.broadcast %cst_31 : f32 to vector<256x8xf32>
    %139 = arith.maximumf %137, %138 : vector<256x8xf32>
    %140 = tpu.concatenate %9, %41, %107, %139 in 1 : vector<256x8xf32>, vector<256x8xf32>, vector<256x8xf32>, vector<256x8xf32> -> vector<256x32xf32>
    %c0_32 = arith.constant 0 : index
    %c0_33 = arith.constant 0 : index
    %c0_34 = arith.constant 0 : index
    %141 = vector.load %arg10[%c0_32, %c0_33, %c0_34] : memref<1x256x32xf32, #tpu.memory_space<vmem>>, vector<1x256x32xf32>
    %142 = vector.shape_cast %141 : vector<1x256x32xf32> to vector<256x32xf32>
    %143 = vector.shape_cast %140 : vector<256x32xf32> to vector<1x256x32xf32>
    tpu.vector_store %arg10[%c0_32, %c0_33, %c0_34], %143 {strides = array<i32>} : memref<1x256x32xf32, #tpu.memory_space<vmem>>, vector<1x256x32xf32>,
    return
  }
  func.func @transform_0(%arg0: i32) -> (i32, i32, i32) {
    %c0_i32 = arith.constant 0 : i32
    %c0_i32_0 = arith.constant 0 : i32
    %c0_i32_1 = arith.constant 0 : i32
    return %arg0, %c0_i32, %c0_i32_0 : i32, i32, i32
  }
  func.func @transform_1(%arg0: i32) -> (i32, i32) {
    %c0_i32 = arith.constant 0 : i32
    %c0_i32_0 = arith.constant 0 : i32
    %c0_i32_1 = arith.constant 0 : i32
    return %c0_i32, %c0_i32_0 : i32, i32
  }
  func.func @transform_2(%arg0: i32) -> (i32, i32) {
    %c0_i32 = arith.constant 0 : i32
    %c0_i32_0 = arith.constant 0 : i32
    %c0_i32_1 = arith.constant 0 : i32
    return %c0_i32, %c0_i32_0 : i32, i32
  }
  func.func @transform_3(%arg0: i32) -> (i32, i32) {
    %c0_i32 = arith.constant 0 : i32
    %c0_i32_0 = arith.constant 0 : i32
    %c0_i32_1 = arith.constant 0 : i32
    return %c0_i32, %c0_i32_0 : i32, i32
  }
  func.func @transform_4(%arg0: i32) -> (i32, i32) {
    %c0_i32 = arith.constant 0 : i32
    %c0_i32_0 = arith.constant 0 : i32
    %c0_i32_1 = arith.constant 0 : i32
    return %c0_i32, %c0_i32_0 : i32, i32
  }
  func.func @transform_5(%arg0: i32) -> (i32, i32) {
    %c0_i32 = arith.constant 0 : i32
    %c0_i32_0 = arith.constant 0 : i32
    %c0_i32_1 = arith.constant 0 : i32
    return %c0_i32, %c0_i32_0 : i32, i32
  }
  func.func @transform_6(%arg0: i32) -> (i32, i32) {
    %c0_i32 = arith.constant 0 : i32
    %c0_i32_0 = arith.constant 0 : i32
    %c0_i32_1 = arith.constant 0 : i32
    return %c0_i32, %c0_i32_0 : i32, i32
  }
  func.func @transform_7(%arg0: i32) -> (i32, i32) {
    %c0_i32 = arith.constant 0 : i32
    %c0_i32_0 = arith.constant 0 : i32
    %c0_i32_1 = arith.constant 0 : i32
    return %c0_i32, %c0_i32_0 : i32, i32
  }
  func.func @transform_8(%arg0: i32) -> (i32, i32) {
    %c0_i32 = arith.constant 0 : i32
    %c0_i32_0 = arith.constant 0 : i32
    %c0_i32_1 = arith.constant 0 : i32
    return %c0_i32, %c0_i32_0 : i32, i32
  }
  func.func @transform_9(%arg0: i32) -> (i32, i32, i32) {
    %c0_i32 = arith.constant 0 : i32
    %c0_i32_0 = arith.constant 0 : i32
    %c0_i32_1 = arith.constant 0 : i32
    return %arg0, %c0_i32, %c0_i32_0 : i32, i32, i32
  }
}

</mosaic_0001>

<llo_original>
// kernel: inception_forward.1
$region0: #{inception_forward.1}
  #allocation0 [shape = 'u32[]', space=smem, size = 0x4, offset = 0x4, fixed_abs, tag = 'smem constant byte address 0x4 - core index']
  #allocation1 [shape = 'u32[144,128]{1,0:T(1,128)}', space=vmem, size = 0x12000, scoped, tag = 'internal scratch']
  %s0 = inlined_call_operand.vmem [shape: f32[2,256,4], index: 0, kind: input, shape index: {}]
  %s1 = inlined_call_operand.vmem [shape: f32[4,16], index: 1, kind: input, shape index: {}]
  %s2 = inlined_call_operand.vmem [shape: f32[1,16], index: 2, kind: input, shape index: {}]
  %s3 = inlined_call_operand.vmem [shape: f32[36,8], index: 3, kind: input, shape index: {}]
  %s4 = inlined_call_operand.vmem [shape: f32[1,8], index: 4, kind: input, shape index: {}]
  %s5 = inlined_call_operand.vmem [shape: f32[100,8], index: 5, kind: input, shape index: {}]
  %s6 = inlined_call_operand.vmem [shape: f32[1,8], index: 6, kind: input, shape index: {}]
  %s7 = inlined_call_operand.vmem [shape: f32[4,8], index: 7, kind: input, shape index: {}]
  %s8 = inlined_call_operand.vmem [shape: f32[1,8], index: 8, kind: input, shape index: {}]
  %s9 = inlined_call_operand.hbm [shape: f32[2,256,32], index: 9, kind: output, shape index: {}]
  %s10 = sld [smem:[#allocation0]]
  $region69: #{inception_forward.1} parent=0
    _
  %s12 = ssub.s32 1, %s10
  %s13 = scalar_select 0, %s12, %s10
  $region1: #{inception_forward.1} parent=0
    #allocation2 [shape = 'u8[262144]{0}', space=vmem, size = 0x40000, scoped, tag = 'output window, operand 0']
    #allocation3 [shape = 's32[2]{0}', space=sflag, size = 0x8, scoped, tag = 'scoped memory for inception_forward.1']
    %14 = vsyncpa [#allocation3], 0
    %s15 = scalar_lea.sflag [#allocation3], 1
    %16 = vsyncpa %s15, 0
    loop: start=0, step=1, limit=4
    $region2: #{inception_forward.1} parent=1 // loop_pre_header
      _
    $region3: #{inception_forward.1} parent=1 // loop_header
      %s18 = sphi 0, %s22
      %p19 = scmp.ge.s32.totalorder %s18, 4
      %s28 = sphi 0, %s30
      %s31 = sphi 0, %s28
      %s32 = sphi 0, %s31
      %s48 = sphi 0, %s32
      %s52 = sphi 0, %s52
      %s54 = sphi 0, %s52
      %s55 = sphi 0, %s54
      %s69 = sphi 0, %s55
      %s73 = sphi 0, %s73
      %s75 = sphi 0, %s73
      %s76 = sphi 0, %s75
      %s90 = sphi 0, %s76
      %s94 = sphi 0, %s94
      %s96 = sphi 0, %s94
      %s97 = sphi 0, %s96
      %s111 = sphi 0, %s97
      %s115 = sphi 0, %s115
      %s117 = sphi 0, %s115
      %s118 = sphi 0, %s117
      %s132 = sphi 0, %s118
      %s136 = sphi 0, %s136
      %s138 = sphi 0, %s136
      %s139 = sphi 0, %s138
      %s153 = sphi 0, %s139
      %s157 = sphi 0, %s157
      %s159 = sphi 0, %s157
      %s160 = sphi 0, %s159
      %s174 = sphi 0, %s160
      %s178 = sphi 0, %s178
      %s180 = sphi 0, %s178
      %s181 = sphi 0, %s180
      %s195 = sphi 0, %s181
      %s199 = sphi 0, %s199
      %s201 = sphi 0, %s199
      %s202 = sphi 0, %s201
      %s216 = sphi 0, %s202
      %s222 = sphi 0, %s224
      %s225 = sphi 0, %s222
      %s226 = sphi 0, %s225
      %s242 = sphi 0, %s226
    $region4: #{inception_forward.1} parent=1 // loop_header_branch
      %21 = sbr.rel (%p19) target = $region8
    $region5: #{inception_forward.1} parent=1 // loop_body
      %s23 = ssub.s32 %s18, 1
      %s24 = ssub.s32 %s18, 2
      %s25 = sadd.s32 %s18, 1
      %s26 = ssub.s32 %s18, %s25
      %p27 = scmp.eq.s32.totalorder %s26, 0
      %s29 = sadd.s32 %s28, 1
      %s30 = scalar_select %p27, %s28, %s29
      %p33 = pneg %p27
      %p34 = scmp.eq.s32.totalorder %s18, 1
      %p35 = por %p33, %p34
      %p36 = scmp.ne.s32.totalorder %s28, %s31
      %p37 = scmp.eq.s32.totalorder %s18, 0
      %p38 = por %p36, %p37
      %p39 = scmp.ne.s32.totalorder %s28, %s31
      %p40 = scmp.eq.s32.totalorder %s23, 1
      %p41 = por %p39, %p40
      %p42 = scmp.ne.s32.totalorder %s31, %s32
      %p43 = scmp.eq.s32.totalorder %s23, 0
      %p44 = por %p42, %p43
      %p45 = scmp.ne.s32.totalorder %s31, %s32
      %p46 = scmp.eq.s32.totalorder %s24, 1
      %p47 = por %p45, %p46
      %p49 = scmp.ne.s32.totalorder %s32, %s48
      %p50 = scmp.eq.s32.totalorder %s24, 0
      %p51 = por %p49, %p50
      %s53 = sadd.s32 %s52, 1
      %p56 = scmp.eq.s32.totalorder %s18, 1
      %p57 = scmp.ne.s32.totalorder %s52, %s54
      %p58 = scmp.eq.s32.totalorder %s18, 0
      %p59 = por %p57, %p58
      %p60 = scmp.ne.s32.totalorder %s52, %s54
      %p61 = scmp.eq.s32.totalorder %s23, 1
      %p62 = por %p60, %p61
      %p63 = scmp.ne.s32.totalorder %s54, %s55
      %p64 = scmp.eq.s32.totalorder %s23, 0
      %p65 = por %p63, %p64
      %p66 = scmp.ne.s32.totalorder %s54, %s55
      %p67 = scmp.eq.s32.totalorder %s24, 1
      %p68 = por %p66, %p67
      %p70 = scmp.ne.s32.totalorder %s55, %s69
      %p71 = scmp.eq.s32.totalorder %s24, 0
      %p72 = por %p70, %p71
      %s74 = sadd.s32 %s73, 1
      %p77 = scmp.eq.s32.totalorder %s18, 1
      %p78 = scmp.ne.s32.totalorder %s73, %s75
      %p79 = scmp.eq.s32.totalorder %s18, 0
      %p80 = por %p78, %p79
      %p81 = scmp.ne.s32.totalorder %s73, %s75
      %p82 = scmp.eq.s32.totalorder %s23, 1
      %p83 = por %p81, %p82
      %p84 = scmp.ne.s32.totalorder %s75, %s76
      %p85 = scmp.eq.s32.totalorder %s23, 0
      %p86 = por %p84, %p85
      %p87 = scmp.ne.s32.totalorder %s75, %s76
      %p88 = scmp.eq.s32.totalorder %s24, 1
      %p89 = por %p87, %p88
      %p91 = scmp.ne.s32.totalorder %s76, %s90
      %p92 = scmp.eq.s32.totalorder %s24, 0
      %p93 = por %p91, %p92
      %s95 = sadd.s32 %s94, 1
      %p98 = scmp.eq.s32.totalorder %s18, 1
      %p99 = scmp.ne.s32.totalorder %s94, %s96
      %p100 = scmp.eq.s32.totalorder %s18, 0
      %p101 = por %p99, %p100
      %p102 = scmp.ne.s32.totalorder %s94, %s96
      %p103 = scmp.eq.s32.totalorder %s23, 1
      %p104 = por %p102, %p103
      %p105 = scmp.ne.s32.totalorder %s96, %s97
      %p106 = scmp.eq.s32.totalorder %s23, 0
      %p107 = por %p105, %p106
      %p108 = scmp.ne.s32.totalorder %s96, %s97
      %p109 = scmp.eq.s32.totalorder %s24, 1
      %p110 = por %p108, %p109
      %p112 = scmp.ne.s32.totalorder %s97, %s111
      %p113 = scmp.eq.s32.totalorder %s24, 0
      %p114 = por %p112, %p113
      %s116 = sadd.s32 %s115, 1
      %p119 = scmp.eq.s32.totalorder %s18, 1
      %p120 = scmp.ne.s32.totalorder %s115, %s117
      %p121 = scmp.eq.s32.totalorder %s18, 0
      %p122 = por %p120, %p121
      %p123 = scmp.ne.s32.totalorder %s115, %s117
      %p124 = scmp.eq.s32.totalorder %s23, 1
      %p125 = por %p123, %p124
      %p126 = scmp.ne.s32.totalorder %s117, %s118
      %p127 = scmp.eq.s32.totalorder %s23, 0
      %p128 = por %p126, %p127
      %p129 = scmp.ne.s32.totalorder %s117, %s118
      %p130 = scmp.eq.s32.totalorder %s24, 1
      %p131 = por %p129, %p130
      %p133 = scmp.ne.s32.totalorder %s118, %s132
      %p134 = scmp.eq.s32.totalorder %s24, 0
      %p135 = por %p133, %p134
      %s137 = sadd.s32 %s136, 1
      %p140 = scmp.eq.s32.totalorder %s18, 1
      %p141 = scmp.ne.s32.totalorder %s136, %s138
      %p142 = scmp.eq.s32.totalorder %s18, 0
      %p143 = por %p141, %p142
      %p144 = scmp.ne.s32.totalorder %s136, %s138
      %p145 = scmp.eq.s32.totalorder %s23, 1
      %p146 = por %p144, %p145
      %p147 = scmp.ne.s32.totalorder %s138, %s139
      %p148 = scmp.eq.s32.totalorder %s23, 0
      %p149 = por %p147, %p148
      %p150 = scmp.ne.s32.totalorder %s138, %s139
      %p151 = scmp.eq.s32.totalorder %s24, 1
      %p152 = por %p150, %p151
      %p154 = scmp.ne.s32.totalorder %s139, %s153
      %p155 = scmp.eq.s32.totalorder %s24, 0
      %p156 = por %p154, %p155
      %s158 = sadd.s32 %s157, 1
      %p161 = scmp.eq.s32.totalorder %s18, 1
      %p162 = scmp.ne.s32.totalorder %s157, %s159
      %p163 = scmp.eq.s32.totalorder %s18, 0
      %p164 = por %p162, %p163
      %p165 = scmp.ne.s32.totalorder %s157, %s159
      %p166 = scmp.eq.s32.totalorder %s23, 1
      %p167 = por %p165, %p166
      %p168 = scmp.ne.s32.totalorder %s159, %s160
      %p169 = scmp.eq.s32.totalorder %s23, 0
      %p170 = por %p168, %p169
      %p171 = scmp.ne.s32.totalorder %s159, %s160
      %p172 = scmp.eq.s32.totalorder %s24, 1
      %p173 = por %p171, %p172
      %p175 = scmp.ne.s32.totalorder %s160, %s174
      %p176 = scmp.eq.s32.totalorder %s24, 0
      %p177 = por %p175, %p176
      %s179 = sadd.s32 %s178, 1
      %p182 = scmp.eq.s32.totalorder %s18, 1
      %p183 = scmp.ne.s32.totalorder %s178, %s180
      %p184 = scmp.eq.s32.totalorder %s18, 0
      %p185 = por %p183, %p184
      %p186 = scmp.ne.s32.totalorder %s178, %s180
      %p187 = scmp.eq.s32.totalorder %s23, 1
      %p188 = por %p186, %p187
      %p189 = scmp.ne.s32.totalorder %s180, %s181
      %p190 = scmp.eq.s32.totalorder %s23, 0
      %p191 = por %p189, %p190
      %p192 = scmp.ne.s32.totalorder %s180, %s181
      %p193 = scmp.eq.s32.totalorder %s24, 1
      %p194 = por %p192, %p193
      %p196 = scmp.ne.s32.totalorder %s181, %s195
      %p197 = scmp.eq.s32.totalorder %s24, 0
      %p198 = por %p196, %p197
      %s200 = sadd.s32 %s199, 1
      %p203 = scmp.eq.s32.totalorder %s18, 1
      %p204 = scmp.ne.s32.totalorder %s199, %s201
      %p205 = scmp.eq.s32.totalorder %s18, 0
      %p206 = por %p204, %p205
      %p207 = scmp.ne.s32.totalorder %s199, %s201
      %p208 = scmp.eq.s32.totalorder %s23, 1
      %p209 = por %p207, %p208
      %p210 = scmp.ne.s32.totalorder %s201, %s202
      %p211 = scmp.eq.s32.totalorder %s23, 0
      %p212 = por %p210, %p211
      %p213 = scmp.ne.s32.totalorder %s201, %s202
      %p214 = scmp.eq.s32.totalorder %s24, 1
      %p215 = por %p213, %p214
      %p217 = scmp.ne.s32.totalorder %s202, %s216
      %p218 = scmp.eq.s32.totalorder %s24, 0
      %p219 = por %p217, %p218
      %s220 = ssub.s32 %s18, %s25
      %p221 = scmp.eq.s32.totalorder %s220, 0
      %s223 = sadd.s32 %s222, 1
      %s224 = scalar_select %p221, %s222, %s223
      %p227 = pneg %p221
      %p228 = scmp.eq.s32.totalorder %s18, 1
      %p229 = por %p227, %p228
      %p230 = scmp.ne.s32.totalorder %s222, %s225
      %p231 = scmp.eq.s32.totalorder %s18, 0
      %p232 = por %p230, %p231
      %p233 = scmp.ne.s32.totalorder %s222, %s225
      %p234 = scmp.eq.s32.totalorder %s23, 1
      %p235 = por %p233, %p234
      %p236 = scmp.ne.s32.totalorder %s225, %s226
      %p237 = scmp.eq.s32.totalorder %s23, 0
      %p238 = por %p236, %p237
      %p239 = scmp.ne.s32.totalorder %s225, %s226
      %p240 = scmp.eq.s32.totalorder %s24, 1
      %p241 = por %p239, %p240
      %p243 = scmp.ne.s32.totalorder %s226, %s242
      %p244 = scmp.eq.s32.totalorder %s24, 0
      %p245 = por %p243, %p244
      %p246 = scmp.le.s32.totalorder 1, %s18
      %p247 = scmp.lt.s32.totalorder %s18, 3
      %p248 = pnand %p246, %p247
      %p249 = pneg %p248
      // Predicated region
      $region9: #{inception_forward.1} parent=5 // pred_check
        _
      $region10: #{inception_forward.1} parent=5 // pred_check_branch
        %251 = sbr.rel (%p248) target = $region12
      $region11: #{inception_forward.1} parent=5 // pred_region
        %s252 = ssub.s32 %s18, 1
        // Predicated region
        $region13: #{inception_forward.1} parent=11 // pred_check
          %p253 = pneg %p65
        $region14: #{inception_forward.1} parent=11 // pred_check_branch
          %255 = sbr.rel (%p253) target = $region16
        $region15: #{inception_forward.1} parent=11 // pred_region
          _
        $region16: #{inception_forward.1} parent=11 // pred_fallthru
          _
        // Predicated region
        $region17: #{inception_forward.1} parent=11 // pred_check
          %p256 = pneg %p86
        $region18: #{inception_forward.1} parent=11 // pred_check_branch
          %258 = sbr.rel (%p256) target = $region20
        $region19: #{inception_forward.1} parent=11 // pred_region
          _
        $region20: #{inception_forward.1} parent=11 // pred_fallthru
          _
        // Predicated region
        $region21: #{inception_forward.1} parent=11 // pred_check
          %p259 = pneg %p107
        $region22: #{inception_forward.1} parent=11 // pred_check_branch
          %261 = sbr.rel (%p259) target = $region24
        $region23: #{inception_forward.1} parent=11 // pred_region
          _
        $region24: #{inception_forward.1} parent=11 // pred_fallthru
          _
        // Predicated region
        $region25: #{inception_forward.1} parent=11 // pred_check
          %p262 = pneg %p128
        $region26: #{inception_forward.1} parent=11 // pred_check_branch
          %264 = sbr.rel (%p262) target = $region28
        $region27: #{inception_forward.1} parent=11 // pred_region
          _
        $region28: #{inception_forward.1} parent=11 // pred_fallthru
          _
        // Predicated region
        $region29: #{inception_forward.1} parent=11 // pred_check
          %p265 = pneg %p149
        $region30: #{inception_forward.1} parent=11 // pred_check_branch
          %267 = sbr.rel (%p265) target = $region32
        $region31: #{inception_forward.1} parent=11 // pred_region
          _
        $region32: #{inception_forward.1} parent=11 // pred_fallthru
          _
        // Predicated region
        $region33: #{inception_forward.1} parent=11 // pred_check
          %p268 = pneg %p170
        $region34: #{inception_forward.1} parent=11 // pred_check_branch
          %270 = sbr.rel (%p268) target = $region36
        $region35: #{inception_forward.1} parent=11 // pred_region
          _
        $region36: #{inception_forward.1} parent=11 // pred_fallthru
          _
        // Predicated region
        $region37: #{inception_forward.1} parent=11 // pred_check
          %p271 = pneg %p191
        $region38: #{inception_forward.1} parent=11 // pred_check_branch
          %273 = sbr.rel (%p271) target = $region40
        $region39: #{inception_forward.1} parent=11 // pred_region
          _
        $region40: #{inception_forward.1} parent=11 // pred_fallthru
          _
        // Predicated region
        $region41: #{inception_forward.1} parent=11 // pred_check
          %p274 = pneg %p212
        $region42: #{inception_forward.1} parent=11 // pred_check_branch
          %276 = sbr.rel (%p274) target = $region44
        $region43: #{inception_forward.1} parent=11 // pred_region
          _
        $region44: #{inception_forward.1} parent=11 // pred_fallthru
          _
      $region12: #{inception_forward.1} parent=5 // pred_fallthru
        _
      %p277 = scmp.lt.s32.totalorder %s18, 2
      // Predicated region
      $region45: #{inception_forward.1} parent=5 // pred_check
        %p278 = pneg %p277
      $region46: #{inception_forward.1} parent=5 // pred_check_branch
        %280 = sbr.rel (%p278) target = $region48
      $region47: #{inception_forward.1} parent=5 // pred_region
        // Predicated region
        $region49: #{inception_forward.1} parent=47 // pred_check
          %p281 = pneg %p38
        $region50: #{inception_forward.1} parent=47 // pred_check_branch
          %283 = sbr.rel (%p281) target = $region52
        $region51: #{inception_forward.1} parent=47 // pred_region
          %p284 = scmp.lt.s32.totalorder %s18, 1
          %s285 = scalar_select %p284, %s18, 1
          %s286 = smul.addr %s285, 32
          %s287 = smul.addr %s286, 8
          %s288 = scalar_lea.vmem %s0, %s287
        $region52: #{inception_forward.1} parent=47 // pred_fallthru
          _
      $region48: #{inception_forward.1} parent=5 // pred_fallthru
        _
      %p289 = scmp.le.s32.totalorder 1, %s18
      %p290 = scmp.lt.s32.totalorder %s18, 3
      %p291 = pnand %p289, %p290
      %p292 = pneg %p291
      // Predicated region
      $region53: #{inception_forward.1} parent=5 // pred_check
        _
      $region54: #{inception_forward.1} parent=5 // pred_check_branch
        %294 = sbr.rel (%p291) target = $region56
      $region55: #{inception_forward.1} parent=5 // pred_region
        %s295 = ssub.s32 %s18, 1
        %p296 = scmp.lt.s32.totalorder %s23, 1
        %s297 = scalar_select %p296, %s23, 1
        %s298 = smul.addr %s297, 32
        %s299 = smul.addr %s298, 8
        %s300 = scalar_lea.vmem %s0, %s299
        %p301 = pneg %p44
        %p302 = pneg %p41
        %p303 = pneg %p65
        %p304 = pneg %p62
        %p305 = pneg %p86
        %p306 = pneg %p83
        %p307 = pneg %p107
        %p308 = pneg %p104
        %p309 = pneg %p128
        %p310 = pneg %p125
        %p311 = pneg %p149
        %p312 = pneg %p146
        %p313 = pneg %p170
        %p314 = pneg %p167
        %p315 = pneg %p191
        %p316 = pneg %p188
        %p317 = pneg %p212
        %p318 = pneg %p209
        %p319 = pneg %p238
        %p320 = pneg %p235
        %s321 = sand.u32 %s225, 1
        %s322 = scalar_lea.sflag [#allocation3], %s321
        %s323 = sand.u32 %s225, 1
        %s324 = smul.addr %s323, 256
        %s325 = scalar_lea.vmem [#allocation2], %s324
        %p326 = scmp.lt.s32.totalorder %s23, 1
        %s327 = scalar_select %p326, %s23, 1
        %s328 = smul.addr %s327, 32
        %s329 = smul.addr %s328, 8
        %s330 = scalar_lea.vmem %s0, %s329
        %v331 = vld [vmem:[%s330] sm:$0xff]
        %v332 = vld [vmem:[%s330 + $0x8] sm:$0xff]
        %v333 = vld [vmem:[%s330 + $0x10] sm:$0xff]
        %v334 = vld [vmem:[%s330 + $0x18] sm:$0xff]
        %v335 = vld [vmem:[%s330 + $0x20] sm:$0xff]
        %v336 = vld [vmem:[%s330 + $0x28] sm:$0xff]
        %v337 = vld [vmem:[%s330 + $0x30] sm:$0xff]
        %v338 = vld [vmem:[%s330 + $0x38] sm:$0xff]
        %v339 = vld [vmem:[%s330 + $0x40] sm:$0xff]
        %v340 = vld [vmem:[%s330 + $0x48] sm:$0xff]
        %v341 = vld [vmem:[%s330 + $0x50] sm:$0xff]
        %v342 = vld [vmem:[%s330 + $0x58] sm:$0xff]
        %v343 = vld [vmem:[%s330 + $0x60] sm:$0xff]
        %v344 = vld [vmem:[%s330 + $0x68] sm:$0xff]
        %v345 = vld [vmem:[%s330 + $0x70] sm:$0xff]
        %v346 = vld [vmem:[%s330 + $0x78] sm:$0xff]
        %v347 = vld [vmem:[%s330 + $0x80] sm:$0xff]
        %v348 = vld [vmem:[%s330 + $0x88] sm:$0xff]
        %v349 = vld [vmem:[%s330 + $0x90] sm:$0xff]
        %v350 = vld [vmem:[%s330 + $0x98] sm:$0xff]
        %v351 = vld [vmem:[%s330 + $0xa0] sm:$0xff]
        %v352 = vld [vmem:[%s330 + $0xa8] sm:$0xff]
        %v353 = vld [vmem:[%s330 + $0xb0] sm:$0xff]
        %v354 = vld [vmem:[%s330 + $0xb8] sm:$0xff]
        %v355 = vld [vmem:[%s330 + $0xc0] sm:$0xff]
        %v356 = vld [vmem:[%s330 + $0xc8] sm:$0xff]
        %v357 = vld [vmem:[%s330 + $0xd0] sm:$0xff]
        %v358 = vld [vmem:[%s330 + $0xd8] sm:$0xff]
        %v359 = vld [vmem:[%s330 + $0xe0] sm:$0xff]
        %v360 = vld [vmem:[%s330 + $0xe8] sm:$0xff]
        %v361 = vld [vmem:[%s330 + $0xf0] sm:$0xff]
        %v362 = vld [vmem:[%s330 + $0xf8] sm:$0xff]
        %v363 = vld [vmem:[%s1] sm:$0xf]
        %v364 = vld [vmem:[%s2] sm:$0x1]
        %v366 = vlaneseq
        %v367 = vshrl.u32 %v366, 7
        %v368 = vsub.s32 0, %v367
        %v369 = vrot.slane %v364, %v368
        %vm371 = vcmask 31744
        %v373 = vsel %vm371, %v331, 0
        %v376 = vsel %vm371, %v332, 0
        %v379 = vsel %vm371, %v333, 0
        %v382 = vsel %vm371, %v334, 0
        %v385 = vsel %vm371, %v335, 0
        %v388 = vsel %vm371, %v336, 0
        %v391 = vsel %vm371, %v337, 0
        %v394 = vsel %vm371, %v338, 0
        %v397 = vsel %vm371, %v339, 0
        %v400 = vsel %vm371, %v340, 0
        %v403 = vsel %vm371, %v341, 0
        %v406 = vsel %vm371, %v342, 0
        %v409 = vsel %vm371, %v343, 0
        %v412 = vsel %vm371, %v344, 0
        %v415 = vsel %vm371, %v345, 0
        %v418 = vsel %vm371, %v346, 0
        %v421 = vsel %vm371, %v347, 0
        %v424 = vsel %vm371, %v348, 0
        %v427 = vsel %vm371, %v349, 0
        %v430 = vsel %vm371, %v350, 0
        %v433 = vsel %vm371, %v351, 0
        %v436 = vsel %vm371, %v352, 0
        %v439 = vsel %vm371, %v353, 0
        %v442 = vsel %vm371, %v354, 0
        %v445 = vsel %vm371, %v355, 0
        %v448 = vsel %vm371, %v356, 0
        %v451 = vsel %vm371, %v357, 0
        %v454 = vsel %vm371, %v358, 0
        %v457 = vsel %vm371, %v359, 0
        %v460 = vsel %vm371, %v360, 0
        %v463 = vsel %vm371, %v361, 0
        %v466 = vsel %vm371, %v362, 0
        %vm468 = vcmask 1043456
        %v470 = vsel %vm468, %v363, 0
        %472 = vmatprep.subr.mxu0 0.0
        %473 = vmatpush1.msra.mxu0 0.0
        %474 = vmatprep.subr.mxu0 0.0
        %475 = vmatpush1.msra.mxu0 0.0
        %476 = vmatprep.subr.mxu0 0.0
        %477 = vmatpush1.msra.mxu0 0.0
        %478 = vmatprep.subr.mxu0 0.0
        %479 = vmatpush1.msra.mxu0 0.0
        %480 = vmatprep.subr.mxu0 0.0
        %481 = vmatpush1.msra.mxu0 0.0
        %482 = vmatprep.subr.mxu0 0.0
        %483 = vmatpush1.msra.mxu0 0.0
        %484 = vmatprep.subr.mxu0 0.0
        %485 = vmatpush1.msra.mxu0 0.0
        %486 = vmatprep.subr.mxu0 0.0
        %487 = vmatpush1.msra.mxu0 0.0
        %488 = vmatprep.subr.mxu0 0.0
        %489 = vmatpush1.msra.mxu0 0.0
        %490 = vmatprep.subr.mxu0 0.0
        %491 = vmatpush1.msra.mxu0 0.0
        %492 = vmatprep.subr.mxu0 0.0
        %493 = vmatpush1.msra.mxu0 0.0
        %494 = vmatprep.subr.mxu0 0.0
        %495 = vmatpush1.msra.mxu0 0.0
        %496 = vmatprep.subr.mxu0 0.0
        %497 = vmatpush1.msra.mxu0 0.0
        %498 = vmatprep.subr.mxu0 0.0
        %499 = vmatpush1.msra.mxu0 0.0
        %500 = vmatprep.subr.mxu0 0.0
        %501 = vmatpush1.msra.mxu0 0.0
        %502 = vmatprep.subr.mxu0 0.0
        %503 = vmatpush1.msra.mxu0 %v470
        %504 = vmatprep.subr.mxu0 0.0
        %505 = vmatpush2.msra.mxu0 0.0
        %506 = vmatprep.subr.mxu0 0.0
        %507 = vmatpush2.msra.mxu0 0.0
        %508 = vmatprep.subr.mxu0 0.0
        %509 = vmatpush2.msra.mxu0 0.0
        %510 = vmatprep.subr.mxu0 0.0
        %511 = vmatpush2.msra.mxu0 0.0
        %512 = vmatprep.subr.mxu0 0.0
        %513 = vmatpush2.msra.mxu0 0.0
        %514 = vmatprep.subr.mxu0 0.0
        %515 = vmatpush2.msra.mxu0 0.0
        %516 = vmatprep.subr.mxu0 0.0
        %517 = vmatpush2.msra.mxu0 0.0
        %518 = vmatprep.subr.mxu0 0.0
        %519 = vmatpush2.msra.mxu0 0.0
        %520 = vmatprep.subr.mxu0 0.0
        %521 = vmatpush2.msra.mxu0 0.0
        %522 = vmatprep.subr.mxu0 0.0
        %523 = vmatpush2.msra.mxu0 0.0
        %524 = vmatprep.subr.mxu0 0.0
        %525 = vmatpush2.msra.mxu0 0.0
        %526 = vmatprep.subr.mxu0 0.0
        %527 = vmatpush2.msra.mxu0 0.0
        %528 = vmatprep.subr.mxu0 0.0
        %529 = vmatpush2.msra.mxu0 0.0
        %530 = vmatprep.subr.mxu0 0.0
        %531 = vmatpush2.msra.mxu0 0.0
        %532 = vmatprep.subr.mxu0 0.0
        %533 = vmatpush2.msra.mxu0 0.0
        %534 = vmatprep.subr.mxu0 0.0
        %535 = vmatpush2.msra.mxu0 0.0
        %536 = vmatprep.mubr.f32.mxu0 0.0
        %537 = vmatmul.mubr.f32.gmra.mxu0 %v373
        %v538 = vpop.f32.mrf.mxu0
        %v539 = vadd.f32 %v369, %v538
        %v540 = vpop.f32.mrf.mxu0
        %541 = vmatprep.mubr.f32.mxu0 0.0
        %542 = vmatmul.mubr.f32.gmra.mxu0 %v376
        %v543 = vpop.f32.mrf.mxu0
        %v544 = vadd.f32 %v369, %v543
        %v545 = vpop.f32.mrf.mxu0
        %546 = vmatprep.mubr.f32.mxu0 0.0
        %547 = vmatmul.mubr.f32.gmra.mxu0 %v379
        %v548 = vpop.f32.mrf.mxu0
        %v549 = vadd.f32 %v369, %v548
        %v550 = vpop.f32.mrf.mxu0
        %551 = vmatprep.mubr.f32.mxu0 0.0
        %552 = vmatmul.mubr.f32.gmra.mxu0 %v382
        %v553 = vpop.f32.mrf.mxu0
        %v554 = vadd.f32 %v369, %v553
        %v555 = vpop.f32.mrf.mxu0
        %556 = vmatprep.mubr.f32.mxu0 0.0
        %557 = vmatmul.mubr.f32.gmra.mxu0 %v385
        %v558 = vpop.f32.mrf.mxu0
        %v559 = vadd.f32 %v369, %v558
        %v560 = vpop.f32.mrf.mxu0
        %561 = vmatprep.mubr.f32.mxu0 0.0
        %562 = vmatmul.mubr.f32.gmra.mxu0 %v388
        %v563 = vpop.f32.mrf.mxu0
        %v564 = vadd.f32 %v369, %v563
        %v565 = vpop.f32.mrf.mxu0
        %566 = vmatprep.mubr.f32.mxu0 0.0
        %567 = vmatmul.mubr.f32.gmra.mxu0 %v391
        %v568 = vpop.f32.mrf.mxu0
        %v569 = vadd.f32 %v369, %v568
        %v570 = vpop.f32.mrf.mxu0
        %571 = vmatprep.mubr.f32.mxu0 0.0
        %572 = vmatmul.mubr.f32.gmra.mxu0 %v394
        %v573 = vpop.f32.mrf.mxu0
        %v574 = vadd.f32 %v369, %v573
        %v575 = vpop.f32.mrf.mxu0
        %576 = vmatprep.mubr.f32.mxu0 0.0
        %577 = vmatmul.mubr.f32.gmra.mxu0 %v397
        %v578 = vpop.f32.mrf.mxu0
        %v579 = vadd.f32 %v369, %v578
        %v580 = vpop.f32.mrf.mxu0
        %581 = vmatprep.mubr.f32.mxu0 0.0
        %582 = vmatmul.mubr.f32.gmra.mxu0 %v400
        %v583 = vpop.f32.mrf.mxu0
        %v584 = vadd.f32 %v369, %v583
        %v585 = vpop.f32.mrf.mxu0
        %586 = vmatprep.mubr.f32.mxu0 0.0
        %587 = vmatmul.mubr.f32.gmra.mxu0 %v403
        %v588 = vpop.f32.mrf.mxu0
        %v589 = vadd.f32 %v369, %v588
        %v590 = vpop.f32.mrf.mxu0
        %591 = vmatprep.mubr.f32.mxu0 0.0
        %592 = vmatmul.mubr.f32.gmra.mxu0 %v406
        %v593 = vpop.f32.mrf.mxu0
        %v594 = vadd.f32 %v369, %v593
        %v595 = vpop.f32.mrf.mxu0
        %596 = vmatprep.mubr.f32.mxu0 0.0
        %597 = vmatmul.mubr.f32.gmra.mxu0 %v409
        %v598 = vpop.f32.mrf.mxu0
        %v599 = vadd.f32 %v369, %v598
        %v600 = vpop.f32.mrf.mxu0
        %601 = vmatprep.mubr.f32.mxu0 0.0
        %602 = vmatmul.mubr.f32.gmra.mxu0 %v412
        %v603 = vpop.f32.mrf.mxu0
        %v604 = vadd.f32 %v369, %v603
        %v605 = vpop.f32.mrf.mxu0
        %606 = vmatprep.mubr.f32.mxu0 0.0
        %607 = vmatmul.mubr.f32.gmra.mxu0 %v415
        %v608 = vpop.f32.mrf.mxu0
        %v609 = vadd.f32 %v369, %v608
        %v610 = vpop.f32.mrf.mxu0
        %611 = vmatprep.mubr.f32.mxu0 0.0
        %612 = vmatmul.mubr.f32.gmra.mxu0 %v418
        %v613 = vpop.f32.mrf.mxu0
        %v614 = vadd.f32 %v369, %v613
        %v615 = vpop.f32.mrf.mxu0
        %616 = vmatprep.mubr.f32.mxu0 0.0
        %617 = vmatmul.mubr.f32.gmra.mxu0 %v421
        %v618 = vpop.f32.mrf.mxu0
        %v619 = vadd.f32 %v369, %v618
        %v620 = vpop.f32.mrf.mxu0
        %621 = vmatprep.mubr.f32.mxu0 0.0
        %622 = vmatmul.mubr.f32.gmra.mxu0 %v424
        %v623 = vpop.f32.mrf.mxu0
        %v624 = vadd.f32 %v369, %v623
        %v625 = vpop.f32.mrf.mxu0
        %626 = vmatprep.mubr.f32.mxu0 0.0
        %627 = vmatmul.mubr.f32.gmra.mxu0 %v427
        %v628 = vpop.f32.mrf.mxu0
        %v629 = vadd.f32 %v369, %v628
        %v630 = vpop.f32.mrf.mxu0
        %631 = vmatprep.mubr.f32.mxu0 0.0
        %632 = vmatmul.mubr.f32.gmra.mxu0 %v430
        %v633 = vpop.f32.mrf.mxu0
        %v634 = vadd.f32 %v369, %v633
        %v635 = vpop.f32.mrf.mxu0
        %636 = vmatprep.mubr.f32.mxu0 0.0
        %637 = vmatmul.mubr.f32.gmra.mxu0 %v433
        %v638 = vpop.f32.mrf.mxu0
        %v639 = vadd.f32 %v369, %v638
        %v640 = vpop.f32.mrf.mxu0
        %641 = vmatprep.mubr.f32.mxu0 0.0
        %642 = vmatmul.mubr.f32.gmra.mxu0 %v436
        %v643 = vpop.f32.mrf.mxu0
        %v644 = vadd.f32 %v369, %v643
        %v645 = vpop.f32.mrf.mxu0
        %646 = vmatprep.mubr.f32.mxu0 0.0
        %647 = vmatmul.mubr.f32.gmra.mxu0 %v439
        %v648 = vpop.f32.mrf.mxu0
        %v649 = vadd.f32 %v369, %v648
        %v650 = vpop.f32.mrf.mxu0
        %651 = vmatprep.mubr.f32.mxu0 0.0
        %652 = vmatmul.mubr.f32.gmra.mxu0 %v442
        %v653 = vpop.f32.mrf.mxu0
        %v654 = vadd.f32 %v369, %v653
        %v655 = vpop.f32.mrf.mxu0
        %656 = vmatprep.mubr.f32.mxu0 0.0
        %657 = vmatmul.mubr.f32.gmra.mxu0 %v445
        %v658 = vpop.f32.mrf.mxu0
        %v659 = vadd.f32 %v369, %v658
        %v660 = vpop.f32.mrf.mxu0
        %661 = vmatprep.mubr.f32.mxu0 0.0
        %662 = vmatmul.mubr.f32.gmra.mxu0 %v448
        %v663 = vpop.f32.mrf.mxu0
        %v664 = vadd.f32 %v369, %v663
        %v665 = vpop.f32.mrf.mxu0
        %666 = vmatprep.mubr.f32.mxu0 0.0
        %667 = vmatmul.mubr.f32.gmra.mxu0 %v451
        %v668 = vpop.f32.mrf.mxu0
        %v669 = vadd.f32 %v369, %v668
        %v670 = vpop.f32.mrf.mxu0
        %671 = vmatprep.mubr.f32.mxu0 0.0
        %672 = vmatmul.mubr.f32.gmra.mxu0 %v454
        %v673 = vpop.f32.mrf.mxu0
        %v674 = vadd.f32 %v369, %v673
        %v675 = vpop.f32.mrf.mxu0
        %676 = vmatprep.mubr.f32.mxu0 0.0
        %677 = vmatmul.mubr.f32.gmra.mxu0 %v457
        %v678 = vpop.f32.mrf.mxu0
        %v679 = vadd.f32 %v369, %v678
        %v680 = vpop.f32.mrf.mxu0
        %681 = vmatprep.mubr.f32.mxu0 0.0
        %682 = vmatmul.mubr.f32.gmra.mxu0 %v460
        %v683 = vpop.f32.mrf.mxu0
        %v684 = vadd.f32 %v369, %v683
        %v685 = vpop.f32.mrf.mxu0
        %686 = vmatprep.mubr.f32.mxu0 0.0
        %687 = vmatmul.mubr.f32.gmra.mxu0 %v463
        %v688 = vpop.f32.mrf.mxu0
        %v689 = vadd.f32 %v369, %v688
        %v690 = vpop.f32.mrf.mxu0
        %691 = vmatprep.mubr.f32.mxu0 0.0
        %692 = vmatmul.mubr.f32.gmra.mxu0 %v466
        %v693 = vpop.f32.mrf.mxu0
        %v694 = vadd.f32 %v369, %v693
        %v695 = vpop.f32.mrf.mxu0
        %696 = vdwg.mxu0
        %v697 = vmax.f32 %v539, 0.0
        %v698 = vmax.f32 %v544, 0.0
        %v699 = vmax.f32 %v549, 0.0
        %v700 = vmax.f32 %v554, 0.0
        %v701 = vmax.f32 %v559, 0.0
        %v702 = vmax.f32 %v564, 0.0
        %v703 = vmax.f32 %v569, 0.0
        %v704 = vmax.f32 %v574, 0.0
        %v705 = vmax.f32 %v579, 0.0
        %v706 = vmax.f32 %v584, 0.0
        %v707 = vmax.f32 %v589, 0.0
        %v708 = vmax.f32 %v594, 0.0
        %v709 = vmax.f32 %v599, 0.0
        %v710 = vmax.f32 %v604, 0.0
        %v711 = vmax.f32 %v609, 0.0
        %v712 = vmax.f32 %v614, 0.0
        %v713 = vmax.f32 %v619, 0.0
        %v714 = vmax.f32 %v624, 0.0
        %v715 = vmax.f32 %v629, 0.0
        %v716 = vmax.f32 %v634, 0.0
        %v717 = vmax.f32 %v639, 0.0
        %v718 = vmax.f32 %v644, 0.0
        %v719 = vmax.f32 %v649, 0.0
        %v720 = vmax.f32 %v654, 0.0
        %v721 = vmax.f32 %v659, 0.0
        %v722 = vmax.f32 %v664, 0.0
        %v723 = vmax.f32 %v669, 0.0
        %v724 = vmax.f32 %v674, 0.0
        %v725 = vmax.f32 %v679, 0.0
        %v726 = vmax.f32 %v684, 0.0
        %v727 = vmax.f32 %v689, 0.0
        %v728 = vmax.f32 %v694, 0.0
        %761 = vrot.lane.b32.xlu0 %v697, 120
        %v762 = vpop.permute.xlu0 %761
        %763 = vrot.lane.b32.xlu0 %v698, 120
        %v764 = vpop.permute.xlu0 %763
        %765 = vrot.lane.b32.xlu0 %v699, 120
        %v766 = vpop.permute.xlu0 %765
        %767 = vrot.lane.b32.xlu0 %v700, 120
        %v768 = vpop.permute.xlu0 %767
        %769 = vrot.lane.b32.xlu0 %v701, 120
        %v770 = vpop.permute.xlu0 %769
        %771 = vrot.lane.b32.xlu0 %v702, 120
        %v772 = vpop.permute.xlu0 %771
        %773 = vrot.lane.b32.xlu0 %v703, 120
        %v774 = vpop.permute.xlu0 %773
        %775 = vrot.lane.b32.xlu0 %v704, 120
        %v776 = vpop.permute.xlu0 %775
        %777 = vrot.lane.b32.xlu0 %v705, 120
        %v778 = vpop.permute.xlu0 %777
        %779 = vrot.lane.b32.xlu0 %v706, 120
        %v780 = vpop.permute.xlu0 %779
        %781 = vrot.lane.b32.xlu0 %v707, 120
        %v782 = vpop.permute.xlu0 %781
        %783 = vrot.lane.b32.xlu0 %v708, 120
        %v784 = vpop.permute.xlu0 %783
        %785 = vrot.lane.b32.xlu0 %v709, 120
        %v786 = vpop.permute.xlu0 %785
        %787 = vrot.lane.b32.xlu0 %v710, 120
        %v788 = vpop.permute.xlu0 %787
        %789 = vrot.lane.b32.xlu0 %v711, 120
        %v790 = vpop.permute.xlu0 %789
        %791 = vrot.lane.b32.xlu0 %v712, 120
        %v792 = vpop.permute.xlu0 %791
        %793 = vrot.lane.b32.xlu0 %v713, 120
        %v794 = vpop.permute.xlu0 %793
        %795 = vrot.lane.b32.xlu0 %v714, 120
        %v796 = vpop.permute.xlu0 %795
        %797 = vrot.lane.b32.xlu0 %v715, 120
        %v798 = vpop.permute.xlu0 %797
        %799 = vrot.lane.b32.xlu0 %v716, 120
        %v800 = vpop.permute.xlu0 %799
        %801 = vrot.lane.b32.xlu0 %v717, 120
        %v802 = vpop.permute.xlu0 %801
        %803 = vrot.lane.b32.xlu0 %v718, 120
        %v804 = vpop.permute.xlu0 %803
        %805 = vrot.lane.b32.xlu0 %v719, 120
        %v806 = vpop.permute.xlu0 %805
        %807 = vrot.lane.b32.xlu0 %v720, 120
        %v808 = vpop.permute.xlu0 %807
        %809 = vrot.lane.b32.xlu0 %v721, 120
        %v810 = vpop.permute.xlu0 %809
        %811 = vrot.lane.b32.xlu0 %v722, 120
        %v812 = vpop.permute.xlu0 %811
        %813 = vrot.lane.b32.xlu0 %v723, 120
        %v814 = vpop.permute.xlu0 %813
        %815 = vrot.lane.b32.xlu0 %v724, 120
        %v816 = vpop.permute.xlu0 %815
        %817 = vrot.lane.b32.xlu0 %v725, 120
        %v818 = vpop.permute.xlu0 %817
        %819 = vrot.lane.b32.xlu0 %v726, 120
        %v820 = vpop.permute.xlu0 %819
        %821 = vrot.lane.b32.xlu0 %v727, 120
        %v822 = vpop.permute.xlu0 %821
        %823 = vrot.lane.b32.xlu0 %v728, 120
        %v824 = vpop.permute.xlu0 %823
        %vm826 = vcmask 1040384
        %v827 = vrot.slane 0.0, 7
        %v828 = vsel %vm826, %v827, %v827
        %v829 = vrot.slane %v762, 7
        %v830 = vsel %vm826, %v827, %v829
        %v831 = vrot.slane %v764, 7
        %v832 = vsel %vm826, %v829, %v831
        %v833 = vrot.slane %v766, 7
        %v834 = vsel %vm826, %v827, %v833
        %v835 = vrot.slane %v768, 7
        %v836 = vsel %vm826, %v833, %v835
        %v837 = vrot.slane %v770, 7
        %v838 = vsel %vm826, %v827, %v837
        %v839 = vrot.slane %v772, 7
        %v840 = vsel %vm826, %v837, %v839
        %v841 = vrot.slane %v774, 7
        %v842 = vsel %vm826, %v827, %v841
        %v843 = vrot.slane %v776, 7
        %v844 = vsel %vm826, %v841, %v843
        %v845 = vrot.slane %v778, 7
        %v846 = vsel %vm826, %v827, %v845
        %v847 = vrot.slane %v780, 7
        %v848 = vsel %vm826, %v845, %v847
        %v849 = vrot.slane %v782, 7
        %v850 = vsel %vm826, %v827, %v849
        %v851 = vrot.slane %v784, 7
        %v852 = vsel %vm826, %v849, %v851
        %v853 = vrot.slane %v786, 7
        %v854 = vsel %vm826, %v827, %v853
        %v855 = vrot.slane %v788, 7
        %v856 = vsel %vm826, %v853, %v855
        %v857 = vrot.slane %v790, 7
        %v858 = vsel %vm826, %v827, %v857
        %v859 = vrot.slane %v792, 7
        %v860 = vsel %vm826, %v857, %v859
        %v861 = vrot.slane %v794, 7
        %v862 = vsel %vm826, %v827, %v861
        %v863 = vrot.slane %v796, 7
        %v864 = vsel %vm826, %v861, %v863
        %v865 = vrot.slane %v798, 7
        %v866 = vsel %vm826, %v827, %v865
        %v867 = vrot.slane %v800, 7
        %v868 = vsel %vm826, %v865, %v867
        %v869 = vrot.slane %v802, 7
        %v870 = vsel %vm826, %v827, %v869
        %v871 = vrot.slane %v804, 7
        %v872 = vsel %vm826, %v869, %v871
        %v873 = vrot.slane %v806, 7
        %v874 = vsel %vm826, %v827, %v873
        %v875 = vrot.slane %v808, 7
        %v876 = vsel %vm826, %v873, %v875
        %v877 = vrot.slane %v810, 7
        %v878 = vsel %vm826, %v827, %v877
        %v879 = vrot.slane %v812, 7
        %v880 = vsel %vm826, %v877, %v879
        %v881 = vrot.slane %v814, 7
        %v882 = vsel %vm826, %v827, %v881
        %v883 = vrot.slane %v816, 7
        %v884 = vsel %vm826, %v881, %v883
        %v885 = vrot.slane %v818, 7
        %v886 = vsel %vm826, %v827, %v885
        %v887 = vrot.slane %v820, 7
        %v888 = vsel %vm826, %v885, %v887
        %vm920 = vcmask 1046528
        %v921 = vrot.slane 0.0, 1
        %v922 = vsel %vm920, %v921, %v921
        %v923 = vrot.slane %v762, 1
        %v924 = vrot.slane %v764, 1
        %v925 = vsel %vm920, %v923, %v924
        %v926 = vsel %vm920, %v924, %v921
        %v927 = vrot.slane %v766, 1
        %v928 = vrot.slane %v768, 1
        %v929 = vsel %vm920, %v927, %v928
        %v930 = vsel %vm920, %v928, %v921
        %v931 = vrot.slane %v770, 1
        %v932 = vrot.slane %v772, 1
        %v933 = vsel %vm920, %v931, %v932
        %v934 = vsel %vm920, %v932, %v921
        %v935 = vrot.slane %v774, 1
        %v936 = vrot.slane %v776, 1
        %v937 = vsel %vm920, %v935, %v936
        %v938 = vsel %vm920, %v936, %v921
        %v939 = vrot.slane %v778, 1
        %v940 = vrot.slane %v780, 1
        %v941 = vsel %vm920, %v939, %v940
        %v942 = vsel %vm920, %v940, %v921
        %v943 = vrot.slane %v782, 1
        %v944 = vrot.slane %v784, 1
        %v945 = vsel %vm920, %v943, %v944
        %v946 = vsel %vm920, %v944, %v921
        %v947 = vrot.slane %v786, 1
        %v948 = vrot.slane %v788, 1
        %v949 = vsel %vm920, %v947, %v948
        %v950 = vsel %vm920, %v948, %v921
        %v951 = vrot.slane %v790, 1
        %v952 = vrot.slane %v792, 1
        %v953 = vsel %vm920, %v951, %v952
        %v954 = vsel %vm920, %v952, %v921
        %v955 = vrot.slane %v794, 1
        %v956 = vrot.slane %v796, 1
        %v957 = vsel %vm920, %v955, %v956
        %v958 = vsel %vm920, %v956, %v921
        %v959 = vrot.slane %v798, 1
        %v960 = vrot.slane %v800, 1
        %v961 = vsel %vm920, %v959, %v960
        %v962 = vsel %vm920, %v960, %v921
        %v963 = vrot.slane %v802, 1
        %v964 = vrot.slane %v804, 1
        %v965 = vsel %vm920, %v963, %v964
        %v966 = vsel %vm920, %v964, %v921
        %v967 = vrot.slane %v806, 1
        %v968 = vrot.slane %v808, 1
        %v969 = vsel %vm920, %v967, %v968
        %v970 = vsel %vm920, %v968, %v921
        %v971 = vrot.slane %v810, 1
        %v972 = vrot.slane %v812, 1
        %v973 = vsel %vm920, %v971, %v972
        %v974 = vsel %vm920, %v972, %v921
        %v975 = vrot.slane %v814, 1
        %v976 = vrot.slane %v816, 1
        %v977 = vsel %vm920, %v975, %v976
        %v978 = vsel %vm920, %v976, %v921
        %v979 = vrot.slane %v818, 1
        %v980 = vrot.slane %v820, 1
        %v981 = vsel %vm920, %v979, %v980
        %v982 = vsel %vm920, %v980, %v921
        %v983 = vrot.slane %v822, 7
        %v984 = vsel %vm826, %v827, %v983
        %v985 = vrot.slane %v824, 7
        %v986 = vsel %vm826, %v983, %v985
        %v987 = vrot.slane %v822, 1
        %v988 = vrot.slane %v824, 1
        %v989 = vsel %vm920, %v987, %v988
        %v990 = vsel %vm920, %v988, %v921
        %991 = vrot.lane.b32.xlu0 0.0, 4
        %v992 = vpop.permute.xlu0 %991
        %993 = vrot.lane.b32.xlu0 %v762, 4
        %v994 = vpop.permute.xlu0 %993
        %995 = vrot.lane.b32.xlu0 %v764, 4
        %v996 = vpop.permute.xlu0 %995
        %997 = vrot.lane.b32.xlu0 %v766, 4
        %v998 = vpop.permute.xlu0 %997
        %999 = vrot.lane.b32.xlu0 %v768, 4
        %v1000 = vpop.permute.xlu0 %999
        %1001 = vrot.lane.b32.xlu0 %v770, 4
        %v1002 = vpop.permute.xlu0 %1001
        %1003 = vrot.lane.b32.xlu0 %v772, 4
        %v1004 = vpop.permute.xlu0 %1003
        %1005 = vrot.lane.b32.xlu0 %v774, 4
        %v1006 = vpop.permute.xlu0 %1005
        %1007 = vrot.lane.b32.xlu0 %v776, 4
        %v1008 = vpop.permute.xlu0 %1007
        %1009 = vrot.lane.b32.xlu0 %v778, 4
        %v1010 = vpop.permute.xlu0 %1009
        %1011 = vrot.lane.b32.xlu0 %v780, 4
        %v1012 = vpop.permute.xlu0 %1011
        %1013 = vrot.lane.b32.xlu0 %v782, 4
        %v1014 = vpop.permute.xlu0 %1013
        %1015 = vrot.lane.b32.xlu0 %v784, 4
        %v1016 = vpop.permute.xlu0 %1015
        %1017 = vrot.lane.b32.xlu0 %v786, 4
        %v1018 = vpop.permute.xlu0 %1017
        %1019 = vrot.lane.b32.xlu0 %v788, 4
        %v1020 = vpop.permute.xlu0 %1019
        %1021 = vrot.lane.b32.xlu0 %v790, 4
        %v1022 = vpop.permute.xlu0 %1021
        %1023 = vrot.lane.b32.xlu0 %v792, 4
        %v1024 = vpop.permute.xlu0 %1023
        %1025 = vrot.lane.b32.xlu0 %v794, 4
        %v1026 = vpop.permute.xlu0 %1025
        %1027 = vrot.lane.b32.xlu0 %v796, 4
        %v1028 = vpop.permute.xlu0 %1027
        %1029 = vrot.lane.b32.xlu0 %v798, 4
        %v1030 = vpop.permute.xlu0 %1029
        %1031 = vrot.lane.b32.xlu0 %v800, 4
        %v1032 = vpop.permute.xlu0 %1031
        %1033 = vrot.lane.b32.xlu0 %v802, 4
        %v1034 = vpop.permute.xlu0 %1033
        %1035 = vrot.lane.b32.xlu0 %v804, 4
        %v1036 = vpop.permute.xlu0 %1035
        %1037 = vrot.lane.b32.xlu0 %v806, 4
        %v1038 = vpop.permute.xlu0 %1037
        %1039 = vrot.lane.b32.xlu0 %v808, 4
        %v1040 = vpop.permute.xlu0 %1039
        %1041 = vrot.lane.b32.xlu0 %v810, 4
        %v1042 = vpop.permute.xlu0 %1041
        %1043 = vrot.lane.b32.xlu0 %v812, 4
        %v1044 = vpop.permute.xlu0 %1043
        %1045 = vrot.lane.b32.xlu0 %v814, 4
        %v1046 = vpop.permute.xlu0 %1045
        %1047 = vrot.lane.b32.xlu0 %v816, 4
        %v1048 = vpop.permute.xlu0 %1047
        %1049 = vrot.lane.b32.xlu0 %v818, 4
        %v1050 = vpop.permute.xlu0 %1049
        %1051 = vrot.lane.b32.xlu0 %v820, 4
        %v1052 = vpop.permute.xlu0 %1051
        %1084 = vrot.lane.b32.xlu0 %v922, 8
        %v1085 = vpop.permute.xlu0 %1084
        %1086 = vrot.lane.b32.xlu0 %v925, 8
        %v1087 = vpop.permute.xlu0 %1086
        %1088 = vrot.lane.b32.xlu0 %v926, 8
        %v1089 = vpop.permute.xlu0 %1088
        %1090 = vrot.lane.b32.xlu0 %v929, 8
        %v1091 = vpop.permute.xlu0 %1090
        %1092 = vrot.lane.b32.xlu0 %v930, 8
        %v1093 = vpop.permute.xlu0 %1092
        %1094 = vrot.lane.b32.xlu0 %v933, 8
        %v1095 = vpop.permute.xlu0 %1094
        %1096 = vrot.lane.b32.xlu0 %v934, 8
        %v1097 = vpop.permute.xlu0 %1096
        %1098 = vrot.lane.b32.xlu0 %v937, 8
        %v1099 = vpop.permute.xlu0 %1098
        %1100 = vrot.lane.b32.xlu0 %v938, 8
        %v1101 = vpop.permute.xlu0 %1100
        %1102 = vrot.lane.b32.xlu0 %v941, 8
        %v1103 = vpop.permute.xlu0 %1102
        %1104 = vrot.lane.b32.xlu0 %v942, 8
        %v1105 = vpop.permute.xlu0 %1104
        %1106 = vrot.lane.b32.xlu0 %v945, 8
        %v1107 = vpop.permute.xlu0 %1106
        %1108 = vrot.lane.b32.xlu0 %v946, 8
        %v1109 = vpop.permute.xlu0 %1108
        %1110 = vrot.lane.b32.xlu0 %v949, 8
        %v1111 = vpop.permute.xlu0 %1110
        %1112 = vrot.lane.b32.xlu0 %v950, 8
        %v1113 = vpop.permute.xlu0 %1112
        %1114 = vrot.lane.b32.xlu0 %v953, 8
        %v1115 = vpop.permute.xlu0 %1114
        %1116 = vrot.lane.b32.xlu0 %v954, 8
        %v1117 = vpop.permute.xlu0 %1116
        %1118 = vrot.lane.b32.xlu0 %v957, 8
        %v1119 = vpop.permute.xlu0 %1118
        %1120 = vrot.lane.b32.xlu0 %v958, 8
        %v1121 = vpop.permute.xlu0 %1120
        %1122 = vrot.lane.b32.xlu0 %v961, 8
        %v1123 = vpop.permute.xlu0 %1122
        %1124 = vrot.lane.b32.xlu0 %v962, 8
        %v1125 = vpop.permute.xlu0 %1124
        %1126 = vrot.lane.b32.xlu0 %v965, 8
        %v1127 = vpop.permute.xlu0 %1126
        %1128 = vrot.lane.b32.xlu0 %v966, 8
        %v1129 = vpop.permute.xlu0 %1128
        %1130 = vrot.lane.b32.xlu0 %v969, 8
        %v1131 = vpop.permute.xlu0 %1130
        %1132 = vrot.lane.b32.xlu0 %v970, 8
        %v1133 = vpop.permute.xlu0 %1132
        %1134 = vrot.lane.b32.xlu0 %v973, 8
        %v1135 = vpop.permute.xlu0 %1134
        %1136 = vrot.lane.b32.xlu0 %v974, 8
        %v1137 = vpop.permute.xlu0 %1136
        %1138 = vrot.lane.b32.xlu0 %v977, 8
        %v1139 = vpop.permute.xlu0 %1138
        %1140 = vrot.lane.b32.xlu0 %v978, 8
        %v1141 = vpop.permute.xlu0 %1140
        %1142 = vrot.lane.b32.xlu0 %v981, 8
        %v1143 = vpop.permute.xlu0 %1142
        %1144 = vrot.lane.b32.xlu0 %v982, 8
        %v1145 = vpop.permute.xlu0 %1144
        %1177 = vrot.lane.b32.xlu0 %v830, 12
        %v1178 = vpop.permute.xlu0 %1177
        %1179 = vrot.lane.b32.xlu0 %v832, 12
        %v1180 = vpop.permute.xlu0 %1179
        %1181 = vrot.lane.b32.xlu0 %v834, 12
        %v1182 = vpop.permute.xlu0 %1181
        %1183 = vrot.lane.b32.xlu0 %v836, 12
        %v1184 = vpop.permute.xlu0 %1183
        %1185 = vrot.lane.b32.xlu0 %v838, 12
        %v1186 = vpop.permute.xlu0 %1185
        %1187 = vrot.lane.b32.xlu0 %v840, 12
        %v1188 = vpop.permute.xlu0 %1187
        %1189 = vrot.lane.b32.xlu0 %v842, 12
        %v1190 = vpop.permute.xlu0 %1189
        %1191 = vrot.lane.b32.xlu0 %v844, 12
        %v1192 = vpop.permute.xlu0 %1191
        %1193 = vrot.lane.b32.xlu0 %v846, 12
        %v1194 = vpop.permute.xlu0 %1193
        %1195 = vrot.lane.b32.xlu0 %v848, 12
        %v1196 = vpop.permute.xlu0 %1195
        %1197 = vrot.lane.b32.xlu0 %v850, 12
        %v1198 = vpop.permute.xlu0 %1197
        %1199 = vrot.lane.b32.xlu0 %v852, 12
        %v1200 = vpop.permute.xlu0 %1199
        %1201 = vrot.lane.b32.xlu0 %v854, 12
        %v1202 = vpop.permute.xlu0 %1201
        %1203 = vrot.lane.b32.xlu0 %v856, 12
        %v1204 = vpop.permute.xlu0 %1203
        %1205 = vrot.lane.b32.xlu0 %v858, 12
        %v1206 = vpop.permute.xlu0 %1205
        %1207 = vrot.lane.b32.xlu0 %v860, 12
        %v1208 = vpop.permute.xlu0 %1207
        %1209 = vrot.lane.b32.xlu0 %v862, 12
        %v1210 = vpop.permute.xlu0 %1209
        %1211 = vrot.lane.b32.xlu0 %v864, 12
        %v1212 = vpop.permute.xlu0 %1211
        %1213 = vrot.lane.b32.xlu0 %v866, 12
        %v1214 = vpop.permute.xlu0 %1213
        %1215 = vrot.lane.b32.xlu0 %v868, 12
        %v1216 = vpop.permute.xlu0 %1215
        %1217 = vrot.lane.b32.xlu0 %v870, 12
        %v1218 = vpop.permute.xlu0 %1217
        %1219 = vrot.lane.b32.xlu0 %v872, 12
        %v1220 = vpop.permute.xlu0 %1219
        %1221 = vrot.lane.b32.xlu0 %v874, 12
        %v1222 = vpop.permute.xlu0 %1221
        %1223 = vrot.lane.b32.xlu0 %v876, 12
        %v1224 = vpop.permute.xlu0 %1223
        %1225 = vrot.lane.b32.xlu0 %v878, 12
        %v1226 = vpop.permute.xlu0 %1225
        %1227 = vrot.lane.b32.xlu0 %v880, 12
        %v1228 = vpop.permute.xlu0 %1227
        %1229 = vrot.lane.b32.xlu0 %v882, 12
        %v1230 = vpop.permute.xlu0 %1229
        %1231 = vrot.lane.b32.xlu0 %v884, 12
        %v1232 = vpop.permute.xlu0 %1231
        %1233 = vrot.lane.b32.xlu0 %v886, 12
        %v1234 = vpop.permute.xlu0 %1233
        %1235 = vrot.lane.b32.xlu0 %v888, 12
        %v1236 = vpop.permute.xlu0 %1235
        %1237 = vrot.lane.b32.xlu0 %v984, 12
        %v1238 = vpop.permute.xlu0 %1237
        %1239 = vrot.lane.b32.xlu0 %v986, 12
        %v1240 = vpop.permute.xlu0 %1239
        %1273 = vrot.lane.b32.xlu0 %v762, 16
        %v1274 = vpop.permute.xlu0 %1273
        %1275 = vrot.lane.b32.xlu0 %v764, 16
        %v1276 = vpop.permute.xlu0 %1275
        %1277 = vrot.lane.b32.xlu0 %v766, 16
        %v1278 = vpop.permute.xlu0 %1277
        %1279 = vrot.lane.b32.xlu0 %v768, 16
        %v1280 = vpop.permute.xlu0 %1279
        %1281 = vrot.lane.b32.xlu0 %v770, 16
        %v1282 = vpop.permute.xlu0 %1281
        %1283 = vrot.lane.b32.xlu0 %v772, 16
        %v1284 = vpop.permute.xlu0 %1283
        %1285 = vrot.lane.b32.xlu0 %v774, 16
        %v1286 = vpop.permute.xlu0 %1285
        %1287 = vrot.lane.b32.xlu0 %v776, 16
        %v1288 = vpop.permute.xlu0 %1287
        %1289 = vrot.lane.b32.xlu0 %v778, 16
        %v1290 = vpop.permute.xlu0 %1289
        %1291 = vrot.lane.b32.xlu0 %v780, 16
        %v1292 = vpop.permute.xlu0 %1291
        %1293 = vrot.lane.b32.xlu0 %v782, 16
        %v1294 = vpop.permute.xlu0 %1293
        %1295 = vrot.lane.b32.xlu0 %v784, 16
        %v1296 = vpop.permute.xlu0 %1295
        %1297 = vrot.lane.b32.xlu0 %v786, 16
        %v1298 = vpop.permute.xlu0 %1297
        %1299 = vrot.lane.b32.xlu0 %v788, 16
        %v1300 = vpop.permute.xlu0 %1299
        %1301 = vrot.lane.b32.xlu0 %v790, 16
        %v1302 = vpop.permute.xlu0 %1301
        %1303 = vrot.lane.b32.xlu0 %v792, 16
        %v1304 = vpop.permute.xlu0 %1303
        %1305 = vrot.lane.b32.xlu0 %v794, 16
        %v1306 = vpop.permute.xlu0 %1305
        %1307 = vrot.lane.b32.xlu0 %v796, 16
        %v1308 = vpop.permute.xlu0 %1307
        %1309 = vrot.lane.b32.xlu0 %v798, 16
        %v1310 = vpop.permute.xlu0 %1309
        %1311 = vrot.lane.b32.xlu0 %v800, 16
        %v1312 = vpop.permute.xlu0 %1311
        %1313 = vrot.lane.b32.xlu0 %v802, 16
        %v1314 = vpop.permute.xlu0 %1313
        %1315 = vrot.lane.b32.xlu0 %v804, 16
        %v1316 = vpop.permute.xlu0 %1315
        %1317 = vrot.lane.b32.xlu0 %v806, 16
        %v1318 = vpop.permute.xlu0 %1317
        %1319 = vrot.lane.b32.xlu0 %v808, 16
        %v1320 = vpop.permute.xlu0 %1319
        %1321 = vrot.lane.b32.xlu0 %v810, 16
        %v1322 = vpop.permute.xlu0 %1321
        %1323 = vrot.lane.b32.xlu0 %v812, 16
        %v1324 = vpop.permute.xlu0 %1323
        %1325 = vrot.lane.b32.xlu0 %v814, 16
        %v1326 = vpop.permute.xlu0 %1325
        %1327 = vrot.lane.b32.xlu0 %v816, 16
        %v1328 = vpop.permute.xlu0 %1327
        %1329 = vrot.lane.b32.xlu0 %v818, 16
        %v1330 = vpop.permute.xlu0 %1329
        %1331 = vrot.lane.b32.xlu0 %v820, 16
        %v1332 = vpop.permute.xlu0 %1331
        %1333 = vrot.lane.b32.xlu0 %v822, 16
        %v1334 = vpop.permute.xlu0 %1333
        %1335 = vrot.lane.b32.xlu0 %v824, 16
        %v1336 = vpop.permute.xlu0 %1335
        %1369 = vrot.lane.b32.xlu0 %v925, 20
        %v1370 = vpop.permute.xlu0 %1369
        %1371 = vrot.lane.b32.xlu0 %v926, 20
        %v1372 = vpop.permute.xlu0 %1371
        %1373 = vrot.lane.b32.xlu0 %v929, 20
        %v1374 = vpop.permute.xlu0 %1373
        %1375 = vrot.lane.b32.xlu0 %v930, 20
        %v1376 = vpop.permute.xlu0 %1375
        %1377 = vrot.lane.b32.xlu0 %v933, 20
        %v1378 = vpop.permute.xlu0 %1377
        %1379 = vrot.lane.b32.xlu0 %v934, 20
        %v1380 = vpop.permute.xlu0 %1379
        %1381 = vrot.lane.b32.xlu0 %v937, 20
        %v1382 = vpop.permute.xlu0 %1381
        %1383 = vrot.lane.b32.xlu0 %v938, 20
        %v1384 = vpop.permute.xlu0 %1383
        %1385 = vrot.lane.b32.xlu0 %v941, 20
        %v1386 = vpop.permute.xlu0 %1385
        %1387 = vrot.lane.b32.xlu0 %v942, 20
        %v1388 = vpop.permute.xlu0 %1387
        %1389 = vrot.lane.b32.xlu0 %v945, 20
        %v1390 = vpop.permute.xlu0 %1389
        %1391 = vrot.lane.b32.xlu0 %v946, 20
        %v1392 = vpop.permute.xlu0 %1391
        %1393 = vrot.lane.b32.xlu0 %v949, 20
        %v1394 = vpop.permute.xlu0 %1393
        %1395 = vrot.lane.b32.xlu0 %v950, 20
        %v1396 = vpop.permute.xlu0 %1395
        %1397 = vrot.lane.b32.xlu0 %v953, 20
        %v1398 = vpop.permute.xlu0 %1397
        %1399 = vrot.lane.b32.xlu0 %v954, 20
        %v1400 = vpop.permute.xlu0 %1399
        %1401 = vrot.lane.b32.xlu0 %v957, 20
        %v1402 = vpop.permute.xlu0 %1401
        %1403 = vrot.lane.b32.xlu0 %v958, 20
        %v1404 = vpop.permute.xlu0 %1403
        %1405 = vrot.lane.b32.xlu0 %v961, 20
        %v1406 = vpop.permute.xlu0 %1405
        %1407 = vrot.lane.b32.xlu0 %v962, 20
        %v1408 = vpop.permute.xlu0 %1407
        %1409 = vrot.lane.b32.xlu0 %v965, 20
        %v1410 = vpop.permute.xlu0 %1409
        %1411 = vrot.lane.b32.xlu0 %v966, 20
        %v1412 = vpop.permute.xlu0 %1411
        %1413 = vrot.lane.b32.xlu0 %v969, 20
        %v1414 = vpop.permute.xlu0 %1413
        %1415 = vrot.lane.b32.xlu0 %v970, 20
        %v1416 = vpop.permute.xlu0 %1415
        %1417 = vrot.lane.b32.xlu0 %v973, 20
        %v1418 = vpop.permute.xlu0 %1417
        %1419 = vrot.lane.b32.xlu0 %v974, 20
        %v1420 = vpop.permute.xlu0 %1419
        %1421 = vrot.lane.b32.xlu0 %v977, 20
        %v1422 = vpop.permute.xlu0 %1421
        %1423 = vrot.lane.b32.xlu0 %v978, 20
        %v1424 = vpop.permute.xlu0 %1423
        %1425 = vrot.lane.b32.xlu0 %v981, 20
        %v1426 = vpop.permute.xlu0 %1425
        %1427 = vrot.lane.b32.xlu0 %v982, 20
        %v1428 = vpop.permute.xlu0 %1427
        %1429 = vrot.lane.b32.xlu0 %v989, 20
        %v1430 = vpop.permute.xlu0 %1429
        %1431 = vrot.lane.b32.xlu0 %v990, 20
        %v1432 = vpop.permute.xlu0 %1431
        %1465 = vrot.lane.b32.xlu0 %v834, 24
        %v1466 = vpop.permute.xlu0 %1465
        %1467 = vrot.lane.b32.xlu0 %v836, 24
        %v1468 = vpop.permute.xlu0 %1467
        %1469 = vrot.lane.b32.xlu0 %v838, 24
        %v1470 = vpop.permute.xlu0 %1469
        %1471 = vrot.lane.b32.xlu0 %v840, 24
        %v1472 = vpop.permute.xlu0 %1471
        %1473 = vrot.lane.b32.xlu0 %v842, 24
        %v1474 = vpop.permute.xlu0 %1473
        %1475 = vrot.lane.b32.xlu0 %v844, 24
        %v1476 = vpop.permute.xlu0 %1475
        %1477 = vrot.lane.b32.xlu0 %v846, 24
        %v1478 = vpop.permute.xlu0 %1477
        %1479 = vrot.lane.b32.xlu0 %v848, 24
        %v1480 = vpop.permute.xlu0 %1479
        %1481 = vrot.lane.b32.xlu0 %v850, 24
        %v1482 = vpop.permute.xlu0 %1481
        %1483 = vrot.lane.b32.xlu0 %v852, 24
        %v1484 = vpop.permute.xlu0 %1483
        %1485 = vrot.lane.b32.xlu0 %v854, 24
        %v1486 = vpop.permute.xlu0 %1485
        %1487 = vrot.lane.b32.xlu0 %v856, 24
        %v1488 = vpop.permute.xlu0 %1487
        %1489 = vrot.lane.b32.xlu0 %v858, 24
        %v1490 = vpop.permute.xlu0 %1489
        %1491 = vrot.lane.b32.xlu0 %v860, 24
        %v1492 = vpop.permute.xlu0 %1491
        %1493 = vrot.lane.b32.xlu0 %v862, 24
        %v1494 = vpop.permute.xlu0 %1493
        %1495 = vrot.lane.b32.xlu0 %v864, 24
        %v1496 = vpop.permute.xlu0 %1495
        %1497 = vrot.lane.b32.xlu0 %v866, 24
        %v1498 = vpop.permute.xlu0 %1497
        %1499 = vrot.lane.b32.xlu0 %v868, 24
        %v1500 = vpop.permute.xlu0 %1499
        %1501 = vrot.lane.b32.xlu0 %v870, 24
        %v1502 = vpop.permute.xlu0 %1501
        %1503 = vrot.lane.b32.xlu0 %v872, 24
        %v1504 = vpop.permute.xlu0 %1503
        %1505 = vrot.lane.b32.xlu0 %v874, 24
        %v1506 = vpop.permute.xlu0 %1505
        %1507 = vrot.lane.b32.xlu0 %v876, 24
        %v1508 = vpop.permute.xlu0 %1507
        %1509 = vrot.lane.b32.xlu0 %v878, 24
        %v1510 = vpop.permute.xlu0 %1509
        %1511 = vrot.lane.b32.xlu0 %v880, 24
        %v1512 = vpop.permute.xlu0 %1511
        %1513 = vrot.lane.b32.xlu0 %v882, 24
        %v1514 = vpop.permute.xlu0 %1513
        %1515 = vrot.lane.b32.xlu0 %v884, 24
        %v1516 = vpop.permute.xlu0 %1515
        %1517 = vrot.lane.b32.xlu0 %v886, 24
        %v1518 = vpop.permute.xlu0 %1517
        %1519 = vrot.lane.b32.xlu0 %v888, 24
        %v1520 = vpop.permute.xlu0 %1519
        %1521 = vrot.lane.b32.xlu0 %v984, 24
        %v1522 = vpop.permute.xlu0 %1521
        %1523 = vrot.lane.b32.xlu0 %v986, 24
        %v1524 = vpop.permute.xlu0 %1523
        %1525 = vrot.lane.b32.xlu0 %v828, 24
        %v1526 = vpop.permute.xlu0 %1525
        %1558 = vrot.lane.b32.xlu0 %v766, 28
        %v1559 = vpop.permute.xlu0 %1558
        %1560 = vrot.lane.b32.xlu0 %v768, 28
        %v1561 = vpop.permute.xlu0 %1560
        %1562 = vrot.lane.b32.xlu0 %v770, 28
        %v1563 = vpop.permute.xlu0 %1562
        %1564 = vrot.lane.b32.xlu0 %v772, 28
        %v1565 = vpop.permute.xlu0 %1564
        %1566 = vrot.lane.b32.xlu0 %v774, 28
        %v1567 = vpop.permute.xlu0 %1566
        %1568 = vrot.lane.b32.xlu0 %v776, 28
        %v1569 = vpop.permute.xlu0 %1568
        %1570 = vrot.lane.b32.xlu0 %v778, 28
        %v1571 = vpop.permute.xlu0 %1570
        %1572 = vrot.lane.b32.xlu0 %v780, 28
        %v1573 = vpop.permute.xlu0 %1572
        %1574 = vrot.lane.b32.xlu0 %v782, 28
        %v1575 = vpop.permute.xlu0 %1574
        %1576 = vrot.lane.b32.xlu0 %v784, 28
        %v1577 = vpop.permute.xlu0 %1576
        %1578 = vrot.lane.b32.xlu0 %v786, 28
        %v1579 = vpop.permute.xlu0 %1578
        %1580 = vrot.lane.b32.xlu0 %v788, 28
        %v1581 = vpop.permute.xlu0 %1580
        %1582 = vrot.lane.b32.xlu0 %v790, 28
        %v1583 = vpop.permute.xlu0 %1582
        %1584 = vrot.lane.b32.xlu0 %v792, 28
        %v1585 = vpop.permute.xlu0 %1584
        %1586 = vrot.lane.b32.xlu0 %v794, 28
        %v1587 = vpop.permute.xlu0 %1586
        %1588 = vrot.lane.b32.xlu0 %v796, 28
        %v1589 = vpop.permute.xlu0 %1588
        %1590 = vrot.lane.b32.xlu0 %v798, 28
        %v1591 = vpop.permute.xlu0 %1590
        %1592 = vrot.lane.b32.xlu0 %v800, 28
        %v1593 = vpop.permute.xlu0 %1592
        %1594 = vrot.lane.b32.xlu0 %v802, 28
        %v1595 = vpop.permute.xlu0 %1594
        %1596 = vrot.lane.b32.xlu0 %v804, 28
        %v1597 = vpop.permute.xlu0 %1596
        %1598 = vrot.lane.b32.xlu0 %v806, 28
        %v1599 = vpop.permute.xlu0 %1598
        %1600 = vrot.lane.b32.xlu0 %v808, 28
        %v1601 = vpop.permute.xlu0 %1600
        %1602 = vrot.lane.b32.xlu0 %v810, 28
        %v1603 = vpop.permute.xlu0 %1602
        %1604 = vrot.lane.b32.xlu0 %v812, 28
        %v1605 = vpop.permute.xlu0 %1604
        %1606 = vrot.lane.b32.xlu0 %v814, 28
        %v1607 = vpop.permute.xlu0 %1606
        %1608 = vrot.lane.b32.xlu0 %v816, 28
        %v1609 = vpop.permute.xlu0 %1608
        %1610 = vrot.lane.b32.xlu0 %v818, 28
        %v1611 = vpop.permute.xlu0 %1610
        %1612 = vrot.lane.b32.xlu0 %v820, 28
        %v1613 = vpop.permute.xlu0 %1612
        %1614 = vrot.lane.b32.xlu0 %v822, 28
        %v1615 = vpop.permute.xlu0 %1614
        %1616 = vrot.lane.b32.xlu0 %v824, 28
        %v1617 = vpop.permute.xlu0 %1616
        %1618 = vrot.lane.b32.xlu0 0.0, 28
        %v1619 = vpop.permute.xlu0 %1618
        %1651 = vrot.lane.b32.xlu0 %v929, 32
        %v1652 = vpop.permute.xlu0 %1651
        %1653 = vrot.lane.b32.xlu0 %v930, 32
        %v1654 = vpop.permute.xlu0 %1653
        %1655 = vrot.lane.b32.xlu0 %v933, 32
        %v1656 = vpop.permute.xlu0 %1655
        %1657 = vrot.lane.b32.xlu0 %v934, 32
        %v1658 = vpop.permute.xlu0 %1657
        %1659 = vrot.lane.b32.xlu0 %v937, 32
        %v1660 = vpop.permute.xlu0 %1659
        %1661 = vrot.lane.b32.xlu0 %v938, 32
        %v1662 = vpop.permute.xlu0 %1661
        %1663 = vrot.lane.b32.xlu0 %v941, 32
        %v1664 = vpop.permute.xlu0 %1663
        %1665 = vrot.lane.b32.xlu0 %v942, 32
        %v1666 = vpop.permute.xlu0 %1665
        %1667 = vrot.lane.b32.xlu0 %v945, 32
        %v1668 = vpop.permute.xlu0 %1667
        %1669 = vrot.lane.b32.xlu0 %v946, 32
        %v1670 = vpop.permute.xlu0 %1669
        %1671 = vrot.lane.b32.xlu0 %v949, 32
        %v1672 = vpop.permute.xlu0 %1671
        %1673 = vrot.lane.b32.xlu0 %v950, 32
        %v1674 = vpop.permute.xlu0 %1673
        %1675 = vrot.lane.b32.xlu0 %v953, 32
        %v1676 = vpop.permute.xlu0 %1675
        %1677 = vrot.lane.b32.xlu0 %v954, 32
        %v1678 = vpop.permute.xlu0 %1677
        %1679 = vrot.lane.b32.xlu0 %v957, 32
        %v1680 = vpop.permute.xlu0 %1679
        %1681 = vrot.lane.b32.xlu0 %v958, 32
        %v1682 = vpop.permute.xlu0 %1681
        %1683 = vrot.lane.b32.xlu0 %v961, 32
        %v1684 = vpop.permute.xlu0 %1683
        %1685 = vrot.lane.b32.xlu0 %v962, 32
        %v1686 = vpop.permute.xlu0 %1685
        %1687 = vrot.lane.b32.xlu0 %v965, 32
        %v1688 = vpop.permute.xlu0 %1687
        %1689 = vrot.lane.b32.xlu0 %v966, 32
        %v1690 = vpop.permute.xlu0 %1689
        %1691 = vrot.lane.b32.xlu0 %v969, 32
        %v1692 = vpop.permute.xlu0 %1691
        %1693 = vrot.lane.b32.xlu0 %v970, 32
        %v1694 = vpop.permute.xlu0 %1693
        %1695 = vrot.lane.b32.xlu0 %v973, 32
        %v1696 = vpop.permute.xlu0 %1695
        %1697 = vrot.lane.b32.xlu0 %v974, 32
        %v1698 = vpop.permute.xlu0 %1697
        %1699 = vrot.lane.b32.xlu0 %v977, 32
        %v1700 = vpop.permute.xlu0 %1699
        %1701 = vrot.lane.b32.xlu0 %v978, 32
        %v1702 = vpop.permute.xlu0 %1701
        %1703 = vrot.lane.b32.xlu0 %v981, 32
        %v1704 = vpop.permute.xlu0 %1703
        %1705 = vrot.lane.b32.xlu0 %v982, 32
        %v1706 = vpop.permute.xlu0 %1705
        %1707 = vrot.lane.b32.xlu0 %v989, 32
        %v1708 = vpop.permute.xlu0 %1707
        %1709 = vrot.lane.b32.xlu0 %v990, 32
        %v1710 = vpop.permute.xlu0 %1709
        %1711 = vrot.lane.b32.xlu0 %v922, 32
        %v1712 = vpop.permute.xlu0 %1711
        %v1744 = vsel %vm371, %v828, %v992
        %v1745 = vsel %vm371, %v830, %v994
        %v1746 = vsel %vm371, %v832, %v996
        %v1747 = vsel %vm371, %v834, %v998
        %v1748 = vsel %vm371, %v836, %v1000
        %v1749 = vsel %vm371, %v838, %v1002
        %v1750 = vsel %vm371, %v840, %v1004
        %v1751 = vsel %vm371, %v842, %v1006
        %v1752 = vsel %vm371, %v844, %v1008
        %v1753 = vsel %vm371, %v846, %v1010
        %v1754 = vsel %vm371, %v848, %v1012
        %v1755 = vsel %vm371, %v850, %v1014
        %v1756 = vsel %vm371, %v852, %v1016
        %v1757 = vsel %vm371, %v854, %v1018
        %v1758 = vsel %vm371, %v856, %v1020
        %v1759 = vsel %vm371, %v858, %v1022
        %v1760 = vsel %vm371, %v860, %v1024
        %v1761 = vsel %vm371, %v862, %v1026
        %v1762 = vsel %vm371, %v864, %v1028
        %v1763 = vsel %vm371, %v866, %v1030
        %v1764 = vsel %vm371, %v868, %v1032
        %v1765 = vsel %vm371, %v870, %v1034
        %v1766 = vsel %vm371, %v872, %v1036
        %v1767 = vsel %vm371, %v874, %v1038
        %v1768 = vsel %vm371, %v876, %v1040
        %v1769 = vsel %vm371, %v878, %v1042
        %v1770 = vsel %vm371, %v880, %v1044
        %v1771 = vsel %vm371, %v882, %v1046
        %v1772 = vsel %vm371, %v884, %v1048
        %v1773 = vsel %vm371, %v886, %v1050
        %v1774 = vsel %vm371, %v888, %v1052
        %vm1775 = vcmask 64512
        %v1776 = vsel %vm1775, %v1744, %v1085
        %v1777 = vsel %vm1775, %v1745, %v1087
        %v1778 = vsel %vm1775, %v1746, %v1089
        %v1779 = vsel %vm1775, %v1747, %v1091
        %v1780 = vsel %vm1775, %v1748, %v1093
        %v1781 = vsel %vm1775, %v1749, %v1095
        %v1782 = vsel %vm1775, %v1750, %v1097
        %v1783 = vsel %vm1775, %v1751, %v1099
        %v1784 = vsel %vm1775, %v1752, %v1101
        %v1785 = vsel %vm1775, %v1753, %v1103
        %v1786 = vsel %vm1775, %v1754, %v1105
        %v1787 = vsel %vm1775, %v1755, %v1107
        %v1788 = vsel %vm1775, %v1756, %v1109
        %v1789 = vsel %vm1775, %v1757, %v1111
        %v1790 = vsel %vm1775, %v1758, %v1113
        %v1791 = vsel %vm1775, %v1759, %v1115
        %v1792 = vsel %vm1775, %v1760, %v1117
        %v1793 = vsel %vm1775, %v1761, %v1119
        %v1794 = vsel %vm1775, %v1762, %v1121
        %v1795 = vsel %vm1775, %v1763, %v1123
        %v1796 = vsel %vm1775, %v1764, %v1125
        %v1797 = vsel %vm1775, %v1765, %v1127
        %v1798 = vsel %vm1775, %v1766, %v1129
        %v1799 = vsel %vm1775, %v1767, %v1131
        %v1800 = vsel %vm1775, %v1768, %v1133
        %v1801 = vsel %vm1775, %v1769, %v1135
        %v1802 = vsel %vm1775, %v1770, %v1137
        %v1803 = vsel %vm1775, %v1771, %v1139
        %v1804 = vsel %vm1775, %v1772, %v1141
        %v1805 = vsel %vm1775, %v1773, %v1143
        %v1806 = vsel %vm1775, %v1774, %v1145
        %vm1807 = vcmask 97280
        %v1808 = vsel %vm1807, %v1776, %v1178
        %v1809 = vsel %vm1807, %v1776, %v1180
        %v1810 = vsel %vm1807, %v1777, %v1182
        %v1811 = vsel %vm1807, %v1778, %v1184
        %v1812 = vsel %vm1807, %v1779, %v1186
        %v1813 = vsel %vm1807, %v1780, %v1188
        %v1814 = vsel %vm1807, %v1781, %v1190
        %v1815 = vsel %vm1807, %v1782, %v1192
        %v1816 = vsel %vm1807, %v1783, %v1194
        %v1817 = vsel %vm1807, %v1784, %v1196
        %v1818 = vsel %vm1807, %v1785, %v1198
        %v1819 = vsel %vm1807, %v1786, %v1200
        %v1820 = vsel %vm1807, %v1787, %v1202
        %v1821 = vsel %vm1807, %v1788, %v1204
        %v1822 = vsel %vm1807, %v1789, %v1206
        %v1823 = vsel %vm1807, %v1790, %v1208
        %v1824 = vsel %vm1807, %v1791, %v1210
        %v1825 = vsel %vm1807, %v1792, %v1212
        %v1826 = vsel %vm1807, %v1793, %v1214
        %v1827 = vsel %vm1807, %v1794, %v1216
        %v1828 = vsel %vm1807, %v1795, %v1218
        %v1829 = vsel %vm1807, %v1796, %v1220
        %v1830 = vsel %vm1807, %v1797, %v1222
        %v1831 = vsel %vm1807, %v1798, %v1224
        %v1832 = vsel %vm1807, %v1799, %v1226
        %v1833 = vsel %vm1807, %v1800, %v1228
        %v1834 = vsel %vm1807, %v1801, %v1230
        %v1835 = vsel %vm1807, %v1802, %v1232
        %v1836 = vsel %vm1807, %v1803, %v1234
        %v1837 = vsel %vm1807, %v1804, %v1236
        %v1838 = vsel %vm1807, %v1805, %v1238
        %v1839 = vsel %vm1807, %v1806, %v1240
        %vm1840 = vcmask 130048
        %v1841 = vsel %vm1840, %v1808, %v1274
        %v1842 = vsel %vm1840, %v1809, %v1276
        %v1843 = vsel %vm1840, %v1810, %v1278
        %v1844 = vsel %vm1840, %v1811, %v1280
        %v1845 = vsel %vm1840, %v1812, %v1282
        %v1846 = vsel %vm1840, %v1813, %v1284
        %v1847 = vsel %vm1840, %v1814, %v1286
        %v1848 = vsel %vm1840, %v1815, %v1288
        %v1849 = vsel %vm1840, %v1816, %v1290
        %v1850 = vsel %vm1840, %v1817, %v1292
        %v1851 = vsel %vm1840, %v1818, %v1294
        %v1852 = vsel %vm1840, %v1819, %v1296
        %v1853 = vsel %vm1840, %v1820, %v1298
        %v1854 = vsel %vm1840, %v1821, %v1300
        %v1855 = vsel %vm1840, %v1822, %v1302
        %v1856 = vsel %vm1840, %v1823, %v1304
        %v1857 = vsel %vm1840, %v1824, %v1306
        %v1858 = vsel %vm1840, %v1825, %v1308
        %v1859 = vsel %vm1840, %v1826, %v1310
        %v1860 = vsel %vm1840, %v1827, %v1312
        %v1861 = vsel %vm1840, %v1828, %v1314
        %v1862 = vsel %vm1840, %v1829, %v1316
        %v1863 = vsel %vm1840, %v1830, %v1318
        %v1864 = vsel %vm1840, %v1831, %v1320
        %v1865 = vsel %vm1840, %v1832, %v1322
        %v1866 = vsel %vm1840, %v1833, %v1324
        %v1867 = vsel %vm1840, %v1834, %v1326
        %v1868 = vsel %vm1840, %v1835, %v1328
        %v1869 = vsel %vm1840, %v1836, %v1330
        %v1870 = vsel %vm1840, %v1837, %v1332
        %v1871 = vsel %vm1840, %v1838, %v1334
        %v1872 = vsel %vm1840, %v1839, %v1336
        %vm1873 = vcmask 162816
        %v1874 = vsel %vm1873, %v1841, %v1370
        %v1875 = vsel %vm1873, %v1842, %v1372
        %v1876 = vsel %vm1873, %v1843, %v1374
        %v1877 = vsel %vm1873, %v1844, %v1376
        %v1878 = vsel %vm1873, %v1845, %v1378
        %v1879 = vsel %vm1873, %v1846, %v1380
        %v1880 = vsel %vm1873, %v1847, %v1382
        %v1881 = vsel %vm1873, %v1848, %v1384
        %v1882 = vsel %vm1873, %v1849, %v1386
        %v1883 = vsel %vm1873, %v1850, %v1388
        %v1884 = vsel %vm1873, %v1851, %v1390
        %v1885 = vsel %vm1873, %v1852, %v1392
        %v1886 = vsel %vm1873, %v1853, %v1394
        %v1887 = vsel %vm1873, %v1854, %v1396
        %v1888 = vsel %vm1873, %v1855, %v1398
        %v1889 = vsel %vm1873, %v1856, %v1400
        %v1890 = vsel %vm1873, %v1857, %v1402
        %v1891 = vsel %vm1873, %v1858, %v1404
        %v1892 = vsel %vm1873, %v1859, %v1406
        %v1893 = vsel %vm1873, %v1860, %v1408
        %v1894 = vsel %vm1873, %v1861, %v1410
        %v1895 = vsel %vm1873, %v1862, %v1412
        %v1896 = vsel %vm1873, %v1863, %v1414
        %v1897 = vsel %vm1873, %v1864, %v1416
        %v1898 = vsel %vm1873, %v1865, %v1418
        %v1899 = vsel %vm1873, %v1866, %v1420
        %v1900 = vsel %vm1873, %v1867, %v1422
        %v1901 = vsel %vm1873, %v1868, %v1424
        %v1902 = vsel %vm1873, %v1869, %v1426
        %v1903 = vsel %vm1873, %v1870, %v1428
        %v1904 = vsel %vm1873, %v1871, %v1430
        %v1905 = vsel %vm1873, %v1872, %v1432
        %vm1906 = vcmask 195584
        %v1907 = vsel %vm1906, %v1874, %v1466
        %v1908 = vsel %vm1906, %v1875, %v1468
        %v1909 = vsel %vm1906, %v1876, %v1470
        %v1910 = vsel %vm1906, %v1877, %v1472
        %v1911 = vsel %vm1906, %v1878, %v1474
        %v1912 = vsel %vm1906, %v1879, %v1476
        %v1913 = vsel %vm1906, %v1880, %v1478
        %v1914 = vsel %vm1906, %v1881, %v1480
        %v1915 = vsel %vm1906, %v1882, %v1482
        %v1916 = vsel %vm1906, %v1883, %v1484
        %v1917 = vsel %vm1906, %v1884, %v1486
        %v1918 = vsel %vm1906, %v1885, %v1488
        %v1919 = vsel %vm1906, %v1886, %v1490
        %v1920 = vsel %vm1906, %v1887, %v1492
        %v1921 = vsel %vm1906, %v1888, %v1494
        %v1922 = vsel %vm1906, %v1889, %v1496
        %v1923 = vsel %vm1906, %v1890, %v1498
        %v1924 = vsel %vm1906, %v1891, %v1500
        %v1925 = vsel %vm1906, %v1892, %v1502
        %v1926 = vsel %vm1906, %v1893, %v1504
        %v1927 = vsel %vm1906, %v1894, %v1506
        %v1928 = vsel %vm1906, %v1895, %v1508
        %v1929 = vsel %vm1906, %v1896, %v1510
        %v1930 = vsel %vm1906, %v1897, %v1512
        %v1931 = vsel %vm1906, %v1898, %v1514
        %v1932 = vsel %vm1906, %v1899, %v1516
        %v1933 = vsel %vm1906, %v1900, %v1518
        %v1934 = vsel %vm1906, %v1901, %v1520
        %v1935 = vsel %vm1906, %v1902, %v1522
        %v1936 = vsel %vm1906, %v1903, %v1524
        %v1937 = vsel %vm1906, %v1904, %v1526
        %v1938 = vsel %vm1906, %v1905, %v1526
        %vm1939 = vcmask 228352
        %v1940 = vsel %vm1939, %v1907, %v1559
        %v1941 = vsel %vm1939, %v1908, %v1561
        %v1942 = vsel %vm1939, %v1909, %v1563
        %v1943 = vsel %vm1939, %v1910, %v1565
        %v1944 = vsel %vm1939, %v1911, %v1567
        %v1945 = vsel %vm1939, %v1912, %v1569
        %v1946 = vsel %vm1939, %v1913, %v1571
        %v1947 = vsel %vm1939, %v1914, %v1573
        %v1948 = vsel %vm1939, %v1915, %v1575
        %v1949 = vsel %vm1939, %v1916, %v1577
        %v1950 = vsel %vm1939, %v1917, %v1579
        %v1951 = vsel %vm1939, %v1918, %v1581
        %v1952 = vsel %vm1939, %v1919, %v1583
        %v1953 = vsel %vm1939, %v1920, %v1585
        %v1954 = vsel %vm1939, %v1921, %v1587
        %v1955 = vsel %vm1939, %v1922, %v1589
        %v1956 = vsel %vm1939, %v1923, %v1591
        %v1957 = vsel %vm1939, %v1924, %v1593
        %v1958 = vsel %vm1939, %v1925, %v1595
        %v1959 = vsel %vm1939, %v1926, %v1597
        %v1960 = vsel %vm1939, %v1927, %v1599
        %v1961 = vsel %vm1939, %v1928, %v1601
        %v1962 = vsel %vm1939, %v1929, %v1603
        %v1963 = vsel %vm1939, %v1930, %v1605
        %v1964 = vsel %vm1939, %v1931, %v1607
        %v1965 = vsel %vm1939, %v1932, %v1609
        %v1966 = vsel %vm1939, %v1933, %v1611
        %v1967 = vsel %vm1939, %v1934, %v1613
        %v1968 = vsel %vm1939, %v1935, %v1615
        %v1969 = vsel %vm1939, %v1936, %v1617
        %v1970 = vsel %vm1939, %v1937, %v1619
        %v1971 = vsel %vm1939, %v1938, %v1619
        %vm1972 = vcmask 261120
        %v1973 = vsel %vm1972, %v1940, %v1652
        %v1974 = vsel %vm1972, %v1941, %v1654
        %v1975 = vsel %vm1972, %v1942, %v1656
        %v1976 = vsel %vm1972, %v1943, %v1658
        %v1977 = vsel %vm1972, %v1944, %v1660
        %v1978 = vsel %vm1972, %v1945, %v1662
        %v1979 = vsel %vm1972, %v1946, %v1664
        %v1980 = vsel %vm1972, %v1947, %v1666
        %v1981 = vsel %vm1972, %v1948, %v1668
        %v1982 = vsel %vm1972, %v1949, %v1670
        %v1983 = vsel %vm1972, %v1950, %v1672
        %v1984 = vsel %vm1972, %v1951, %v1674
        %v1985 = vsel %vm1972, %v1952, %v1676
        %v1986 = vsel %vm1972, %v1953, %v1678
        %v1987 = vsel %vm1972, %v1954, %v1680
        %v1988 = vsel %vm1972, %v1955, %v1682
        %v1989 = vsel %vm1972, %v1956, %v1684
        %v1990 = vsel %vm1972, %v1957, %v1686
        %v1991 = vsel %vm1972, %v1958, %v1688
        %v1992 = vsel %vm1972, %v1959, %v1690
        %v1993 = vsel %vm1972, %v1960, %v1692
        %v1994 = vsel %vm1972, %v1961, %v1694
        %v1995 = vsel %vm1972, %v1962, %v1696
        %v1996 = vsel %vm1972, %v1963, %v1698
        %v1997 = vsel %vm1972, %v1964, %v1700
        %v1998 = vsel %vm1972, %v1965, %v1702
        %v1999 = vsel %vm1972, %v1966, %v1704
        %v2000 = vsel %vm1972, %v1967, %v1706
        %v2001 = vsel %vm1972, %v1968, %v1708
        %v2002 = vsel %vm1972, %v1969, %v1710
        %v2003 = vsel %vm1972, %v1970, %v1712
        %v2004 = vsel %vm1972, %v1971, %v1712
        %v2005 = vld [vmem:[%s3] sm:$0xff]
        %v2006 = vld [vmem:[%s3 + $0x8] sm:$0xff]
        %v2007 = vld [vmem:[%s3 + $0x10] sm:$0xff]
        %v2008 = vld [vmem:[%s3 + $0x18] sm:$0xff]
        %v2009 = vld [vmem:[%s3 + $0x20] sm:$0xf]
        %v2010 = vld [vmem:[%s4] sm:$0x1]
        %v2012 = vlaneseq
        %v2013 = vshrl.u32 %v2012, 7
        %v2014 = vsub.s32 0, %v2013
        %v2015 = vrot.slane %v2010, %v2014
        %vm2017 = vcmask 293888
        %v2019 = vsel %vm2017, %v1973, 0
        %v2022 = vsel %vm2017, %v1974, 0
        %v2025 = vsel %vm2017, %v1975, 0
        %v2028 = vsel %vm2017, %v1976, 0
        %v2031 = vsel %vm2017, %v1977, 0
        %v2034 = vsel %vm2017, %v1978, 0
        %v2037 = vsel %vm2017, %v1979, 0
        %v2040 = vsel %vm2017, %v1980, 0
        %v2043 = vsel %vm2017, %v1981, 0
        %v2046 = vsel %vm2017, %v1982, 0
        %v2049 = vsel %vm2017, %v1983, 0
        %v2052 = vsel %vm2017, %v1984, 0
        %v2055 = vsel %vm2017, %v1985, 0
        %v2058 = vsel %vm2017, %v1986, 0
        %v2061 = vsel %vm2017, %v1987, 0
        %v2064 = vsel %vm2017, %v1988, 0
        %v2067 = vsel %vm2017, %v1989, 0
        %v2070 = vsel %vm2017, %v1990, 0
        %v2073 = vsel %vm2017, %v1991, 0
        %v2076 = vsel %vm2017, %v1992, 0
        %v2079 = vsel %vm2017, %v1993, 0
        %v2082 = vsel %vm2017, %v1994, 0
        %v2085 = vsel %vm2017, %v1995, 0
        %v2088 = vsel %vm2017, %v1996, 0
        %v2091 = vsel %vm2017, %v1997, 0
        %v2094 = vsel %vm2017, %v1998, 0
        %v2097 = vsel %vm2017, %v1999, 0
        %v2100 = vsel %vm2017, %v2000, 0
        %v2103 = vsel %vm2017, %v2001, 0
        %v2106 = vsel %vm2017, %v2002, 0
        %v2109 = vsel %vm2017, %v2003, 0
        %v2112 = vsel %vm2017, %v2004, 0
        %v2115 = vsel %vm468, %v2009, 0
        %2117 = vmatprep.subr.mxu0 0.0
        %2118 = vmatpush1.msra.mxu0 0.0
        %2119 = vmatprep.subr.mxu0 0.0
        %2120 = vmatpush1.msra.mxu0 0.0
        %2121 = vmatprep.subr.mxu0 0.0
        %2122 = vmatpush1.msra.mxu0 0.0
        %2123 = vmatprep.subr.mxu0 0.0
        %2124 = vmatpush1.msra.mxu0 0.0
        %2125 = vmatprep.subr.mxu0 0.0
        %2126 = vmatpush1.msra.mxu0 0.0
        %2127 = vmatprep.subr.mxu0 0.0
        %2128 = vmatpush1.msra.mxu0 0.0
        %2129 = vmatprep.subr.mxu0 0.0
        %2130 = vmatpush1.msra.mxu0 0.0
        %2131 = vmatprep.subr.mxu0 0.0
        %2132 = vmatpush1.msra.mxu0 0.0
        %2133 = vmatprep.subr.mxu0 0.0
        %2134 = vmatpush1.msra.mxu0 0.0
        %2135 = vmatprep.subr.mxu0 0.0
        %2136 = vmatpush1.msra.mxu0 0.0
        %2137 = vmatprep.subr.mxu0 0.0
        %2138 = vmatpush1.msra.mxu0 0.0
        %2139 = vmatprep.subr.mxu0 0.0
        %2140 = vmatpush1.msra.mxu0 %v2115
        %2141 = vmatprep.subr.mxu0 0.0
        %2142 = vmatpush1.msra.mxu0 %v2008
        %2143 = vmatprep.subr.mxu0 0.0
        %2144 = vmatpush1.msra.mxu0 %v2007
        %2145 = vmatprep.subr.mxu0 0.0
        %2146 = vmatpush1.msra.mxu0 %v2006
        %2147 = vmatprep.subr.mxu0 0.0
        %2148 = vmatpush1.msra.mxu0 %v2005
        %2149 = vmatprep.subr.mxu0 0.0
        %2150 = vmatpush2.msra.mxu0 0.0
        %2151 = vmatprep.subr.mxu0 0.0
        %2152 = vmatpush2.msra.mxu0 0.0
        %2153 = vmatprep.subr.mxu0 0.0
        %2154 = vmatpush2.msra.mxu0 0.0
        %2155 = vmatprep.subr.mxu0 0.0
        %2156 = vmatpush2.msra.mxu0 0.0
        %2157 = vmatprep.subr.mxu0 0.0
        %2158 = vmatpush2.msra.mxu0 0.0
        %2159 = vmatprep.subr.mxu0 0.0
        %2160 = vmatpush2.msra.mxu0 0.0
        %2161 = vmatprep.subr.mxu0 0.0
        %2162 = vmatpush2.msra.mxu0 0.0
        %2163 = vmatprep.subr.mxu0 0.0
        %2164 = vmatpush2.msra.mxu0 0.0
        %2165 = vmatprep.subr.mxu0 0.0
        %2166 = vmatpush2.msra.mxu0 0.0
        %2167 = vmatprep.subr.mxu0 0.0
        %2168 = vmatpush2.msra.mxu0 0.0
        %2169 = vmatprep.subr.mxu0 0.0
        %2170 = vmatpush2.msra.mxu0 0.0
        %2171 = vmatprep.subr.mxu0 0.0
        %2172 = vmatpush2.msra.mxu0 0.0
        %2173 = vmatprep.subr.mxu0 0.0
        %2174 = vmatpush2.msra.mxu0 0.0
        %2175 = vmatprep.subr.mxu0 0.0
        %2176 = vmatpush2.msra.mxu0 0.0
        %2177 = vmatprep.subr.mxu0 0.0
        %2178 = vmatpush2.msra.mxu0 0.0
        %2179 = vmatprep.subr.mxu0 0.0
        %2180 = vmatpush2.msra.mxu0 0.0
        %2181 = vmatprep.mubr.f32.mxu0 0.0
        %2182 = vmatmul.mubr.f32.gmra.mxu0 %v2019
        %v2183 = vpop.f32.mrf.mxu0
        %v2184 = vadd.f32 %v2015, %v2183
        %v2185 = vpop.f32.mrf.mxu0
        %2186 = vmatprep.mubr.f32.mxu0 0.0
        %2187 = vmatmul.mubr.f32.gmra.mxu0 %v2022
        %v2188 = vpop.f32.mrf.mxu0
        %v2189 = vadd.f32 %v2015, %v2188
        %v2190 = vpop.f32.mrf.mxu0
        %2191 = vmatprep.mubr.f32.mxu0 0.0
        %2192 = vmatmul.mubr.f32.gmra.mxu0 %v2025
        %v2193 = vpop.f32.mrf.mxu0
        %v2194 = vadd.f32 %v2015, %v2193
        %v2195 = vpop.f32.mrf.mxu0
        %2196 = vmatprep.mubr.f32.mxu0 0.0
        %2197 = vmatmul.mubr.f32.gmra.mxu0 %v2028
        %v2198 = vpop.f32.mrf.mxu0
        %v2199 = vadd.f32 %v2015, %v2198
        %v2200 = vpop.f32.mrf.mxu0
        %2201 = vmatprep.mubr.f32.mxu0 0.0
        %2202 = vmatmul.mubr.f32.gmra.mxu0 %v2031
        %v2203 = vpop.f32.mrf.mxu0
        %v2204 = vadd.f32 %v2015, %v2203
        %v2205 = vpop.f32.mrf.mxu0
        %2206 = vmatprep.mubr.f32.mxu0 0.0
        %2207 = vmatmul.mubr.f32.gmra.mxu0 %v2034
        %v2208 = vpop.f32.mrf.mxu0
        %v2209 = vadd.f32 %v2015, %v2208
        %v2210 = vpop.f32.mrf.mxu0
        %2211 = vmatprep.mubr.f32.mxu0 0.0
        %2212 = vmatmul.mubr.f32.gmra.mxu0 %v2037
        %v2213 = vpop.f32.mrf.mxu0
        %v2214 = vadd.f32 %v2015, %v2213
        %v2215 = vpop.f32.mrf.mxu0
        %2216 = vmatprep.mubr.f32.mxu0 0.0
        %2217 = vmatmul.mubr.f32.gmra.mxu0 %v2040
        %v2218 = vpop.f32.mrf.mxu0
        %v2219 = vadd.f32 %v2015, %v2218
        %v2220 = vpop.f32.mrf.mxu0
        %2221 = vmatprep.mubr.f32.mxu0 0.0
        %2222 = vmatmul.mubr.f32.gmra.mxu0 %v2043
        %v2223 = vpop.f32.mrf.mxu0
        %v2224 = vadd.f32 %v2015, %v2223
        %v2225 = vpop.f32.mrf.mxu0
        %2226 = vmatprep.mubr.f32.mxu0 0.0
        %2227 = vmatmul.mubr.f32.gmra.mxu0 %v2046
        %v2228 = vpop.f32.mrf.mxu0
        %v2229 = vadd.f32 %v2015, %v2228
        %v2230 = vpop.f32.mrf.mxu0
        %2231 = vmatprep.mubr.f32.mxu0 0.0
        %2232 = vmatmul.mubr.f32.gmra.mxu0 %v2049
        %v2233 = vpop.f32.mrf.mxu0
        %v2234 = vadd.f32 %v2015, %v2233
        %v2235 = vpop.f32.mrf.mxu0
        %2236 = vmatprep.mubr.f32.mxu0 0.0
        %2237 = vmatmul.mubr.f32.gmra.mxu0 %v2052
        %v2238 = vpop.f32.mrf.mxu0
        %v2239 = vadd.f32 %v2015, %v2238
        %v2240 = vpop.f32.mrf.mxu0
        %2241 = vmatprep.mubr.f32.mxu0 0.0
        %2242 = vmatmul.mubr.f32.gmra.mxu0 %v2055
        %v2243 = vpop.f32.mrf.mxu0
        %v2244 = vadd.f32 %v2015, %v2243
        %v2245 = vpop.f32.mrf.mxu0
        %2246 = vmatprep.mubr.f32.mxu0 0.0
        %2247 = vmatmul.mubr.f32.gmra.mxu0 %v2058
        %v2248 = vpop.f32.mrf.mxu0
        %v2249 = vadd.f32 %v2015, %v2248
        %v2250 = vpop.f32.mrf.mxu0
        %2251 = vmatprep.mubr.f32.mxu0 0.0
        %2252 = vmatmul.mubr.f32.gmra.mxu0 %v2061
        %v2253 = vpop.f32.mrf.mxu0
        %v2254 = vadd.f32 %v2015, %v2253
        %v2255 = vpop.f32.mrf.mxu0
        %2256 = vmatprep.mubr.f32.mxu0 0.0
        %2257 = vmatmul.mubr.f32.gmra.mxu0 %v2064
        %v2258 = vpop.f32.mrf.mxu0
        %v2259 = vadd.f32 %v2015, %v2258
        %v2260 = vpop.f32.mrf.mxu0
        %2261 = vmatprep.mubr.f32.mxu0 0.0
        %2262 = vmatmul.mubr.f32.gmra.mxu0 %v2067
        %v2263 = vpop.f32.mrf.mxu0
        %v2264 = vadd.f32 %v2015, %v2263
        %v2265 = vpop.f32.mrf.mxu0
        %2266 = vmatprep.mubr.f32.mxu0 0.0
        %2267 = vmatmul.mubr.f32.gmra.mxu0 %v2070
        %v2268 = vpop.f32.mrf.mxu0
        %v2269 = vadd.f32 %v2015, %v2268
        %v2270 = vpop.f32.mrf.mxu0
        %2271 = vmatprep.mubr.f32.mxu0 0.0
        %2272 = vmatmul.mubr.f32.gmra.mxu0 %v2073
        %v2273 = vpop.f32.mrf.mxu0
        %v2274 = vadd.f32 %v2015, %v2273
        %v2275 = vpop.f32.mrf.mxu0
        %2276 = vmatprep.mubr.f32.mxu0 0.0
        %2277 = vmatmul.mubr.f32.gmra.mxu0 %v2076
        %v2278 = vpop.f32.mrf.mxu0
        %v2279 = vadd.f32 %v2015, %v2278
        %v2280 = vpop.f32.mrf.mxu0
        %2281 = vmatprep.mubr.f32.mxu0 0.0
        %2282 = vmatmul.mubr.f32.gmra.mxu0 %v2079
        %v2283 = vpop.f32.mrf.mxu0
        %v2284 = vadd.f32 %v2015, %v2283
        %v2285 = vpop.f32.mrf.mxu0
        %2286 = vmatprep.mubr.f32.mxu0 0.0
        %2287 = vmatmul.mubr.f32.gmra.mxu0 %v2082
        %v2288 = vpop.f32.mrf.mxu0
        %v2289 = vadd.f32 %v2015, %v2288
        %v2290 = vpop.f32.mrf.mxu0
        %2291 = vmatprep.mubr.f32.mxu0 0.0
        %2292 = vmatmul.mubr.f32.gmra.mxu0 %v2085
        %v2293 = vpop.f32.mrf.mxu0
        %v2294 = vadd.f32 %v2015, %v2293
        %v2295 = vpop.f32.mrf.mxu0
        %2296 = vmatprep.mubr.f32.mxu0 0.0
        %2297 = vmatmul.mubr.f32.gmra.mxu0 %v2088
        %v2298 = vpop.f32.mrf.mxu0
        %v2299 = vadd.f32 %v2015, %v2298
        %v2300 = vpop.f32.mrf.mxu0
        %2301 = vmatprep.mubr.f32.mxu0 0.0
        %2302 = vmatmul.mubr.f32.gmra.mxu0 %v2091
        %v2303 = vpop.f32.mrf.mxu0
        %v2304 = vadd.f32 %v2015, %v2303
        %v2305 = vpop.f32.mrf.mxu0
        %2306 = vmatprep.mubr.f32.mxu0 0.0
        %2307 = vmatmul.mubr.f32.gmra.mxu0 %v2094
        %v2308 = vpop.f32.mrf.mxu0
        %v2309 = vadd.f32 %v2015, %v2308
        %v2310 = vpop.f32.mrf.mxu0
        %2311 = vmatprep.mubr.f32.mxu0 0.0
        %2312 = vmatmul.mubr.f32.gmra.mxu0 %v2097
        %v2313 = vpop.f32.mrf.mxu0
        %v2314 = vadd.f32 %v2015, %v2313
        %v2315 = vpop.f32.mrf.mxu0
        %2316 = vmatprep.mubr.f32.mxu0 0.0
        %2317 = vmatmul.mubr.f32.gmra.mxu0 %v2100
        %v2318 = vpop.f32.mrf.mxu0
        %v2319 = vadd.f32 %v2015, %v2318
        %v2320 = vpop.f32.mrf.mxu0
        %2321 = vmatprep.mubr.f32.mxu0 0.0
        %2322 = vmatmul.mubr.f32.gmra.mxu0 %v2103
        %v2323 = vpop.f32.mrf.mxu0
        %v2324 = vadd.f32 %v2015, %v2323
        %v2325 = vpop.f32.mrf.mxu0
        %2326 = vmatprep.mubr.f32.mxu0 0.0
        %2327 = vmatmul.mubr.f32.gmra.mxu0 %v2106
        %v2328 = vpop.f32.mrf.mxu0
        %v2329 = vadd.f32 %v2015, %v2328
        %v2330 = vpop.f32.mrf.mxu0
        %2331 = vmatprep.mubr.f32.mxu0 0.0
        %2332 = vmatmul.mubr.f32.gmra.mxu0 %v2109
        %v2333 = vpop.f32.mrf.mxu0
        %v2334 = vadd.f32 %v2015, %v2333
        %v2335 = vpop.f32.mrf.mxu0
        %2336 = vmatprep.mubr.f32.mxu0 0.0
        %2337 = vmatmul.mubr.f32.gmra.mxu0 %v2112
        %v2338 = vpop.f32.mrf.mxu0
        %v2339 = vadd.f32 %v2015, %v2338
        %v2340 = vpop.f32.mrf.mxu0
        %2341 = vdwg.mxu0
        %v2342 = vmax.f32 %v2184, 0.0
        %v2343 = vmax.f32 %v2189, 0.0
        %v2344 = vmax.f32 %v2194, 0.0
        %v2345 = vmax.f32 %v2199, 0.0
        %v2346 = vmax.f32 %v2204, 0.0
        %v2347 = vmax.f32 %v2209, 0.0
        %v2348 = vmax.f32 %v2214, 0.0
        %v2349 = vmax.f32 %v2219, 0.0
        %v2350 = vmax.f32 %v2224, 0.0
        %v2351 = vmax.f32 %v2229, 0.0
        %v2352 = vmax.f32 %v2234, 0.0
        %v2353 = vmax.f32 %v2239, 0.0
        %v2354 = vmax.f32 %v2244, 0.0
        %v2355 = vmax.f32 %v2249, 0.0
        %v2356 = vmax.f32 %v2254, 0.0
        %v2357 = vmax.f32 %v2259, 0.0
        %v2358 = vmax.f32 %v2264, 0.0
        %v2359 = vmax.f32 %v2269, 0.0
        %v2360 = vmax.f32 %v2274, 0.0
        %v2361 = vmax.f32 %v2279, 0.0
        %v2362 = vmax.f32 %v2284, 0.0
        %v2363 = vmax.f32 %v2289, 0.0
        %v2364 = vmax.f32 %v2294, 0.0
        %v2365 = vmax.f32 %v2299, 0.0
        %v2366 = vmax.f32 %v2304, 0.0
        %v2367 = vmax.f32 %v2309, 0.0
        %v2368 = vmax.f32 %v2314, 0.0
        %v2369 = vmax.f32 %v2319, 0.0
        %v2370 = vmax.f32 %v2324, 0.0
        %v2371 = vmax.f32 %v2329, 0.0
        %v2372 = vmax.f32 %v2334, 0.0
        %v2373 = vmax.f32 %v2339, 0.0
        %2374 = vrot.lane.b32.xlu0 %v697, 116
        %v2375 = vpop.permute.xlu0 %2374
        %2376 = vrot.lane.b32.xlu0 %v698, 116
        %v2377 = vpop.permute.xlu0 %2376
        %2378 = vrot.lane.b32.xlu0 %v699, 116
        %v2379 = vpop.permute.xlu0 %2378
        %2380 = vrot.lane.b32.xlu0 %v700, 116
        %v2381 = vpop.permute.xlu0 %2380
        %2382 = vrot.lane.b32.xlu0 %v701, 116
        %v2383 = vpop.permute.xlu0 %2382
        %2384 = vrot.lane.b32.xlu0 %v702, 116
        %v2385 = vpop.permute.xlu0 %2384
        %2386 = vrot.lane.b32.xlu0 %v703, 116
        %v2387 = vpop.permute.xlu0 %2386
        %2388 = vrot.lane.b32.xlu0 %v704, 116
        %v2389 = vpop.permute.xlu0 %2388
        %2390 = vrot.lane.b32.xlu0 %v705, 116
        %v2391 = vpop.permute.xlu0 %2390
        %2392 = vrot.lane.b32.xlu0 %v706, 116
        %v2393 = vpop.permute.xlu0 %2392
        %2394 = vrot.lane.b32.xlu0 %v707, 116
        %v2395 = vpop.permute.xlu0 %2394
        %2396 = vrot.lane.b32.xlu0 %v708, 116
        %v2397 = vpop.permute.xlu0 %2396
        %2398 = vrot.lane.b32.xlu0 %v709, 116
        %v2399 = vpop.permute.xlu0 %2398
        %2400 = vrot.lane.b32.xlu0 %v710, 116
        %v2401 = vpop.permute.xlu0 %2400
        %2402 = vrot.lane.b32.xlu0 %v711, 116
        %v2403 = vpop.permute.xlu0 %2402
        %2404 = vrot.lane.b32.xlu0 %v712, 116
        %v2405 = vpop.permute.xlu0 %2404
        %2406 = vrot.lane.b32.xlu0 %v713, 116
        %v2407 = vpop.permute.xlu0 %2406
        %2408 = vrot.lane.b32.xlu0 %v714, 116
        %v2409 = vpop.permute.xlu0 %2408
        %2410 = vrot.lane.b32.xlu0 %v715, 116
        %v2411 = vpop.permute.xlu0 %2410
        %2412 = vrot.lane.b32.xlu0 %v716, 116
        %v2413 = vpop.permute.xlu0 %2412
        %2414 = vrot.lane.b32.xlu0 %v717, 116
        %v2415 = vpop.permute.xlu0 %2414
        %2416 = vrot.lane.b32.xlu0 %v718, 116
        %v2417 = vpop.permute.xlu0 %2416
        %2418 = vrot.lane.b32.xlu0 %v719, 116
        %v2419 = vpop.permute.xlu0 %2418
        %2420 = vrot.lane.b32.xlu0 %v720, 116
        %v2421 = vpop.permute.xlu0 %2420
        %2422 = vrot.lane.b32.xlu0 %v721, 116
        %v2423 = vpop.permute.xlu0 %2422
        %2424 = vrot.lane.b32.xlu0 %v722, 116
        %v2425 = vpop.permute.xlu0 %2424
        %2426 = vrot.lane.b32.xlu0 %v723, 116
        %v2427 = vpop.permute.xlu0 %2426
        %2428 = vrot.lane.b32.xlu0 %v724, 116
        %v2429 = vpop.permute.xlu0 %2428
        %2430 = vrot.lane.b32.xlu0 %v725, 116
        %v2431 = vpop.permute.xlu0 %2430
        %2432 = vrot.lane.b32.xlu0 %v726, 116
        %v2433 = vpop.permute.xlu0 %2432
        %2434 = vrot.lane.b32.xlu0 %v727, 116
        %v2435 = vpop.permute.xlu0 %2434
        %2436 = vrot.lane.b32.xlu0 %v728, 116
        %v2437 = vpop.permute.xlu0 %2436
        %vm2438 = vcmask 1041408
        %v2439 = vrot.slane 0.0, 6
        %v2440 = vsel %vm2438, %v2439, %v2439
        %v2441 = vrot.slane %v2375, 6
        %v2442 = vsel %vm2438, %v2439, %v2441
        %v2443 = vrot.slane %v2377, 6
        %v2444 = vsel %vm2438, %v2441, %v2443
        %v2445 = vrot.slane %v2379, 6
        %v2446 = vsel %vm2438, %v2439, %v2445
        %v2447 = vrot.slane %v2381, 6
        %v2448 = vsel %vm2438, %v2445, %v2447
        %v2449 = vrot.slane %v2383, 6
        %v2450 = vsel %vm2438, %v2439, %v2449
        %v2451 = vrot.slane %v2385, 6
        %v2452 = vsel %vm2438, %v2449, %v2451
        %v2453 = vrot.slane %v2387, 6
        %v2454 = vsel %vm2438, %v2439, %v2453
        %v2455 = vrot.slane %v2389, 6
        %v2456 = vsel %vm2438, %v2453, %v2455
        %v2457 = vrot.slane %v2391, 6
        %v2458 = vsel %vm2438, %v2439, %v2457
        %v2459 = vrot.slane %v2393, 6
        %v2460 = vsel %vm2438, %v2457, %v2459
        %v2461 = vrot.slane %v2395, 6
        %v2462 = vsel %vm2438, %v2439, %v2461
        %v2463 = vrot.slane %v2397, 6
        %v2464 = vsel %vm2438, %v2461, %v2463
        %v2465 = vrot.slane %v2399, 6
        %v2466 = vsel %vm2438, %v2439, %v2465
        %v2467 = vrot.slane %v2401, 6
        %v2468 = vsel %vm2438, %v2465, %v2467
        %v2469 = vrot.slane %v2403, 6
        %v2470 = vsel %vm2438, %v2439, %v2469
        %v2471 = vrot.slane %v2405, 6
        %v2472 = vsel %vm2438, %v2469, %v2471
        %v2473 = vrot.slane %v2407, 6
        %v2474 = vsel %vm2438, %v2439, %v2473
        %v2475 = vrot.slane %v2409, 6
        %v2476 = vsel %vm2438, %v2473, %v2475
        %v2477 = vrot.slane %v2411, 6
        %v2478 = vsel %vm2438, %v2439, %v2477
        %v2479 = vrot.slane %v2413, 6
        %v2480 = vsel %vm2438, %v2477, %v2479
        %v2481 = vrot.slane %v2415, 6
        %v2482 = vsel %vm2438, %v2439, %v2481
        %v2483 = vrot.slane %v2417, 6
        %v2484 = vsel %vm2438, %v2481, %v2483
        %v2485 = vrot.slane %v2419, 6
        %v2486 = vsel %vm2438, %v2439, %v2485
        %v2487 = vrot.slane %v2421, 6
        %v2488 = vsel %vm2438, %v2485, %v2487
        %v2489 = vrot.slane %v2423, 6
        %v2490 = vsel %vm2438, %v2439, %v2489
        %v2491 = vrot.slane %v2425, 6
        %v2492 = vsel %vm2438, %v2489, %v2491
        %v2493 = vrot.slane %v2427, 6
        %v2494 = vsel %vm2438, %v2439, %v2493
        %v2495 = vrot.slane %v2429, 6
        %v2496 = vsel %vm2438, %v2493, %v2495
        %v2526 = vrot.slane %v2375, 7
        %v2527 = vsel %vm826, %v827, %v2526
        %v2528 = vrot.slane %v2377, 7
        %v2529 = vsel %vm826, %v2526, %v2528
        %v2530 = vrot.slane %v2379, 7
        %v2531 = vsel %vm826, %v827, %v2530
        %v2532 = vrot.slane %v2381, 7
        %v2533 = vsel %vm826, %v2530, %v2532
        %v2534 = vrot.slane %v2383, 7
        %v2535 = vsel %vm826, %v827, %v2534
        %v2536 = vrot.slane %v2385, 7
        %v2537 = vsel %vm826, %v2534, %v2536
        %v2538 = vrot.slane %v2387, 7
        %v2539 = vsel %vm826, %v827, %v2538
        %v2540 = vrot.slane %v2389, 7
        %v2541 = vsel %vm826, %v2538, %v2540
        %v2542 = vrot.slane %v2391, 7
        %v2543 = vsel %vm826, %v827, %v2542
        %v2544 = vrot.slane %v2393, 7
        %v2545 = vsel %vm826, %v2542, %v2544
        %v2546 = vrot.slane %v2395, 7
        %v2547 = vsel %vm826, %v827, %v2546
        %v2548 = vrot.slane %v2397, 7
        %v2549 = vsel %vm826, %v2546, %v2548
        %v2550 = vrot.slane %v2399, 7
        %v2551 = vsel %vm826, %v827, %v2550
        %v2552 = vrot.slane %v2401, 7
        %v2553 = vsel %vm826, %v2550, %v2552
        %v2554 = vrot.slane %v2403, 7
        %v2555 = vsel %vm826, %v827, %v2554
        %v2556 = vrot.slane %v2405, 7
        %v2557 = vsel %vm826, %v2554, %v2556
        %v2558 = vrot.slane %v2407, 7
        %v2559 = vsel %vm826, %v827, %v2558
        %v2560 = vrot.slane %v2409, 7
        %v2561 = vsel %vm826, %v2558, %v2560
        %v2562 = vrot.slane %v2411, 7
        %v2563 = vsel %vm826, %v827, %v2562
        %v2564 = vrot.slane %v2413, 7
        %v2565 = vsel %vm826, %v2562, %v2564
        %v2566 = vrot.slane %v2415, 7
        %v2567 = vsel %vm826, %v827, %v2566
        %v2568 = vrot.slane %v2417, 7
        %v2569 = vsel %vm826, %v2566, %v2568
        %v2570 = vrot.slane %v2419, 7
        %v2571 = vsel %vm826, %v827, %v2570
        %v2572 = vrot.slane %v2421, 7
        %v2573 = vsel %vm826, %v2570, %v2572
        %v2574 = vrot.slane %v2423, 7
        %v2575 = vsel %vm826, %v827, %v2574
        %v2576 = vrot.slane %v2425, 7
        %v2577 = vsel %vm826, %v2574, %v2576
        %v2578 = vrot.slane %v2427, 7
        %v2579 = vsel %vm826, %v827, %v2578
        %v2580 = vrot.slane %v2429, 7
        %v2581 = vsel %vm826, %v2578, %v2580
        %v2582 = vrot.slane %v2375, 1
        %v2583 = vrot.slane %v2377, 1
        %v2584 = vsel %vm920, %v2582, %v2583
        %v2585 = vsel %vm920, %v2583, %v921
        %v2586 = vrot.slane %v2379, 1
        %v2587 = vrot.slane %v2381, 1
        %v2588 = vsel %vm920, %v2586, %v2587
        %v2589 = vsel %vm920, %v2587, %v921
        %v2590 = vrot.slane %v2383, 1
        %v2591 = vrot.slane %v2385, 1
        %v2592 = vsel %vm920, %v2590, %v2591
        %v2593 = vsel %vm920, %v2591, %v921
        %v2594 = vrot.slane %v2387, 1
        %v2595 = vrot.slane %v2389, 1
        %v2596 = vsel %vm920, %v2594, %v2595
        %v2597 = vsel %vm920, %v2595, %v921
        %v2598 = vrot.slane %v2391, 1
        %v2599 = vrot.slane %v2393, 1
        %v2600 = vsel %vm920, %v2598, %v2599
        %v2601 = vsel %vm920, %v2599, %v921
        %v2602 = vrot.slane %v2395, 1
        %v2603 = vrot.slane %v2397, 1
        %v2604 = vsel %vm920, %v2602, %v2603
        %v2605 = vsel %vm920, %v2603, %v921
        %v2606 = vrot.slane %v2399, 1
        %v2607 = vrot.slane %v2401, 1
        %v2608 = vsel %vm920, %v2606, %v2607
        %v2609 = vsel %vm920, %v2607, %v921
        %v2610 = vrot.slane %v2403, 1
        %v2611 = vrot.slane %v2405, 1
        %v2612 = vsel %vm920, %v2610, %v2611
        %v2613 = vsel %vm920, %v2611, %v921
        %v2614 = vrot.slane %v2407, 1
        %v2615 = vrot.slane %v2409, 1
        %v2616 = vsel %vm920, %v2614, %v2615
        %v2617 = vsel %vm920, %v2615, %v921
        %v2618 = vrot.slane %v2411, 1
        %v2619 = vrot.slane %v2413, 1
        %v2620 = vsel %vm920, %v2618, %v2619
        %v2621 = vsel %vm920, %v2619, %v921
        %v2622 = vrot.slane %v2415, 1
        %v2623 = vrot.slane %v2417, 1
        %v2624 = vsel %vm920, %v2622, %v2623
        %v2625 = vsel %vm920, %v2623, %v921
        %v2626 = vrot.slane %v2419, 1
        %v2627 = vrot.slane %v2421, 1
        %v2628 = vsel %vm920, %v2626, %v2627
        %v2629 = vsel %vm920, %v2627, %v921
        %v2630 = vrot.slane %v2423, 1
        %v2631 = vrot.slane %v2425, 1
        %v2632 = vsel %vm920, %v2630, %v2631
        %v2633 = vsel %vm920, %v2631, %v921
        %v2634 = vrot.slane %v2427, 1
        %v2635 = vrot.slane %v2429, 1
        %v2636 = vsel %vm920, %v2634, %v2635
        %v2637 = vsel %vm920, %v2635, %v921
        %vm2638 = vcmask 1045504
        %v2639 = vrot.slane 0.0, 2
        %v2640 = vsel %vm2638, %v2639, %v2639
        %v2641 = vrot.slane %v2375, 2
        %v2642 = vrot.slane %v2377, 2
        %v2643 = vsel %vm2638, %v2641, %v2642
        %v2644 = vsel %vm2638, %v2642, %v2639
        %v2645 = vrot.slane %v2379, 2
        %v2646 = vrot.slane %v2381, 2
        %v2647 = vsel %vm2638, %v2645, %v2646
        %v2648 = vsel %vm2638, %v2646, %v2639
        %v2649 = vrot.slane %v2383, 2
        %v2650 = vrot.slane %v2385, 2
        %v2651 = vsel %vm2638, %v2649, %v2650
        %v2652 = vsel %vm2638, %v2650, %v2639
        %v2653 = vrot.slane %v2387, 2
        %v2654 = vrot.slane %v2389, 2
        %v2655 = vsel %vm2638, %v2653, %v2654
        %v2656 = vsel %vm2638, %v2654, %v2639
        %v2657 = vrot.slane %v2391, 2
        %v2658 = vrot.slane %v2393, 2
        %v2659 = vsel %vm2638, %v2657, %v2658
        %v2660 = vsel %vm2638, %v2658, %v2639
        %v2661 = vrot.slane %v2395, 2
        %v2662 = vrot.slane %v2397, 2
        %v2663 = vsel %vm2638, %v2661, %v2662
        %v2664 = vsel %vm2638, %v2662, %v2639
        %v2665 = vrot.slane %v2399, 2
        %v2666 = vrot.slane %v2401, 2
        %v2667 = vsel %vm2638, %v2665, %v2666
        %v2668 = vsel %vm2638, %v2666, %v2639
        %v2669 = vrot.slane %v2403, 2
        %v2670 = vrot.slane %v2405, 2
        %v2671 = vsel %vm2638, %v2669, %v2670
        %v2672 = vsel %vm2638, %v2670, %v2639
        %v2673 = vrot.slane %v2407, 2
        %v2674 = vrot.slane %v2409, 2
        %v2675 = vsel %vm2638, %v2673, %v2674
        %v2676 = vsel %vm2638, %v2674, %v2639
        %v2677 = vrot.slane %v2411, 2
        %v2678 = vrot.slane %v2413, 2
        %v2679 = vsel %vm2638, %v2677, %v2678
        %v2680 = vsel %vm2638, %v2678, %v2639
        %v2681 = vrot.slane %v2415, 2
        %v2682 = vrot.slane %v2417, 2
        %v2683 = vsel %vm2638, %v2681, %v2682
        %v2684 = vsel %vm2638, %v2682, %v2639
        %v2685 = vrot.slane %v2419, 2
        %v2686 = vrot.slane %v2421, 2
        %v2687 = vsel %vm2638, %v2685, %v2686
        %v2688 = vsel %vm2638, %v2686, %v2639
        %v2689 = vrot.slane %v2423, 2
        %v2690 = vrot.slane %v2425, 2
        %v2691 = vsel %vm2638, %v2689, %v2690
        %v2692 = vsel %vm2638, %v2690, %v2639
        %v2693 = vrot.slane %v2427, 2
        %v2694 = vrot.slane %v2429, 2
        %v2695 = vsel %vm2638, %v2693, %v2694
        %v2696 = vsel %vm2638, %v2694, %v2639
        %v2697 = vrot.slane %v2431, 6
        %v2698 = vsel %vm2438, %v2439, %v2697
        %v2699 = vrot.slane %v2433, 6
        %v2700 = vsel %vm2438, %v2697, %v2699
        %v2701 = vrot.slane %v2431, 7
        %v2702 = vsel %vm826, %v827, %v2701
        %v2703 = vrot.slane %v2433, 7
        %v2704 = vsel %vm826, %v2701, %v2703
        %v2705 = vrot.slane %v2431, 1
        %v2706 = vrot.slane %v2433, 1
        %v2707 = vsel %vm920, %v2705, %v2706
        %v2708 = vsel %vm920, %v2706, %v921
        %v2709 = vrot.slane %v2431, 2
        %v2710 = vrot.slane %v2433, 2
        %v2711 = vsel %vm2638, %v2709, %v2710
        %v2712 = vsel %vm2638, %v2710, %v2639
        %v2713 = vrot.slane %v2435, 6
        %v2714 = vsel %vm2438, %v2439, %v2713
        %v2715 = vrot.slane %v2437, 6
        %v2716 = vsel %vm2438, %v2713, %v2715
        %v2717 = vrot.slane %v2435, 7
        %v2718 = vsel %vm826, %v827, %v2717
        %v2719 = vrot.slane %v2437, 7
        %v2720 = vsel %vm826, %v2717, %v2719
        %v2721 = vrot.slane %v2435, 1
        %v2722 = vrot.slane %v2437, 1
        %v2723 = vsel %vm920, %v2721, %v2722
        %v2724 = vsel %vm920, %v2722, %v921
        %v2725 = vrot.slane %v2435, 2
        %v2726 = vrot.slane %v2437, 2
        %v2727 = vsel %vm2638, %v2725, %v2726
        %v2728 = vsel %vm2638, %v2726, %v2639
        %2759 = vrot.lane.b32.xlu0 %v828, 4
        %v2760 = vpop.permute.xlu0 %2759
        %2761 = vrot.lane.b32.xlu0 %v2527, 4
        %v2762 = vpop.permute.xlu0 %2761
        %2763 = vrot.lane.b32.xlu0 %v2529, 4
        %v2764 = vpop.permute.xlu0 %2763
        %2765 = vrot.lane.b32.xlu0 %v2531, 4
        %v2766 = vpop.permute.xlu0 %2765
        %2767 = vrot.lane.b32.xlu0 %v2533, 4
        %v2768 = vpop.permute.xlu0 %2767
        %2769 = vrot.lane.b32.xlu0 %v2535, 4
        %v2770 = vpop.permute.xlu0 %2769
        %2771 = vrot.lane.b32.xlu0 %v2537, 4
        %v2772 = vpop.permute.xlu0 %2771
        %2773 = vrot.lane.b32.xlu0 %v2539, 4
        %v2774 = vpop.permute.xlu0 %2773
        %2775 = vrot.lane.b32.xlu0 %v2541, 4
        %v2776 = vpop.permute.xlu0 %2775
        %2777 = vrot.lane.b32.xlu0 %v2543, 4
        %v2778 = vpop.permute.xlu0 %2777
        %2779 = vrot.lane.b32.xlu0 %v2545, 4
        %v2780 = vpop.permute.xlu0 %2779
        %2781 = vrot.lane.b32.xlu0 %v2547, 4
        %v2782 = vpop.permute.xlu0 %2781
        %2783 = vrot.lane.b32.xlu0 %v2549, 4
        %v2784 = vpop.permute.xlu0 %2783
        %2785 = vrot.lane.b32.xlu0 %v2551, 4
        %v2786 = vpop.permute.xlu0 %2785
        %2787 = vrot.lane.b32.xlu0 %v2553, 4
        %v2788 = vpop.permute.xlu0 %2787
        %2789 = vrot.lane.b32.xlu0 %v2555, 4
        %v2790 = vpop.permute.xlu0 %2789
        %2791 = vrot.lane.b32.xlu0 %v2557, 4
        %v2792 = vpop.permute.xlu0 %2791
        %2793 = vrot.lane.b32.xlu0 %v2559, 4
        %v2794 = vpop.permute.xlu0 %2793
        %2795 = vrot.lane.b32.xlu0 %v2561, 4
        %v2796 = vpop.permute.xlu0 %2795
        %2797 = vrot.lane.b32.xlu0 %v2563, 4
        %v2798 = vpop.permute.xlu0 %2797
        %2799 = vrot.lane.b32.xlu0 %v2565, 4
        %v2800 = vpop.permute.xlu0 %2799
        %2801 = vrot.lane.b32.xlu0 %v2567, 4
        %v2802 = vpop.permute.xlu0 %2801
        %2803 = vrot.lane.b32.xlu0 %v2569, 4
        %v2804 = vpop.permute.xlu0 %2803
        %2805 = vrot.lane.b32.xlu0 %v2571, 4
        %v2806 = vpop.permute.xlu0 %2805
        %2807 = vrot.lane.b32.xlu0 %v2573, 4
        %v2808 = vpop.permute.xlu0 %2807
        %2809 = vrot.lane.b32.xlu0 %v2575, 4
        %v2810 = vpop.permute.xlu0 %2809
        %2811 = vrot.lane.b32.xlu0 %v2577, 4
        %v2812 = vpop.permute.xlu0 %2811
        %2813 = vrot.lane.b32.xlu0 %v2579, 4
        %v2814 = vpop.permute.xlu0 %2813
        %2815 = vrot.lane.b32.xlu0 %v2581, 4
        %v2816 = vpop.permute.xlu0 %2815
        %2846 = vrot.lane.b32.xlu0 0.0, 8
        %v2847 = vpop.permute.xlu0 %2846
        %2848 = vrot.lane.b32.xlu0 %v2375, 8
        %v2849 = vpop.permute.xlu0 %2848
        %2850 = vrot.lane.b32.xlu0 %v2377, 8
        %v2851 = vpop.permute.xlu0 %2850
        %2852 = vrot.lane.b32.xlu0 %v2379, 8
        %v2853 = vpop.permute.xlu0 %2852
        %2854 = vrot.lane.b32.xlu0 %v2381, 8
        %v2855 = vpop.permute.xlu0 %2854
        %2856 = vrot.lane.b32.xlu0 %v2383, 8
        %v2857 = vpop.permute.xlu0 %2856
        %2858 = vrot.lane.b32.xlu0 %v2385, 8
        %v2859 = vpop.permute.xlu0 %2858
        %2860 = vrot.lane.b32.xlu0 %v2387, 8
        %v2861 = vpop.permute.xlu0 %2860
        %2862 = vrot.lane.b32.xlu0 %v2389, 8
        %v2863 = vpop.permute.xlu0 %2862
        %2864 = vrot.lane.b32.xlu0 %v2391, 8
        %v2865 = vpop.permute.xlu0 %2864
        %2866 = vrot.lane.b32.xlu0 %v2393, 8
        %v2867 = vpop.permute.xlu0 %2866
        %2868 = vrot.lane.b32.xlu0 %v2395, 8
        %v2869 = vpop.permute.xlu0 %2868
        %2870 = vrot.lane.b32.xlu0 %v2397, 8
        %v2871 = vpop.permute.xlu0 %2870
        %2872 = vrot.lane.b32.xlu0 %v2399, 8
        %v2873 = vpop.permute.xlu0 %2872
        %2874 = vrot.lane.b32.xlu0 %v2401, 8
        %v2875 = vpop.permute.xlu0 %2874
        %2876 = vrot.lane.b32.xlu0 %v2403, 8
        %v2877 = vpop.permute.xlu0 %2876
        %2878 = vrot.lane.b32.xlu0 %v2405, 8
        %v2879 = vpop.permute.xlu0 %2878
        %2880 = vrot.lane.b32.xlu0 %v2407, 8
        %v2881 = vpop.permute.xlu0 %2880
        %2882 = vrot.lane.b32.xlu0 %v2409, 8
        %v2883 = vpop.permute.xlu0 %2882
        %2884 = vrot.lane.b32.xlu0 %v2411, 8
        %v2885 = vpop.permute.xlu0 %2884
        %2886 = vrot.lane.b32.xlu0 %v2413, 8
        %v2887 = vpop.permute.xlu0 %2886
        %2888 = vrot.lane.b32.xlu0 %v2415, 8
        %v2889 = vpop.permute.xlu0 %2888
        %2890 = vrot.lane.b32.xlu0 %v2417, 8
        %v2891 = vpop.permute.xlu0 %2890
        %2892 = vrot.lane.b32.xlu0 %v2419, 8
        %v2893 = vpop.permute.xlu0 %2892
        %2894 = vrot.lane.b32.xlu0 %v2421, 8
        %v2895 = vpop.permute.xlu0 %2894
        %2896 = vrot.lane.b32.xlu0 %v2423, 8
        %v2897 = vpop.permute.xlu0 %2896
        %2898 = vrot.lane.b32.xlu0 %v2425, 8
        %v2899 = vpop.permute.xlu0 %2898
        %2900 = vrot.lane.b32.xlu0 %v2427, 8
        %v2901 = vpop.permute.xlu0 %2900
        %2902 = vrot.lane.b32.xlu0 %v2429, 8
        %v2903 = vpop.permute.xlu0 %2902
        %2933 = vrot.lane.b32.xlu0 %v922, 12
        %v2934 = vpop.permute.xlu0 %2933
        %2935 = vrot.lane.b32.xlu0 %v2584, 12
        %v2936 = vpop.permute.xlu0 %2935
        %2937 = vrot.lane.b32.xlu0 %v2585, 12
        %v2938 = vpop.permute.xlu0 %2937
        %2939 = vrot.lane.b32.xlu0 %v2588, 12
        %v2940 = vpop.permute.xlu0 %2939
        %2941 = vrot.lane.b32.xlu0 %v2589, 12
        %v2942 = vpop.permute.xlu0 %2941
        %2943 = vrot.lane.b32.xlu0 %v2592, 12
        %v2944 = vpop.permute.xlu0 %2943
        %2945 = vrot.lane.b32.xlu0 %v2593, 12
        %v2946 = vpop.permute.xlu0 %2945
        %2947 = vrot.lane.b32.xlu0 %v2596, 12
        %v2948 = vpop.permute.xlu0 %2947
        %2949 = vrot.lane.b32.xlu0 %v2597, 12
        %v2950 = vpop.permute.xlu0 %2949
        %2951 = vrot.lane.b32.xlu0 %v2600, 12
        %v2952 = vpop.permute.xlu0 %2951
        %2953 = vrot.lane.b32.xlu0 %v2601, 12
        %v2954 = vpop.permute.xlu0 %2953
        %2955 = vrot.lane.b32.xlu0 %v2604, 12
        %v2956 = vpop.permute.xlu0 %2955
        %2957 = vrot.lane.b32.xlu0 %v2605, 12
        %v2958 = vpop.permute.xlu0 %2957
        %2959 = vrot.lane.b32.xlu0 %v2608, 12
        %v2960 = vpop.permute.xlu0 %2959
        %2961 = vrot.lane.b32.xlu0 %v2609, 12
        %v2962 = vpop.permute.xlu0 %2961
        %2963 = vrot.lane.b32.xlu0 %v2612, 12
        %v2964 = vpop.permute.xlu0 %2963
        %2965 = vrot.lane.b32.xlu0 %v2613, 12
        %v2966 = vpop.permute.xlu0 %2965
        %2967 = vrot.lane.b32.xlu0 %v2616, 12
        %v2968 = vpop.permute.xlu0 %2967
        %2969 = vrot.lane.b32.xlu0 %v2617, 12
        %v2970 = vpop.permute.xlu0 %2969
        %2971 = vrot.lane.b32.xlu0 %v2620, 12
        %v2972 = vpop.permute.xlu0 %2971
        %2973 = vrot.lane.b32.xlu0 %v2621, 12
        %v2974 = vpop.permute.xlu0 %2973
        %2975 = vrot.lane.b32.xlu0 %v2624, 12
        %v2976 = vpop.permute.xlu0 %2975
        %2977 = vrot.lane.b32.xlu0 %v2625, 12
        %v2978 = vpop.permute.xlu0 %2977
        %2979 = vrot.lane.b32.xlu0 %v2628, 12
        %v2980 = vpop.permute.xlu0 %2979
        %2981 = vrot.lane.b32.xlu0 %v2629, 12
        %v2982 = vpop.permute.xlu0 %2981
        %2983 = vrot.lane.b32.xlu0 %v2632, 12
        %v2984 = vpop.permute.xlu0 %2983
        %2985 = vrot.lane.b32.xlu0 %v2633, 12
        %v2986 = vpop.permute.xlu0 %2985
        %2987 = vrot.lane.b32.xlu0 %v2636, 12
        %v2988 = vpop.permute.xlu0 %2987
        %2989 = vrot.lane.b32.xlu0 %v2637, 12
        %v2990 = vpop.permute.xlu0 %2989
        %3020 = vrot.lane.b32.xlu0 %v2640, 16
        %v3021 = vpop.permute.xlu0 %3020
        %3022 = vrot.lane.b32.xlu0 %v2643, 16
        %v3023 = vpop.permute.xlu0 %3022
        %3024 = vrot.lane.b32.xlu0 %v2644, 16
        %v3025 = vpop.permute.xlu0 %3024
        %3026 = vrot.lane.b32.xlu0 %v2647, 16
        %v3027 = vpop.permute.xlu0 %3026
        %3028 = vrot.lane.b32.xlu0 %v2648, 16
        %v3029 = vpop.permute.xlu0 %3028
        %3030 = vrot.lane.b32.xlu0 %v2651, 16
        %v3031 = vpop.permute.xlu0 %3030
        %3032 = vrot.lane.b32.xlu0 %v2652, 16
        %v3033 = vpop.permute.xlu0 %3032
        %3034 = vrot.lane.b32.xlu0 %v2655, 16
        %v3035 = vpop.permute.xlu0 %3034
        %3036 = vrot.lane.b32.xlu0 %v2656, 16
        %v3037 = vpop.permute.xlu0 %3036
        %3038 = vrot.lane.b32.xlu0 %v2659, 16
        %v3039 = vpop.permute.xlu0 %3038
        %3040 = vrot.lane.b32.xlu0 %v2660, 16
        %v3041 = vpop.permute.xlu0 %3040
        %3042 = vrot.lane.b32.xlu0 %v2663, 16
        %v3043 = vpop.permute.xlu0 %3042
        %3044 = vrot.lane.b32.xlu0 %v2664, 16
        %v3045 = vpop.permute.xlu0 %3044
        %3046 = vrot.lane.b32.xlu0 %v2667, 16
        %v3047 = vpop.permute.xlu0 %3046
        %3048 = vrot.lane.b32.xlu0 %v2668, 16
        %v3049 = vpop.permute.xlu0 %3048
        %3050 = vrot.lane.b32.xlu0 %v2671, 16
        %v3051 = vpop.permute.xlu0 %3050
        %3052 = vrot.lane.b32.xlu0 %v2672, 16
        %v3053 = vpop.permute.xlu0 %3052
        %3054 = vrot.lane.b32.xlu0 %v2675, 16
        %v3055 = vpop.permute.xlu0 %3054
        %3056 = vrot.lane.b32.xlu0 %v2676, 16
        %v3057 = vpop.permute.xlu0 %3056
        %3058 = vrot.lane.b32.xlu0 %v2679, 16
        %v3059 = vpop.permute.xlu0 %3058
        %3060 = vrot.lane.b32.xlu0 %v2680, 16
        %v3061 = vpop.permute.xlu0 %3060
        %3062 = vrot.lane.b32.xlu0 %v2683, 16
        %v3063 = vpop.permute.xlu0 %3062
        %3064 = vrot.lane.b32.xlu0 %v2684, 16
        %v3065 = vpop.permute.xlu0 %3064
        %3066 = vrot.lane.b32.xlu0 %v2687, 16
        %v3067 = vpop.permute.xlu0 %3066
        %3068 = vrot.lane.b32.xlu0 %v2688, 16
        %v3069 = vpop.permute.xlu0 %3068
        %3070 = vrot.lane.b32.xlu0 %v2691, 16
        %v3071 = vpop.permute.xlu0 %3070
        %3072 = vrot.lane.b32.xlu0 %v2692, 16
        %v3073 = vpop.permute.xlu0 %3072
        %3074 = vrot.lane.b32.xlu0 %v2695, 16
        %v3075 = vpop.permute.xlu0 %3074
        %3076 = vrot.lane.b32.xlu0 %v2696, 16
        %v3077 = vpop.permute.xlu0 %3076
        %3107 = vrot.lane.b32.xlu0 %v2440, 20
        %v3108 = vpop.permute.xlu0 %3107
        %3109 = vrot.lane.b32.xlu0 %v2442, 20
        %v3110 = vpop.permute.xlu0 %3109
        %3111 = vrot.lane.b32.xlu0 %v2444, 20
        %v3112 = vpop.permute.xlu0 %3111
        %3113 = vrot.lane.b32.xlu0 %v2446, 20
        %v3114 = vpop.permute.xlu0 %3113
        %3115 = vrot.lane.b32.xlu0 %v2448, 20
        %v3116 = vpop.permute.xlu0 %3115
        %3117 = vrot.lane.b32.xlu0 %v2450, 20
        %v3118 = vpop.permute.xlu0 %3117
        %3119 = vrot.lane.b32.xlu0 %v2452, 20
        %v3120 = vpop.permute.xlu0 %3119
        %3121 = vrot.lane.b32.xlu0 %v2454, 20
        %v3122 = vpop.permute.xlu0 %3121
        %3123 = vrot.lane.b32.xlu0 %v2456, 20
        %v3124 = vpop.permute.xlu0 %3123
        %3125 = vrot.lane.b32.xlu0 %v2458, 20
        %v3126 = vpop.permute.xlu0 %3125
        %3127 = vrot.lane.b32.xlu0 %v2460, 20
        %v3128 = vpop.permute.xlu0 %3127
        %3129 = vrot.lane.b32.xlu0 %v2462, 20
        %v3130 = vpop.permute.xlu0 %3129
        %3131 = vrot.lane.b32.xlu0 %v2464, 20
        %v3132 = vpop.permute.xlu0 %3131
        %3133 = vrot.lane.b32.xlu0 %v2466, 20
        %v3134 = vpop.permute.xlu0 %3133
        %3135 = vrot.lane.b32.xlu0 %v2468, 20
        %v3136 = vpop.permute.xlu0 %3135
        %3137 = vrot.lane.b32.xlu0 %v2470, 20
        %v3138 = vpop.permute.xlu0 %3137
        %3139 = vrot.lane.b32.xlu0 %v2472, 20
        %v3140 = vpop.permute.xlu0 %3139
        %3141 = vrot.lane.b32.xlu0 %v2474, 20
        %v3142 = vpop.permute.xlu0 %3141
        %3143 = vrot.lane.b32.xlu0 %v2476, 20
        %v3144 = vpop.permute.xlu0 %3143
        %3145 = vrot.lane.b32.xlu0 %v2478, 20
        %v3146 = vpop.permute.xlu0 %3145
        %3147 = vrot.lane.b32.xlu0 %v2480, 20
        %v3148 = vpop.permute.xlu0 %3147
        %3149 = vrot.lane.b32.xlu0 %v2482, 20
        %v3150 = vpop.permute.xlu0 %3149
        %3151 = vrot.lane.b32.xlu0 %v2484, 20
        %v3152 = vpop.permute.xlu0 %3151
        %3153 = vrot.lane.b32.xlu0 %v2486, 20
        %v3154 = vpop.permute.xlu0 %3153
        %3155 = vrot.lane.b32.xlu0 %v2488, 20
        %v3156 = vpop.permute.xlu0 %3155
        %3157 = vrot.lane.b32.xlu0 %v2490, 20
        %v3158 = vpop.permute.xlu0 %3157
        %3159 = vrot.lane.b32.xlu0 %v2492, 20
        %v3160 = vpop.permute.xlu0 %3159
        %3161 = vrot.lane.b32.xlu0 %v2494, 20
        %v3162 = vpop.permute.xlu0 %3161
        %3163 = vrot.lane.b32.xlu0 %v2496, 20
        %v3164 = vpop.permute.xlu0 %3163
        %3165 = vrot.lane.b32.xlu0 %v2698, 20
        %v3166 = vpop.permute.xlu0 %3165
        %3167 = vrot.lane.b32.xlu0 %v2700, 20
        %v3168 = vpop.permute.xlu0 %3167
        %3200 = vrot.lane.b32.xlu0 %v2527, 24
        %v3201 = vpop.permute.xlu0 %3200
        %3202 = vrot.lane.b32.xlu0 %v2529, 24
        %v3203 = vpop.permute.xlu0 %3202
        %3204 = vrot.lane.b32.xlu0 %v2531, 24
        %v3205 = vpop.permute.xlu0 %3204
        %3206 = vrot.lane.b32.xlu0 %v2533, 24
        %v3207 = vpop.permute.xlu0 %3206
        %3208 = vrot.lane.b32.xlu0 %v2535, 24
        %v3209 = vpop.permute.xlu0 %3208
        %3210 = vrot.lane.b32.xlu0 %v2537, 24
        %v3211 = vpop.permute.xlu0 %3210
        %3212 = vrot.lane.b32.xlu0 %v2539, 24
        %v3213 = vpop.permute.xlu0 %3212
        %3214 = vrot.lane.b32.xlu0 %v2541, 24
        %v3215 = vpop.permute.xlu0 %3214
        %3216 = vrot.lane.b32.xlu0 %v2543, 24
        %v3217 = vpop.permute.xlu0 %3216
        %3218 = vrot.lane.b32.xlu0 %v2545, 24
        %v3219 = vpop.permute.xlu0 %3218
        %3220 = vrot.lane.b32.xlu0 %v2547, 24
        %v3221 = vpop.permute.xlu0 %3220
        %3222 = vrot.lane.b32.xlu0 %v2549, 24
        %v3223 = vpop.permute.xlu0 %3222
        %3224 = vrot.lane.b32.xlu0 %v2551, 24
        %v3225 = vpop.permute.xlu0 %3224
        %3226 = vrot.lane.b32.xlu0 %v2553, 24
        %v3227 = vpop.permute.xlu0 %3226
        %3228 = vrot.lane.b32.xlu0 %v2555, 24
        %v3229 = vpop.permute.xlu0 %3228
        %3230 = vrot.lane.b32.xlu0 %v2557, 24
        %v3231 = vpop.permute.xlu0 %3230
        %3232 = vrot.lane.b32.xlu0 %v2559, 24
        %v3233 = vpop.permute.xlu0 %3232
        %3234 = vrot.lane.b32.xlu0 %v2561, 24
        %v3235 = vpop.permute.xlu0 %3234
        %3236 = vrot.lane.b32.xlu0 %v2563, 24
        %v3237 = vpop.permute.xlu0 %3236
        %3238 = vrot.lane.b32.xlu0 %v2565, 24
        %v3239 = vpop.permute.xlu0 %3238
        %3240 = vrot.lane.b32.xlu0 %v2567, 24
        %v3241 = vpop.permute.xlu0 %3240
        %3242 = vrot.lane.b32.xlu0 %v2569, 24
        %v3243 = vpop.permute.xlu0 %3242
        %3244 = vrot.lane.b32.xlu0 %v2571, 24
        %v3245 = vpop.permute.xlu0 %3244
        %3246 = vrot.lane.b32.xlu0 %v2573, 24
        %v3247 = vpop.permute.xlu0 %3246
        %3248 = vrot.lane.b32.xlu0 %v2575, 24
        %v3249 = vpop.permute.xlu0 %3248
        %3250 = vrot.lane.b32.xlu0 %v2577, 24
        %v3251 = vpop.permute.xlu0 %3250
        %3252 = vrot.lane.b32.xlu0 %v2579, 24
        %v3253 = vpop.permute.xlu0 %3252
        %3254 = vrot.lane.b32.xlu0 %v2581, 24
        %v3255 = vpop.permute.xlu0 %3254
        %3256 = vrot.lane.b32.xlu0 %v2702, 24
        %v3257 = vpop.permute.xlu0 %3256
        %3258 = vrot.lane.b32.xlu0 %v2704, 24
        %v3259 = vpop.permute.xlu0 %3258
        %3290 = vrot.lane.b32.xlu0 %v2375, 28
        %v3291 = vpop.permute.xlu0 %3290
        %3292 = vrot.lane.b32.xlu0 %v2377, 28
        %v3293 = vpop.permute.xlu0 %3292
        %3294 = vrot.lane.b32.xlu0 %v2379, 28
        %v3295 = vpop.permute.xlu0 %3294
        %3296 = vrot.lane.b32.xlu0 %v2381, 28
        %v3297 = vpop.permute.xlu0 %3296
        %3298 = vrot.lane.b32.xlu0 %v2383, 28
        %v3299 = vpop.permute.xlu0 %3298
        %3300 = vrot.lane.b32.xlu0 %v2385, 28
        %v3301 = vpop.permute.xlu0 %3300
        %3302 = vrot.lane.b32.xlu0 %v2387, 28
        %v3303 = vpop.permute.xlu0 %3302
        %3304 = vrot.lane.b32.xlu0 %v2389, 28
        %v3305 = vpop.permute.xlu0 %3304
        %3306 = vrot.lane.b32.xlu0 %v2391, 28
        %v3307 = vpop.permute.xlu0 %3306
        %3308 = vrot.lane.b32.xlu0 %v2393, 28
        %v3309 = vpop.permute.xlu0 %3308
        %3310 = vrot.lane.b32.xlu0 %v2395, 28
        %v3311 = vpop.permute.xlu0 %3310
        %3312 = vrot.lane.b32.xlu0 %v2397, 28
        %v3313 = vpop.permute.xlu0 %3312
        %3314 = vrot.lane.b32.xlu0 %v2399, 28
        %v3315 = vpop.permute.xlu0 %3314
        %3316 = vrot.lane.b32.xlu0 %v2401, 28
        %v3317 = vpop.permute.xlu0 %3316
        %3318 = vrot.lane.b32.xlu0 %v2403, 28
        %v3319 = vpop.permute.xlu0 %3318
        %3320 = vrot.lane.b32.xlu0 %v2405, 28
        %v3321 = vpop.permute.xlu0 %3320
        %3322 = vrot.lane.b32.xlu0 %v2407, 28
        %v3323 = vpop.permute.xlu0 %3322
        %3324 = vrot.lane.b32.xlu0 %v2409, 28
        %v3325 = vpop.permute.xlu0 %3324
        %3326 = vrot.lane.b32.xlu0 %v2411, 28
        %v3327 = vpop.permute.xlu0 %3326
        %3328 = vrot.lane.b32.xlu0 %v2413, 28
        %v3329 = vpop.permute.xlu0 %3328
        %3330 = vrot.lane.b32.xlu0 %v2415, 28
        %v3331 = vpop.permute.xlu0 %3330
        %3332 = vrot.lane.b32.xlu0 %v2417, 28
        %v3333 = vpop.permute.xlu0 %3332
        %3334 = vrot.lane.b32.xlu0 %v2419, 28
        %v3335 = vpop.permute.xlu0 %3334
        %3336 = vrot.lane.b32.xlu0 %v2421, 28
        %v3337 = vpop.permute.xlu0 %3336
        %3338 = vrot.lane.b32.xlu0 %v2423, 28
        %v3339 = vpop.permute.xlu0 %3338
        %3340 = vrot.lane.b32.xlu0 %v2425, 28
        %v3341 = vpop.permute.xlu0 %3340
        %3342 = vrot.lane.b32.xlu0 %v2427, 28
        %v3343 = vpop.permute.xlu0 %3342
        %3344 = vrot.lane.b32.xlu0 %v2429, 28
        %v3345 = vpop.permute.xlu0 %3344
        %3346 = vrot.lane.b32.xlu0 %v2431, 28
        %v3347 = vpop.permute.xlu0 %3346
        %3348 = vrot.lane.b32.xlu0 %v2433, 28
        %v3349 = vpop.permute.xlu0 %3348
        %3380 = vrot.lane.b32.xlu0 %v2584, 32
        %v3381 = vpop.permute.xlu0 %3380
        %3382 = vrot.lane.b32.xlu0 %v2585, 32
        %v3383 = vpop.permute.xlu0 %3382
        %3384 = vrot.lane.b32.xlu0 %v2588, 32
        %v3385 = vpop.permute.xlu0 %3384
        %3386 = vrot.lane.b32.xlu0 %v2589, 32
        %v3387 = vpop.permute.xlu0 %3386
        %3388 = vrot.lane.b32.xlu0 %v2592, 32
        %v3389 = vpop.permute.xlu0 %3388
        %3390 = vrot.lane.b32.xlu0 %v2593, 32
        %v3391 = vpop.permute.xlu0 %3390
        %3392 = vrot.lane.b32.xlu0 %v2596, 32
        %v3393 = vpop.permute.xlu0 %3392
        %3394 = vrot.lane.b32.xlu0 %v2597, 32
        %v3395 = vpop.permute.xlu0 %3394
        %3396 = vrot.lane.b32.xlu0 %v2600, 32
        %v3397 = vpop.permute.xlu0 %3396
        %3398 = vrot.lane.b32.xlu0 %v2601, 32
        %v3399 = vpop.permute.xlu0 %3398
        %3400 = vrot.lane.b32.xlu0 %v2604, 32
        %v3401 = vpop.permute.xlu0 %3400
        %3402 = vrot.lane.b32.xlu0 %v2605, 32
        %v3403 = vpop.permute.xlu0 %3402
        %3404 = vrot.lane.b32.xlu0 %v2608, 32
        %v3405 = vpop.permute.xlu0 %3404
        %3406 = vrot.lane.b32.xlu0 %v2609, 32
        %v3407 = vpop.permute.xlu0 %3406
        %3408 = vrot.lane.b32.xlu0 %v2612, 32
        %v3409 = vpop.permute.xlu0 %3408
        %3410 = vrot.lane.b32.xlu0 %v2613, 32
        %v3411 = vpop.permute.xlu0 %3410
        %3412 = vrot.lane.b32.xlu0 %v2616, 32
        %v3413 = vpop.permute.xlu0 %3412
        %3414 = vrot.lane.b32.xlu0 %v2617, 32
        %v3415 = vpop.permute.xlu0 %3414
        %3416 = vrot.lane.b32.xlu0 %v2620, 32
        %v3417 = vpop.permute.xlu0 %3416
        %3418 = vrot.lane.b32.xlu0 %v2621, 32
        %v3419 = vpop.permute.xlu0 %3418
        %3420 = vrot.lane.b32.xlu0 %v2624, 32
        %v3421 = vpop.permute.xlu0 %3420
        %3422 = vrot.lane.b32.xlu0 %v2625, 32
        %v3423 = vpop.permute.xlu0 %3422
        %3424 = vrot.lane.b32.xlu0 %v2628, 32
        %v3425 = vpop.permute.xlu0 %3424
        %3426 = vrot.lane.b32.xlu0 %v2629, 32
        %v3427 = vpop.permute.xlu0 %3426
        %3428 = vrot.lane.b32.xlu0 %v2632, 32
        %v3429 = vpop.permute.xlu0 %3428
        %3430 = vrot.lane.b32.xlu0 %v2633, 32
        %v3431 = vpop.permute.xlu0 %3430
        %3432 = vrot.lane.b32.xlu0 %v2636, 32
        %v3433 = vpop.permute.xlu0 %3432
        %3434 = vrot.lane.b32.xlu0 %v2637, 32
        %v3435 = vpop.permute.xlu0 %3434
        %3436 = vrot.lane.b32.xlu0 %v2707, 32
        %v3437 = vpop.permute.xlu0 %3436
        %3438 = vrot.lane.b32.xlu0 %v2708, 32
        %v3439 = vpop.permute.xlu0 %3438
        %3470 = vrot.lane.b32.xlu0 %v2640, 36
        %v3471 = vpop.permute.xlu0 %3470
        %3472 = vrot.lane.b32.xlu0 %v2643, 36
        %v3473 = vpop.permute.xlu0 %3472
        %3474 = vrot.lane.b32.xlu0 %v2644, 36
        %v3475 = vpop.permute.xlu0 %3474
        %3476 = vrot.lane.b32.xlu0 %v2647, 36
        %v3477 = vpop.permute.xlu0 %3476
        %3478 = vrot.lane.b32.xlu0 %v2648, 36
        %v3479 = vpop.permute.xlu0 %3478
        %3480 = vrot.lane.b32.xlu0 %v2651, 36
        %v3481 = vpop.permute.xlu0 %3480
        %3482 = vrot.lane.b32.xlu0 %v2652, 36
        %v3483 = vpop.permute.xlu0 %3482
        %3484 = vrot.lane.b32.xlu0 %v2655, 36
        %v3485 = vpop.permute.xlu0 %3484
        %3486 = vrot.lane.b32.xlu0 %v2656, 36
        %v3487 = vpop.permute.xlu0 %3486
        %3488 = vrot.lane.b32.xlu0 %v2659, 36
        %v3489 = vpop.permute.xlu0 %3488
        %3490 = vrot.lane.b32.xlu0 %v2660, 36
        %v3491 = vpop.permute.xlu0 %3490
        %3492 = vrot.lane.b32.xlu0 %v2663, 36
        %v3493 = vpop.permute.xlu0 %3492
        %3494 = vrot.lane.b32.xlu0 %v2664, 36
        %v3495 = vpop.permute.xlu0 %3494
        %3496 = vrot.lane.b32.xlu0 %v2667, 36
        %v3497 = vpop.permute.xlu0 %3496
        %3498 = vrot.lane.b32.xlu0 %v2668, 36
        %v3499 = vpop.permute.xlu0 %3498
        %3500 = vrot.lane.b32.xlu0 %v2671, 36
        %v3501 = vpop.permute.xlu0 %3500
        %3502 = vrot.lane.b32.xlu0 %v2672, 36
        %v3503 = vpop.permute.xlu0 %3502
        %3504 = vrot.lane.b32.xlu0 %v2675, 36
        %v3505 = vpop.permute.xlu0 %3504
        %3506 = vrot.lane.b32.xlu0 %v2676, 36
        %v3507 = vpop.permute.xlu0 %3506
        %3508 = vrot.lane.b32.xlu0 %v2679, 36
        %v3509 = vpop.permute.xlu0 %3508
        %3510 = vrot.lane.b32.xlu0 %v2680, 36
        %v3511 = vpop.permute.xlu0 %3510
        %3512 = vrot.lane.b32.xlu0 %v2683, 36
        %v3513 = vpop.permute.xlu0 %3512
        %3514 = vrot.lane.b32.xlu0 %v2684, 36
        %v3515 = vpop.permute.xlu0 %3514
        %3516 = vrot.lane.b32.xlu0 %v2687, 36
        %v3517 = vpop.permute.xlu0 %3516
        %3518 = vrot.lane.b32.xlu0 %v2688, 36
        %v3519 = vpop.permute.xlu0 %3518
        %3520 = vrot.lane.b32.xlu0 %v2691, 36
        %v3521 = vpop.permute.xlu0 %3520
        %3522 = vrot.lane.b32.xlu0 %v2692, 36
        %v3523 = vpop.permute.xlu0 %3522
        %3524 = vrot.lane.b32.xlu0 %v2695, 36
        %v3525 = vpop.permute.xlu0 %3524
        %3526 = vrot.lane.b32.xlu0 %v2696, 36
        %v3527 = vpop.permute.xlu0 %3526
        %3528 = vrot.lane.b32.xlu0 %v2711, 36
        %v3529 = vpop.permute.xlu0 %3528
        %3530 = vrot.lane.b32.xlu0 %v2712, 36
        %v3531 = vpop.permute.xlu0 %3530
        %3563 = vrot.lane.b32.xlu0 %v2442, 40
        %v3564 = vpop.permute.xlu0 %3563
        %3565 = vrot.lane.b32.xlu0 %v2444, 40
        %v3566 = vpop.permute.xlu0 %3565
        %3567 = vrot.lane.b32.xlu0 %v2446, 40
        %v3568 = vpop.permute.xlu0 %3567
        %3569 = vrot.lane.b32.xlu0 %v2448, 40
        %v3570 = vpop.permute.xlu0 %3569
        %3571 = vrot.lane.b32.xlu0 %v2450, 40
        %v3572 = vpop.permute.xlu0 %3571
        %3573 = vrot.lane.b32.xlu0 %v2452, 40
        %v3574 = vpop.permute.xlu0 %3573
        %3575 = vrot.lane.b32.xlu0 %v2454, 40
        %v3576 = vpop.permute.xlu0 %3575
        %3577 = vrot.lane.b32.xlu0 %v2456, 40
        %v3578 = vpop.permute.xlu0 %3577
        %3579 = vrot.lane.b32.xlu0 %v2458, 40
        %v3580 = vpop.permute.xlu0 %3579
        %3581 = vrot.lane.b32.xlu0 %v2460, 40
        %v3582 = vpop.permute.xlu0 %3581
        %3583 = vrot.lane.b32.xlu0 %v2462, 40
        %v3584 = vpop.permute.xlu0 %3583
        %3585 = vrot.lane.b32.xlu0 %v2464, 40
        %v3586 = vpop.permute.xlu0 %3585
        %3587 = vrot.lane.b32.xlu0 %v2466, 40
        %v3588 = vpop.permute.xlu0 %3587
        %3589 = vrot.lane.b32.xlu0 %v2468, 40
        %v3590 = vpop.permute.xlu0 %3589
        %3591 = vrot.lane.b32.xlu0 %v2470, 40
        %v3592 = vpop.permute.xlu0 %3591
        %3593 = vrot.lane.b32.xlu0 %v2472, 40
        %v3594 = vpop.permute.xlu0 %3593
        %3595 = vrot.lane.b32.xlu0 %v2474, 40
        %v3596 = vpop.permute.xlu0 %3595
        %3597 = vrot.lane.b32.xlu0 %v2476, 40
        %v3598 = vpop.permute.xlu0 %3597
        %3599 = vrot.lane.b32.xlu0 %v2478, 40
        %v3600 = vpop.permute.xlu0 %3599
        %3601 = vrot.lane.b32.xlu0 %v2480, 40
        %v3602 = vpop.permute.xlu0 %3601
        %3603 = vrot.lane.b32.xlu0 %v2482, 40
        %v3604 = vpop.permute.xlu0 %3603
        %3605 = vrot.lane.b32.xlu0 %v2484, 40
        %v3606 = vpop.permute.xlu0 %3605
        %3607 = vrot.lane.b32.xlu0 %v2486, 40
        %v3608 = vpop.permute.xlu0 %3607
        %3609 = vrot.lane.b32.xlu0 %v2488, 40
        %v3610 = vpop.permute.xlu0 %3609
        %3611 = vrot.lane.b32.xlu0 %v2490, 40
        %v3612 = vpop.permute.xlu0 %3611
        %3613 = vrot.lane.b32.xlu0 %v2492, 40
        %v3614 = vpop.permute.xlu0 %3613
        %3615 = vrot.lane.b32.xlu0 %v2494, 40
        %v3616 = vpop.permute.xlu0 %3615
        %3617 = vrot.lane.b32.xlu0 %v2496, 40
        %v3618 = vpop.permute.xlu0 %3617
        %3619 = vrot.lane.b32.xlu0 %v2698, 40
        %v3620 = vpop.permute.xlu0 %3619
        %3621 = vrot.lane.b32.xlu0 %v2700, 40
        %v3622 = vpop.permute.xlu0 %3621
        %3623 = vrot.lane.b32.xlu0 %v2714, 40
        %v3624 = vpop.permute.xlu0 %3623
        %3625 = vrot.lane.b32.xlu0 %v2716, 40
        %v3626 = vpop.permute.xlu0 %3625
        %3659 = vrot.lane.b32.xlu0 %v2527, 44
        %v3660 = vpop.permute.xlu0 %3659
        %3661 = vrot.lane.b32.xlu0 %v2529, 44
        %v3662 = vpop.permute.xlu0 %3661
        %3663 = vrot.lane.b32.xlu0 %v2531, 44
        %v3664 = vpop.permute.xlu0 %3663
        %3665 = vrot.lane.b32.xlu0 %v2533, 44
        %v3666 = vpop.permute.xlu0 %3665
        %3667 = vrot.lane.b32.xlu0 %v2535, 44
        %v3668 = vpop.permute.xlu0 %3667
        %3669 = vrot.lane.b32.xlu0 %v2537, 44
        %v3670 = vpop.permute.xlu0 %3669
        %3671 = vrot.lane.b32.xlu0 %v2539, 44
        %v3672 = vpop.permute.xlu0 %3671
        %3673 = vrot.lane.b32.xlu0 %v2541, 44
        %v3674 = vpop.permute.xlu0 %3673
        %3675 = vrot.lane.b32.xlu0 %v2543, 44
        %v3676 = vpop.permute.xlu0 %3675
        %3677 = vrot.lane.b32.xlu0 %v2545, 44
        %v3678 = vpop.permute.xlu0 %3677
        %3679 = vrot.lane.b32.xlu0 %v2547, 44
        %v3680 = vpop.permute.xlu0 %3679
        %3681 = vrot.lane.b32.xlu0 %v2549, 44
        %v3682 = vpop.permute.xlu0 %3681
        %3683 = vrot.lane.b32.xlu0 %v2551, 44
        %v3684 = vpop.permute.xlu0 %3683
        %3685 = vrot.lane.b32.xlu0 %v2553, 44
        %v3686 = vpop.permute.xlu0 %3685
        %3687 = vrot.lane.b32.xlu0 %v2555, 44
        %v3688 = vpop.permute.xlu0 %3687
        %3689 = vrot.lane.b32.xlu0 %v2557, 44
        %v3690 = vpop.permute.xlu0 %3689
        %3691 = vrot.lane.b32.xlu0 %v2559, 44
        %v3692 = vpop.permute.xlu0 %3691
        %3693 = vrot.lane.b32.xlu0 %v2561, 44
        %v3694 = vpop.permute.xlu0 %3693
        %3695 = vrot.lane.b32.xlu0 %v2563, 44
        %v3696 = vpop.permute.xlu0 %3695
        %3697 = vrot.lane.b32.xlu0 %v2565, 44
        %v3698 = vpop.permute.xlu0 %3697
        %3699 = vrot.lane.b32.xlu0 %v2567, 44
        %v3700 = vpop.permute.xlu0 %3699
        %3701 = vrot.lane.b32.xlu0 %v2569, 44
        %v3702 = vpop.permute.xlu0 %3701
        %3703 = vrot.lane.b32.xlu0 %v2571, 44
        %v3704 = vpop.permute.xlu0 %3703
        %3705 = vrot.lane.b32.xlu0 %v2573, 44
        %v3706 = vpop.permute.xlu0 %3705
        %3707 = vrot.lane.b32.xlu0 %v2575, 44
        %v3708 = vpop.permute.xlu0 %3707
        %3709 = vrot.lane.b32.xlu0 %v2577, 44
        %v3710 = vpop.permute.xlu0 %3709
        %3711 = vrot.lane.b32.xlu0 %v2579, 44
        %v3712 = vpop.permute.xlu0 %3711
        %3713 = vrot.lane.b32.xlu0 %v2581, 44
        %v3714 = vpop.permute.xlu0 %3713
        %3715 = vrot.lane.b32.xlu0 %v2702, 44
        %v3716 = vpop.permute.xlu0 %3715
        %3717 = vrot.lane.b32.xlu0 %v2704, 44
        %v3718 = vpop.permute.xlu0 %3717
        %3719 = vrot.lane.b32.xlu0 %v2718, 44
        %v3720 = vpop.permute.xlu0 %3719
        %3721 = vrot.lane.b32.xlu0 %v2720, 44
        %v3722 = vpop.permute.xlu0 %3721
        %3755 = vrot.lane.b32.xlu0 %v2375, 48
        %v3756 = vpop.permute.xlu0 %3755
        %3757 = vrot.lane.b32.xlu0 %v2377, 48
        %v3758 = vpop.permute.xlu0 %3757
        %3759 = vrot.lane.b32.xlu0 %v2379, 48
        %v3760 = vpop.permute.xlu0 %3759
        %3761 = vrot.lane.b32.xlu0 %v2381, 48
        %v3762 = vpop.permute.xlu0 %3761
        %3763 = vrot.lane.b32.xlu0 %v2383, 48
        %v3764 = vpop.permute.xlu0 %3763
        %3765 = vrot.lane.b32.xlu0 %v2385, 48
        %v3766 = vpop.permute.xlu0 %3765
        %3767 = vrot.lane.b32.xlu0 %v2387, 48
        %v3768 = vpop.permute.xlu0 %3767
        %3769 = vrot.lane.b32.xlu0 %v2389, 48
        %v3770 = vpop.permute.xlu0 %3769
        %3771 = vrot.lane.b32.xlu0 %v2391, 48
        %v3772 = vpop.permute.xlu0 %3771
        %3773 = vrot.lane.b32.xlu0 %v2393, 48
        %v3774 = vpop.permute.xlu0 %3773
        %3775 = vrot.lane.b32.xlu0 %v2395, 48
        %v3776 = vpop.permute.xlu0 %3775
        %3777 = vrot.lane.b32.xlu0 %v2397, 48
        %v3778 = vpop.permute.xlu0 %3777
        %3779 = vrot.lane.b32.xlu0 %v2399, 48
        %v3780 = vpop.permute.xlu0 %3779
        %3781 = vrot.lane.b32.xlu0 %v2401, 48
        %v3782 = vpop.permute.xlu0 %3781
        %3783 = vrot.lane.b32.xlu0 %v2403, 48
        %v3784 = vpop.permute.xlu0 %3783
        %3785 = vrot.lane.b32.xlu0 %v2405, 48
        %v3786 = vpop.permute.xlu0 %3785
        %3787 = vrot.lane.b32.xlu0 %v2407, 48
        %v3788 = vpop.permute.xlu0 %3787
        %3789 = vrot.lane.b32.xlu0 %v2409, 48
        %v3790 = vpop.permute.xlu0 %3789
        %3791 = vrot.lane.b32.xlu0 %v2411, 48
        %v3792 = vpop.permute.xlu0 %3791
        %3793 = vrot.lane.b32.xlu0 %v2413, 48
        %v3794 = vpop.permute.xlu0 %3793
        %3795 = vrot.lane.b32.xlu0 %v2415, 48
        %v3796 = vpop.permute.xlu0 %3795
        %3797 = vrot.lane.b32.xlu0 %v2417, 48
        %v3798 = vpop.permute.xlu0 %3797
        %3799 = vrot.lane.b32.xlu0 %v2419, 48
        %v3800 = vpop.permute.xlu0 %3799
        %3801 = vrot.lane.b32.xlu0 %v2421, 48
        %v3802 = vpop.permute.xlu0 %3801
        %3803 = vrot.lane.b32.xlu0 %v2423, 48
        %v3804 = vpop.permute.xlu0 %3803
        %3805 = vrot.lane.b32.xlu0 %v2425, 48
        %v3806 = vpop.permute.xlu0 %3805
        %3807 = vrot.lane.b32.xlu0 %v2427, 48
        %v3808 = vpop.permute.xlu0 %3807
        %3809 = vrot.lane.b32.xlu0 %v2429, 48
        %v3810 = vpop.permute.xlu0 %3809
        %3811 = vrot.lane.b32.xlu0 %v2431, 48
        %v3812 = vpop.permute.xlu0 %3811
        %3813 = vrot.lane.b32.xlu0 %v2433, 48
        %v3814 = vpop.permute.xlu0 %3813
        %3815 = vrot.lane.b32.xlu0 %v2435, 48
        %v3816 = vpop.permute.xlu0 %3815
        %3817 = vrot.lane.b32.xlu0 %v2437, 48
        %v3818 = vpop.permute.xlu0 %3817
        %3851 = vrot.lane.b32.xlu0 %v2584, 52
        %v3852 = vpop.permute.xlu0 %3851
        %3853 = vrot.lane.b32.xlu0 %v2585, 52
        %v3854 = vpop.permute.xlu0 %3853
        %3855 = vrot.lane.b32.xlu0 %v2588, 52
        %v3856 = vpop.permute.xlu0 %3855
        %3857 = vrot.lane.b32.xlu0 %v2589, 52
        %v3858 = vpop.permute.xlu0 %3857
        %3859 = vrot.lane.b32.xlu0 %v2592, 52
        %v3860 = vpop.permute.xlu0 %3859
        %3861 = vrot.lane.b32.xlu0 %v2593, 52
        %v3862 = vpop.permute.xlu0 %3861
        %3863 = vrot.lane.b32.xlu0 %v2596, 52
        %v3864 = vpop.permute.xlu0 %3863
        %3865 = vrot.lane.b32.xlu0 %v2597, 52
        %v3866 = vpop.permute.xlu0 %3865
        %3867 = vrot.lane.b32.xlu0 %v2600, 52
        %v3868 = vpop.permute.xlu0 %3867
        %3869 = vrot.lane.b32.xlu0 %v2601, 52
        %v3870 = vpop.permute.xlu0 %3869
        %3871 = vrot.lane.b32.xlu0 %v2604, 52
        %v3872 = vpop.permute.xlu0 %3871
        %3873 = vrot.lane.b32.xlu0 %v2605, 52
        %v3874 = vpop.permute.xlu0 %3873
        %3875 = vrot.lane.b32.xlu0 %v2608, 52
        %v3876 = vpop.permute.xlu0 %3875
        %3877 = vrot.lane.b32.xlu0 %v2609, 52
        %v3878 = vpop.permute.xlu0 %3877
        %3879 = vrot.lane.b32.xlu0 %v2612, 52
        %v3880 = vpop.permute.xlu0 %3879
        %3881 = vrot.lane.b32.xlu0 %v2613, 52
        %v3882 = vpop.permute.xlu0 %3881
        %3883 = vrot.lane.b32.xlu0 %v2616, 52
        %v3884 = vpop.permute.xlu0 %3883
        %3885 = vrot.lane.b32.xlu0 %v2617, 52
        %v3886 = vpop.permute.xlu0 %3885
        %3887 = vrot.lane.b32.xlu0 %v2620, 52
        %v3888 = vpop.permute.xlu0 %3887
        %3889 = vrot.lane.b32.xlu0 %v2621, 52
        %v3890 = vpop.permute.xlu0 %3889
        %3891 = vrot.lane.b32.xlu0 %v2624, 52
        %v3892 = vpop.permute.xlu0 %3891
        %3893 = vrot.lane.b32.xlu0 %v2625, 52
        %v3894 = vpop.permute.xlu0 %3893
        %3895 = vrot.lane.b32.xlu0 %v2628, 52
        %v3896 = vpop.permute.xlu0 %3895
        %3897 = vrot.lane.b32.xlu0 %v2629, 52
        %v3898 = vpop.permute.xlu0 %3897
        %3899 = vrot.lane.b32.xlu0 %v2632, 52
        %v3900 = vpop.permute.xlu0 %3899
        %3901 = vrot.lane.b32.xlu0 %v2633, 52
        %v3902 = vpop.permute.xlu0 %3901
        %3903 = vrot.lane.b32.xlu0 %v2636, 52
        %v3904 = vpop.permute.xlu0 %3903
        %3905 = vrot.lane.b32.xlu0 %v2637, 52
        %v3906 = vpop.permute.xlu0 %3905
        %3907 = vrot.lane.b32.xlu0 %v2707, 52
        %v3908 = vpop.permute.xlu0 %3907
        %3909 = vrot.lane.b32.xlu0 %v2708, 52
        %v3910 = vpop.permute.xlu0 %3909
        %3911 = vrot.lane.b32.xlu0 %v2723, 52
        %v3912 = vpop.permute.xlu0 %3911
        %3913 = vrot.lane.b32.xlu0 %v2724, 52
        %v3914 = vpop.permute.xlu0 %3913
        %3947 = vrot.lane.b32.xlu0 %v2643, 56
        %v3948 = vpop.permute.xlu0 %3947
        %3949 = vrot.lane.b32.xlu0 %v2644, 56
        %v3950 = vpop.permute.xlu0 %3949
        %3951 = vrot.lane.b32.xlu0 %v2647, 56
        %v3952 = vpop.permute.xlu0 %3951
        %3953 = vrot.lane.b32.xlu0 %v2648, 56
        %v3954 = vpop.permute.xlu0 %3953
        %3955 = vrot.lane.b32.xlu0 %v2651, 56
        %v3956 = vpop.permute.xlu0 %3955
        %3957 = vrot.lane.b32.xlu0 %v2652, 56
        %v3958 = vpop.permute.xlu0 %3957
        %3959 = vrot.lane.b32.xlu0 %v2655, 56
        %v3960 = vpop.permute.xlu0 %3959
        %3961 = vrot.lane.b32.xlu0 %v2656, 56
        %v3962 = vpop.permute.xlu0 %3961
        %3963 = vrot.lane.b32.xlu0 %v2659, 56
        %v3964 = vpop.permute.xlu0 %3963
        %3965 = vrot.lane.b32.xlu0 %v2660, 56
        %v3966 = vpop.permute.xlu0 %3965
        %3967 = vrot.lane.b32.xlu0 %v2663, 56
        %v3968 = vpop.permute.xlu0 %3967
        %3969 = vrot.lane.b32.xlu0 %v2664, 56
        %v3970 = vpop.permute.xlu0 %3969
        %3971 = vrot.lane.b32.xlu0 %v2667, 56
        %v3972 = vpop.permute.xlu0 %3971
        %3973 = vrot.lane.b32.xlu0 %v2668, 56
        %v3974 = vpop.permute.xlu0 %3973
        %3975 = vrot.lane.b32.xlu0 %v2671, 56
        %v3976 = vpop.permute.xlu0 %3975
        %3977 = vrot.lane.b32.xlu0 %v2672, 56
        %v3978 = vpop.permute.xlu0 %3977
        %3979 = vrot.lane.b32.xlu0 %v2675, 56
        %v3980 = vpop.permute.xlu0 %3979
        %3981 = vrot.lane.b32.xlu0 %v2676, 56
        %v3982 = vpop.permute.xlu0 %3981
        %3983 = vrot.lane.b32.xlu0 %v2679, 56
        %v3984 = vpop.permute.xlu0 %3983
        %3985 = vrot.lane.b32.xlu0 %v2680, 56
        %v3986 = vpop.permute.xlu0 %3985
        %3987 = vrot.lane.b32.xlu0 %v2683, 56
        %v3988 = vpop.permute.xlu0 %3987
        %3989 = vrot.lane.b32.xlu0 %v2684, 56
        %v3990 = vpop.permute.xlu0 %3989
        %3991 = vrot.lane.b32.xlu0 %v2687, 56
        %v3992 = vpop.permute.xlu0 %3991
        %3993 = vrot.lane.b32.xlu0 %v2688, 56
        %v3994 = vpop.permute.xlu0 %3993
        %3995 = vrot.lane.b32.xlu0 %v2691, 56
        %v3996 = vpop.permute.xlu0 %3995
        %3997 = vrot.lane.b32.xlu0 %v2692, 56
        %v3998 = vpop.permute.xlu0 %3997
        %3999 = vrot.lane.b32.xlu0 %v2695, 56
        %v4000 = vpop.permute.xlu0 %3999
        %4001 = vrot.lane.b32.xlu0 %v2696, 56
        %v4002 = vpop.permute.xlu0 %4001
        %4003 = vrot.lane.b32.xlu0 %v2711, 56
        %v4004 = vpop.permute.xlu0 %4003
        %4005 = vrot.lane.b32.xlu0 %v2712, 56
        %v4006 = vpop.permute.xlu0 %4005
        %4007 = vrot.lane.b32.xlu0 %v2727, 56
        %v4008 = vpop.permute.xlu0 %4007
        %4009 = vrot.lane.b32.xlu0 %v2728, 56
        %v4010 = vpop.permute.xlu0 %4009
        %4043 = vrot.lane.b32.xlu0 %v2446, 60
        %v4044 = vpop.permute.xlu0 %4043
        %4045 = vrot.lane.b32.xlu0 %v2448, 60
        %v4046 = vpop.permute.xlu0 %4045
        %4047 = vrot.lane.b32.xlu0 %v2450, 60
        %v4048 = vpop.permute.xlu0 %4047
        %4049 = vrot.lane.b32.xlu0 %v2452, 60
        %v4050 = vpop.permute.xlu0 %4049
        %4051 = vrot.lane.b32.xlu0 %v2454, 60
        %v4052 = vpop.permute.xlu0 %4051
        %4053 = vrot.lane.b32.xlu0 %v2456, 60
        %v4054 = vpop.permute.xlu0 %4053
        %4055 = vrot.lane.b32.xlu0 %v2458, 60
        %v4056 = vpop.permute.xlu0 %4055
        %4057 = vrot.lane.b32.xlu0 %v2460, 60
        %v4058 = vpop.permute.xlu0 %4057
        %4059 = vrot.lane.b32.xlu0 %v2462, 60
        %v4060 = vpop.permute.xlu0 %4059
        %4061 = vrot.lane.b32.xlu0 %v2464, 60
        %v4062 = vpop.permute.xlu0 %4061
        %4063 = vrot.lane.b32.xlu0 %v2466, 60
        %v4064 = vpop.permute.xlu0 %4063
        %4065 = vrot.lane.b32.xlu0 %v2468, 60
        %v4066 = vpop.permute.xlu0 %4065
        %4067 = vrot.lane.b32.xlu0 %v2470, 60
        %v4068 = vpop.permute.xlu0 %4067
        %4069 = vrot.lane.b32.xlu0 %v2472, 60
        %v4070 = vpop.permute.xlu0 %4069
        %4071 = vrot.lane.b32.xlu0 %v2474, 60
        %v4072 = vpop.permute.xlu0 %4071
        %4073 = vrot.lane.b32.xlu0 %v2476, 60
        %v4074 = vpop.permute.xlu0 %4073
        %4075 = vrot.lane.b32.xlu0 %v2478, 60
        %v4076 = vpop.permute.xlu0 %4075
        %4077 = vrot.lane.b32.xlu0 %v2480, 60
        %v4078 = vpop.permute.xlu0 %4077
        %4079 = vrot.lane.b32.xlu0 %v2482, 60
        %v4080 = vpop.permute.xlu0 %4079
        %4081 = vrot.lane.b32.xlu0 %v2484, 60
        %v4082 = vpop.permute.xlu0 %4081
        %4083 = vrot.lane.b32.xlu0 %v2486, 60
        %v4084 = vpop.permute.xlu0 %4083
        %4085 = vrot.lane.b32.xlu0 %v2488, 60
        %v4086 = vpop.permute.xlu0 %4085
        %4087 = vrot.lane.b32.xlu0 %v2490, 60
        %v4088 = vpop.permute.xlu0 %4087
        %4089 = vrot.lane.b32.xlu0 %v2492, 60
        %v4090 = vpop.permute.xlu0 %4089
        %4091 = vrot.lane.b32.xlu0 %v2494, 60
        %v4092 = vpop.permute.xlu0 %4091
        %4093 = vrot.lane.b32.xlu0 %v2496, 60
        %v4094 = vpop.permute.xlu0 %4093
        %4095 = vrot.lane.b32.xlu0 %v2698, 60
        %v4096 = vpop.permute.xlu0 %4095
        %4097 = vrot.lane.b32.xlu0 %v2700, 60
        %v4098 = vpop.permute.xlu0 %4097
        %4099 = vrot.lane.b32.xlu0 %v2714, 60
        %v4100 = vpop.permute.xlu0 %4099
        %4101 = vrot.lane.b32.xlu0 %v2716, 60
        %v4102 = vpop.permute.xlu0 %4101
        %4103 = vrot.lane.b32.xlu0 %v2440, 60
        %v4104 = vpop.permute.xlu0 %4103
        %v4136 = vsel %vm371, %v2440, %v2760
        %v4137 = vsel %vm371, %v2442, %v2762
        %v4138 = vsel %vm371, %v2444, %v2764
        %v4139 = vsel %vm371, %v2446, %v2766
        %v4140 = vsel %vm371, %v2448, %v2768
        %v4141 = vsel %vm371, %v2450, %v2770
        %v4142 = vsel %vm371, %v2452, %v2772
        %v4143 = vsel %vm371, %v2454, %v2774
        %v4144 = vsel %vm371, %v2456, %v2776
        %v4145 = vsel %vm371, %v2458, %v2778
        %v4146 = vsel %vm371, %v2460, %v2780
        %v4147 = vsel %vm371, %v2462, %v2782
        %v4148 = vsel %vm371, %v2464, %v2784
        %v4149 = vsel %vm371, %v2466, %v2786
        %v4150 = vsel %vm371, %v2468, %v2788
        %v4151 = vsel %vm371, %v2470, %v2790
        %v4152 = vsel %vm371, %v2472, %v2792
        %v4153 = vsel %vm371, %v2474, %v2794
        %v4154 = vsel %vm371, %v2476, %v2796
        %v4155 = vsel %vm371, %v2478, %v2798
        %v4156 = vsel %vm371, %v2480, %v2800
        %v4157 = vsel %vm371, %v2482, %v2802
        %v4158 = vsel %vm371, %v2484, %v2804
        %v4159 = vsel %vm371, %v2486, %v2806
        %v4160 = vsel %vm371, %v2488, %v2808
        %v4161 = vsel %vm371, %v2490, %v2810
        %v4162 = vsel %vm371, %v2492, %v2812
        %v4163 = vsel %vm371, %v2494, %v2814
        %v4164 = vsel %vm371, %v2496, %v2816
        %v4165 = vsel %vm1775, %v4136, %v2847
        %v4166 = vsel %vm1775, %v4137, %v2849
        %v4167 = vsel %vm1775, %v4138, %v2851
        %v4168 = vsel %vm1775, %v4139, %v2853
        %v4169 = vsel %vm1775, %v4140, %v2855
        %v4170 = vsel %vm1775, %v4141, %v2857
        %v4171 = vsel %vm1775, %v4142, %v2859
        %v4172 = vsel %vm1775, %v4143, %v2861
        %v4173 = vsel %vm1775, %v4144, %v2863
        %v4174 = vsel %vm1775, %v4145, %v2865
        %v4175 = vsel %vm1775, %v4146, %v2867
        %v4176 = vsel %vm1775, %v4147, %v2869
        %v4177 = vsel %vm1775, %v4148, %v2871
        %v4178 = vsel %vm1775, %v4149, %v2873
        %v4179 = vsel %vm1775, %v4150, %v2875
        %v4180 = vsel %vm1775, %v4151, %v2877
        %v4181 = vsel %vm1775, %v4152, %v2879
        %v4182 = vsel %vm1775, %v4153, %v2881
        %v4183 = vsel %vm1775, %v4154, %v2883
        %v4184 = vsel %vm1775, %v4155, %v2885
        %v4185 = vsel %vm1775, %v4156, %v2887
        %v4186 = vsel %vm1775, %v4157, %v2889
        %v4187 = vsel %vm1775, %v4158, %v2891
        %v4188 = vsel %vm1775, %v4159, %v2893
        %v4189 = vsel %vm1775, %v4160, %v2895
        %v4190 = vsel %vm1775, %v4161, %v2897
        %v4191 = vsel %vm1775, %v4162, %v2899
        %v4192 = vsel %vm1775, %v4163, %v2901
        %v4193 = vsel %vm1775, %v4164, %v2903
        %v4194 = vsel %vm1807, %v4165, %v2934
        %v4195 = vsel %vm1807, %v4166, %v2936
        %v4196 = vsel %vm1807, %v4167, %v2938
        %v4197 = vsel %vm1807, %v4168, %v2940
        %v4198 = vsel %vm1807, %v4169, %v2942
        %v4199 = vsel %vm1807, %v4170, %v2944
        %v4200 = vsel %vm1807, %v4171, %v2946
        %v4201 = vsel %vm1807, %v4172, %v2948
        %v4202 = vsel %vm1807, %v4173, %v2950
        %v4203 = vsel %vm1807, %v4174, %v2952
        %v4204 = vsel %vm1807, %v4175, %v2954
        %v4205 = vsel %vm1807, %v4176, %v2956
        %v4206 = vsel %vm1807, %v4177, %v2958
        %v4207 = vsel %vm1807, %v4178, %v2960
        %v4208 = vsel %vm1807, %v4179, %v2962
        %v4209 = vsel %vm1807, %v4180, %v2964
        %v4210 = vsel %vm1807, %v4181, %v2966
        %v4211 = vsel %vm1807, %v4182, %v2968
        %v4212 = vsel %vm1807, %v4183, %v2970
        %v4213 = vsel %vm1807, %v4184, %v2972
        %v4214 = vsel %vm1807, %v4185, %v2974
        %v4215 = vsel %vm1807, %v4186, %v2976
        %v4216 = vsel %vm1807, %v4187, %v2978
        %v4217 = vsel %vm1807, %v4188, %v2980
        %v4218 = vsel %vm1807, %v4189, %v2982
        %v4219 = vsel %vm1807, %v4190, %v2984
        %v4220 = vsel %vm1807, %v4191, %v2986
        %v4221 = vsel %vm1807, %v4192, %v2988
        %v4222 = vsel %vm1807, %v4193, %v2990
        %v4223 = vsel %vm1840, %v4194, %v3021
        %v4224 = vsel %vm1840, %v4195, %v3023
        %v4225 = vsel %vm1840, %v4196, %v3025
        %v4226 = vsel %vm1840, %v4197, %v3027
        %v4227 = vsel %vm1840, %v4198, %v3029
        %v4228 = vsel %vm1840, %v4199, %v3031
        %v4229 = vsel %vm1840, %v4200, %v3033
        %v4230 = vsel %vm1840, %v4201, %v3035
        %v4231 = vsel %vm1840, %v4202, %v3037
        %v4232 = vsel %vm1840, %v4203, %v3039
        %v4233 = vsel %vm1840, %v4204, %v3041
        %v4234 = vsel %vm1840, %v4205, %v3043
        %v4235 = vsel %vm1840, %v4206, %v3045
        %v4236 = vsel %vm1840, %v4207, %v3047
        %v4237 = vsel %vm1840, %v4208, %v3049
        %v4238 = vsel %vm1840, %v4209, %v3051
        %v4239 = vsel %vm1840, %v4210, %v3053
        %v4240 = vsel %vm1840, %v4211, %v3055
        %v4241 = vsel %vm1840, %v4212, %v3057
        %v4242 = vsel %vm1840, %v4213, %v3059
        %v4243 = vsel %vm1840, %v4214, %v3061
        %v4244 = vsel %vm1840, %v4215, %v3063
        %v4245 = vsel %vm1840, %v4216, %v3065
        %v4246 = vsel %vm1840, %v4217, %v3067
        %v4247 = vsel %vm1840, %v4218, %v3069
        %v4248 = vsel %vm1840, %v4219, %v3071
        %v4249 = vsel %vm1840, %v4220, %v3073
        %v4250 = vsel %vm1840, %v4221, %v3075
        %v4251 = vsel %vm1840, %v4222, %v3077
        %v4252 = vsel %vm1873, %v4223, %v3108
        %v4253 = vsel %vm1873, %v4223, %v3110
        %v4254 = vsel %vm1873, %v4223, %v3112
        %v4255 = vsel %vm1873, %v4224, %v3114
        %v4256 = vsel %vm1873, %v4225, %v3116
        %v4257 = vsel %vm1873, %v4226, %v3118
        %v4258 = vsel %vm1873, %v4227, %v3120
        %v4259 = vsel %vm1873, %v4228, %v3122
        %v4260 = vsel %vm1873, %v4229, %v3124
        %v4261 = vsel %vm1873, %v4230, %v3126
        %v4262 = vsel %vm1873, %v4231, %v3128
        %v4263 = vsel %vm1873, %v4232, %v3130
        %v4264 = vsel %vm1873, %v4233, %v3132
        %v4265 = vsel %vm1873, %v4234, %v3134
        %v4266 = vsel %vm1873, %v4235, %v3136
        %v4267 = vsel %vm1873, %v4236, %v3138
        %v4268 = vsel %vm1873, %v4237, %v3140
        %v4269 = vsel %vm1873, %v4238, %v3142
        %v4270 = vsel %vm1873, %v4239, %v3144
        %v4271 = vsel %vm1873, %v4240, %v3146
        %v4272 = vsel %vm1873, %v4241, %v3148
        %v4273 = vsel %vm1873, %v4242, %v3150
        %v4274 = vsel %vm1873, %v4243, %v3152
        %v4275 = vsel %vm1873, %v4244, %v3154
        %v4276 = vsel %vm1873, %v4245, %v3156
        %v4277 = vsel %vm1873, %v4246, %v3158
        %v4278 = vsel %vm1873, %v4247, %v3160
        %v4279 = vsel %vm1873, %v4248, %v3162
        %v4280 = vsel %vm1873, %v4249, %v3164
        %v4281 = vsel %vm1873, %v4250, %v3166
        %v4282 = vsel %vm1873, %v4251, %v3168
        %v4283 = vsel %vm1906, %v4252, %v1526
        %v4284 = vsel %vm1906, %v4253, %v3201
        %v4285 = vsel %vm1906, %v4254, %v3203
        %v4286 = vsel %vm1906, %v4255, %v3205
        %v4287 = vsel %vm1906, %v4256, %v3207
        %v4288 = vsel %vm1906, %v4257, %v3209
        %v4289 = vsel %vm1906, %v4258, %v3211
        %v4290 = vsel %vm1906, %v4259, %v3213
        %v4291 = vsel %vm1906, %v4260, %v3215
        %v4292 = vsel %vm1906, %v4261, %v3217
        %v4293 = vsel %vm1906, %v4262, %v3219
        %v4294 = vsel %vm1906, %v4263, %v3221
        %v4295 = vsel %vm1906, %v4264, %v3223
        %v4296 = vsel %vm1906, %v4265, %v3225
        %v4297 = vsel %vm1906, %v4266, %v3227
        %v4298 = vsel %vm1906, %v4267, %v3229
        %v4299 = vsel %vm1906, %v4268, %v3231
        %v4300 = vsel %vm1906, %v4269, %v3233
        %v4301 = vsel %vm1906, %v4270, %v3235
        %v4302 = vsel %vm1906, %v4271, %v3237
        %v4303 = vsel %vm1906, %v4272, %v3239
        %v4304 = vsel %vm1906, %v4273, %v3241
        %v4305 = vsel %vm1906, %v4274, %v3243
        %v4306 = vsel %vm1906, %v4275, %v3245
        %v4307 = vsel %vm1906, %v4276, %v3247
        %v4308 = vsel %vm1906, %v4277, %v3249
        %v4309 = vsel %vm1906, %v4278, %v3251
        %v4310 = vsel %vm1906, %v4279, %v3253
        %v4311 = vsel %vm1906, %v4280, %v3255
        %v4312 = vsel %vm1906, %v4281, %v3257
        %v4313 = vsel %vm1906, %v4282, %v3259
        %v4314 = vsel %vm1939, %v4283, %v1619
        %v4315 = vsel %vm1939, %v4284, %v3291
        %v4316 = vsel %vm1939, %v4285, %v3293
        %v4317 = vsel %vm1939, %v4286, %v3295
        %v4318 = vsel %vm1939, %v4287, %v3297
        %v4319 = vsel %vm1939, %v4288, %v3299
        %v4320 = vsel %vm1939, %v4289, %v3301
        %v4321 = vsel %vm1939, %v4290, %v3303
        %v4322 = vsel %vm1939, %v4291, %v3305
        %v4323 = vsel %vm1939, %v4292, %v3307
        %v4324 = vsel %vm1939, %v4293, %v3309
        %v4325 = vsel %vm1939, %v4294, %v3311
        %v4326 = vsel %vm1939, %v4295, %v3313
        %v4327 = vsel %vm1939, %v4296, %v3315
        %v4328 = vsel %vm1939, %v4297, %v3317
        %v4329 = vsel %vm1939, %v4298, %v3319
        %v4330 = vsel %vm1939, %v4299, %v3321
        %v4331 = vsel %vm1939, %v4300, %v3323
        %v4332 = vsel %vm1939, %v4301, %v3325
        %v4333 = vsel %vm1939, %v4302, %v3327
        %v4334 = vsel %vm1939, %v4303, %v3329
        %v4335 = vsel %vm1939, %v4304, %v3331
        %v4336 = vsel %vm1939, %v4305, %v3333
        %v4337 = vsel %vm1939, %v4306, %v3335
        %v4338 = vsel %vm1939, %v4307, %v3337
        %v4339 = vsel %vm1939, %v4308, %v3339
        %v4340 = vsel %vm1939, %v4309, %v3341
        %v4341 = vsel %vm1939, %v4310, %v3343
        %v4342 = vsel %vm1939, %v4311, %v3345
        %v4343 = vsel %vm1939, %v4312, %v3347
        %v4344 = vsel %vm1939, %v4313, %v3349
        %v4345 = vsel %vm1972, %v4314, %v1712
        %v4346 = vsel %vm1972, %v4315, %v3381
        %v4347 = vsel %vm1972, %v4316, %v3383
        %v4348 = vsel %vm1972, %v4317, %v3385
        %v4349 = vsel %vm1972, %v4318, %v3387
        %v4350 = vsel %vm1972, %v4319, %v3389
        %v4351 = vsel %vm1972, %v4320, %v3391
        %v4352 = vsel %vm1972, %v4321, %v3393
        %v4353 = vsel %vm1972, %v4322, %v3395
        %v4354 = vsel %vm1972, %v4323, %v3397
        %v4355 = vsel %vm1972, %v4324, %v3399
        %v4356 = vsel %vm1972, %v4325, %v3401
        %v4357 = vsel %vm1972, %v4326, %v3403
        %v4358 = vsel %vm1972, %v4327, %v3405
        %v4359 = vsel %vm1972, %v4328, %v3407
        %v4360 = vsel %vm1972, %v4329, %v3409
        %v4361 = vsel %vm1972, %v4330, %v3411
        %v4362 = vsel %vm1972, %v4331, %v3413
        %v4363 = vsel %vm1972, %v4332, %v3415
        %v4364 = vsel %vm1972, %v4333, %v3417
        %v4365 = vsel %vm1972, %v4334, %v3419
        %v4366 = vsel %vm1972, %v4335, %v3421
        %v4367 = vsel %vm1972, %v4336, %v3423
        %v4368 = vsel %vm1972, %v4337, %v3425
        %v4369 = vsel %vm1972, %v4338, %v3427
        %v4370 = vsel %vm1972, %v4339, %v3429
        %v4371 = vsel %vm1972, %v4340, %v3431
        %v4372 = vsel %vm1972, %v4341, %v3433
        %v4373 = vsel %vm1972, %v4342, %v3435
        %v4374 = vsel %vm1972, %v4343, %v3437
        %v4375 = vsel %vm1972, %v4344, %v3439
        %v4376 = vsel %vm2017, %v4345, %v3471
        %v4377 = vsel %vm2017, %v4346, %v3473
        %v4378 = vsel %vm2017, %v4347, %v3475
        %v4379 = vsel %vm2017, %v4348, %v3477
        %v4380 = vsel %vm2017, %v4349, %v3479
        %v4381 = vsel %vm2017, %v4350, %v3481
        %v4382 = vsel %vm2017, %v4351, %v3483
        %v4383 = vsel %vm2017, %v4352, %v3485
        %v4384 = vsel %vm2017, %v4353, %v3487
        %v4385 = vsel %vm2017, %v4354, %v3489
        %v4386 = vsel %vm2017, %v4355, %v3491
        %v4387 = vsel %vm2017, %v4356, %v3493
        %v4388 = vsel %vm2017, %v4357, %v3495
        %v4389 = vsel %vm2017, %v4358, %v3497
        %v4390 = vsel %vm2017, %v4359, %v3499
        %v4391 = vsel %vm2017, %v4360, %v3501
        %v4392 = vsel %vm2017, %v4361, %v3503
        %v4393 = vsel %vm2017, %v4362, %v3505
        %v4394 = vsel %vm2017, %v4363, %v3507
        %v4395 = vsel %vm2017, %v4364, %v3509
        %v4396 = vsel %vm2017, %v4365, %v3511
        %v4397 = vsel %vm2017, %v4366, %v3513
        %v4398 = vsel %vm2017, %v4367, %v3515
        %v4399 = vsel %vm2017, %v4368, %v3517
        %v4400 = vsel %vm2017, %v4369, %v3519
        %v4401 = vsel %vm2017, %v4370, %v3521
        %v4402 = vsel %vm2017, %v4371, %v3523
        %v4403 = vsel %vm2017, %v4372, %v3525
        %v4404 = vsel %vm2017, %v4373, %v3527
        %v4405 = vsel %vm2017, %v4374, %v3529
        %v4406 = vsel %vm2017, %v4375, %v3531
        %vm4407 = vcmask 326656
        %v4408 = vsel %vm4407, %v4376, %v3564
        %v4409 = vsel %vm4407, %v4376, %v3566
        %v4410 = vsel %vm4407, %v4377, %v3568
        %v4411 = vsel %vm4407, %v4378, %v3570
        %v4412 = vsel %vm4407, %v4379, %v3572
        %v4413 = vsel %vm4407, %v4380, %v3574
        %v4414 = vsel %vm4407, %v4381, %v3576
        %v4415 = vsel %vm4407, %v4382, %v3578
        %v4416 = vsel %vm4407, %v4383, %v3580
        %v4417 = vsel %vm4407, %v4384, %v3582
        %v4418 = vsel %vm4407, %v4385, %v3584
        %v4419 = vsel %vm4407, %v4386, %v3586
        %v4420 = vsel %vm4407, %v4387, %v3588
        %v4421 = vsel %vm4407, %v4388, %v3590
        %v4422 = vsel %vm4407, %v4389, %v3592
        %v4423 = vsel %vm4407, %v4390, %v3594
        %v4424 = vsel %vm4407, %v4391, %v3596
        %v4425 = vsel %vm4407, %v4392, %v3598
        %v4426 = vsel %vm4407, %v4393, %v3600
        %v4427 = vsel %vm4407, %v4394, %v3602
        %v4428 = vsel %vm4407, %v4395, %v3604
        %v4429 = vsel %vm4407, %v4396, %v3606
        %v4430 = vsel %vm4407, %v4397, %v3608
        %v4431 = vsel %vm4407, %v4398, %v3610
        %v4432 = vsel %vm4407, %v4399, %v3612
        %v4433 = vsel %vm4407, %v4400, %v3614
        %v4434 = vsel %vm4407, %v4401, %v3616
        %v4435 = vsel %vm4407, %v4402, %v3618
        %v4436 = vsel %vm4407, %v4403, %v3620
        %v4437 = vsel %vm4407, %v4404, %v3622
        %v4438 = vsel %vm4407, %v4405, %v3624
        %v4439 = vsel %vm4407, %v4406, %v3626
        %vm4440 = vcmask 359424
        %v4441 = vsel %vm4440, %v4408, %v3660
        %v4442 = vsel %vm4440, %v4409, %v3662
        %v4443 = vsel %vm4440, %v4410, %v3664
        %v4444 = vsel %vm4440, %v4411, %v3666
        %v4445 = vsel %vm4440, %v4412, %v3668
        %v4446 = vsel %vm4440, %v4413, %v3670
        %v4447 = vsel %vm4440, %v4414, %v3672
        %v4448 = vsel %vm4440, %v4415, %v3674
        %v4449 = vsel %vm4440, %v4416, %v3676
        %v4450 = vsel %vm4440, %v4417, %v3678
        %v4451 = vsel %vm4440, %v4418, %v3680
        %v4452 = vsel %vm4440, %v4419, %v3682
        %v4453 = vsel %vm4440, %v4420, %v3684
        %v4454 = vsel %vm4440, %v4421, %v3686
        %v4455 = vsel %vm4440, %v4422, %v3688
        %v4456 = vsel %vm4440, %v4423, %v3690
        %v4457 = vsel %vm4440, %v4424, %v3692
        %v4458 = vsel %vm4440, %v4425, %v3694
        %v4459 = vsel %vm4440, %v4426, %v3696
        %v4460 = vsel %vm4440, %v4427, %v3698
        %v4461 = vsel %vm4440, %v4428, %v3700
        %v4462 = vsel %vm4440, %v4429, %v3702
        %v4463 = vsel %vm4440, %v4430, %v3704
        %v4464 = vsel %vm4440, %v4431, %v3706
        %v4465 = vsel %vm4440, %v4432, %v3708
        %v4466 = vsel %vm4440, %v4433, %v3710
        %v4467 = vsel %vm4440, %v4434, %v3712
        %v4468 = vsel %vm4440, %v4435, %v3714
        %v4469 = vsel %vm4440, %v4436, %v3716
        %v4470 = vsel %vm4440, %v4437, %v3718
        %v4471 = vsel %vm4440, %v4438, %v3720
        %v4472 = vsel %vm4440, %v4439, %v3722
        %vm4473 = vcmask 392192
        %v4474 = vsel %vm4473, %v4441, %v3756
        %v4475 = vsel %vm4473, %v4442, %v3758
        %v4476 = vsel %vm4473, %v4443, %v3760
        %v4477 = vsel %vm4473, %v4444, %v3762
        %v4478 = vsel %vm4473, %v4445, %v3764
        %v4479 = vsel %vm4473, %v4446, %v3766
        %v4480 = vsel %vm4473, %v4447, %v3768
        %v4481 = vsel %vm4473, %v4448, %v3770
        %v4482 = vsel %vm4473, %v4449, %v3772
        %v4483 = vsel %vm4473, %v4450, %v3774
        %v4484 = vsel %vm4473, %v4451, %v3776
        %v4485 = vsel %vm4473, %v4452, %v3778
        %v4486 = vsel %vm4473, %v4453, %v3780
        %v4487 = vsel %vm4473, %v4454, %v3782
        %v4488 = vsel %vm4473, %v4455, %v3784
        %v4489 = vsel %vm4473, %v4456, %v3786
        %v4490 = vsel %vm4473, %v4457, %v3788
        %v4491 = vsel %vm4473, %v4458, %v3790
        %v4492 = vsel %vm4473, %v4459, %v3792
        %v4493 = vsel %vm4473, %v4460, %v3794
        %v4494 = vsel %vm4473, %v4461, %v3796
        %v4495 = vsel %vm4473, %v4462, %v3798
        %v4496 = vsel %vm4473, %v4463, %v3800
        %v4497 = vsel %vm4473, %v4464, %v3802
        %v4498 = vsel %vm4473, %v4465, %v3804
        %v4499 = vsel %vm4473, %v4466, %v3806
        %v4500 = vsel %vm4473, %v4467, %v3808
        %v4501 = vsel %vm4473, %v4468, %v3810
        %v4502 = vsel %vm4473, %v4469, %v3812
        %v4503 = vsel %vm4473, %v4470, %v3814
        %v4504 = vsel %vm4473, %v4471, %v3816
        %v4505 = vsel %vm4473, %v4472, %v3818
        %vm4506 = vcmask 424960
        %v4507 = vsel %vm4506, %v4474, %v3852
        %v4508 = vsel %vm4506, %v4475, %v3854
        %v4509 = vsel %vm4506, %v4476, %v3856
        %v4510 = vsel %vm4506, %v4477, %v3858
        %v4511 = vsel %vm4506, %v4478, %v3860
        %v4512 = vsel %vm4506, %v4479, %v3862
        %v4513 = vsel %vm4506, %v4480, %v3864
        %v4514 = vsel %vm4506, %v4481, %v3866
        %v4515 = vsel %vm4506, %v4482, %v3868
        %v4516 = vsel %vm4506, %v4483, %v3870
        %v4517 = vsel %vm4506, %v4484, %v3872
        %v4518 = vsel %vm4506, %v4485, %v3874
        %v4519 = vsel %vm4506, %v4486, %v3876
        %v4520 = vsel %vm4506, %v4487, %v3878
        %v4521 = vsel %vm4506, %v4488, %v3880
        %v4522 = vsel %vm4506, %v4489, %v3882
        %v4523 = vsel %vm4506, %v4490, %v3884
        %v4524 = vsel %vm4506, %v4491, %v3886
        %v4525 = vsel %vm4506, %v4492, %v3888
        %v4526 = vsel %vm4506, %v4493, %v3890
        %v4527 = vsel %vm4506, %v4494, %v3892
        %v4528 = vsel %vm4506, %v4495, %v3894
        %v4529 = vsel %vm4506, %v4496, %v3896
        %v4530 = vsel %vm4506, %v4497, %v3898
        %v4531 = vsel %vm4506, %v4498, %v3900
        %v4532 = vsel %vm4506, %v4499, %v3902
        %v4533 = vsel %vm4506, %v4500, %v3904
        %v4534 = vsel %vm4506, %v4501, %v3906
        %v4535 = vsel %vm4506, %v4502, %v3908
        %v4536 = vsel %vm4506, %v4503, %v3910
        %v4537 = vsel %vm4506, %v4504, %v3912
        %v4538 = vsel %vm4506, %v4505, %v3914
        %vm4539 = vcmask 457728
        %v4540 = vsel %vm4539, %v4507, %v3948
        %v4541 = vsel %vm4539, %v4508, %v3950
        %v4542 = vsel %vm4539, %v4509, %v3952
        %v4543 = vsel %vm4539, %v4510, %v3954
        %v4544 = vsel %vm4539, %v4511, %v3956
        %v4545 = vsel %vm4539, %v4512, %v3958
        %v4546 = vsel %vm4539, %v4513, %v3960
        %v4547 = vsel %vm4539, %v4514, %v3962
        %v4548 = vsel %vm4539, %v4515, %v3964
        %v4549 = vsel %vm4539, %v4516, %v3966
        %v4550 = vsel %vm4539, %v4517, %v3968
        %v4551 = vsel %vm4539, %v4518, %v3970
        %v4552 = vsel %vm4539, %v4519, %v3972
        %v4553 = vsel %vm4539, %v4520, %v3974
        %v4554 = vsel %vm4539, %v4521, %v3976
        %v4555 = vsel %vm4539, %v4522, %v3978
        %v4556 = vsel %vm4539, %v4523, %v3980
        %v4557 = vsel %vm4539, %v4524, %v3982
        %v4558 = vsel %vm4539, %v4525, %v3984
        %v4559 = vsel %vm4539, %v4526, %v3986
        %v4560 = vsel %vm4539, %v4527, %v3988
        %v4561 = vsel %vm4539, %v4528, %v3990
        %v4562 = vsel %vm4539, %v4529, %v3992
        %v4563 = vsel %vm4539, %v4530, %v3994
        %v4564 = vsel %vm4539, %v4531, %v3996
        %v4565 = vsel %vm4539, %v4532, %v3998
        %v4566 = vsel %vm4539, %v4533, %v4000
        %v4567 = vsel %vm4539, %v4534, %v4002
        %v4568 = vsel %vm4539, %v4535, %v4004
        %v4569 = vsel %vm4539, %v4536, %v4006
        %v4570 = vsel %vm4539, %v4537, %v4008
        %v4571 = vsel %vm4539, %v4538, %v4010
        %vm4572 = vcmask 490496
        %v4573 = vsel %vm4572, %v4540, %v4044
        %v4574 = vsel %vm4572, %v4541, %v4046
        %v4575 = vsel %vm4572, %v4542, %v4048
        %v4576 = vsel %vm4572, %v4543, %v4050
        %v4577 = vsel %vm4572, %v4544, %v4052
        %v4578 = vsel %vm4572, %v4545, %v4054
        %v4579 = vsel %vm4572, %v4546, %v4056
        %v4580 = vsel %vm4572, %v4547, %v4058
        %v4581 = vsel %vm4572, %v4548, %v4060
        %v4582 = vsel %vm4572, %v4549, %v4062
        %v4583 = vsel %vm4572, %v4550, %v4064
        %v4584 = vsel %vm4572, %v4551, %v4066
        %v4585 = vsel %vm4572, %v4552, %v4068
        %v4586 = vsel %vm4572, %v4553, %v4070
        %v4587 = vsel %vm4572, %v4554, %v4072
        %v4588 = vsel %vm4572, %v4555, %v4074
        %v4589 = vsel %vm4572, %v4556, %v4076
        %v4590 = vsel %vm4572, %v4557, %v4078
        %v4591 = vsel %vm4572, %v4558, %v4080
        %v4592 = vsel %vm4572, %v4559, %v4082
        %v4593 = vsel %vm4572, %v4560, %v4084
        %v4594 = vsel %vm4572, %v4561, %v4086
        %v4595 = vsel %vm4572, %v4562, %v4088
        %v4596 = vsel %vm4572, %v4563, %v4090
        %v4597 = vsel %vm4572, %v4564, %v4092
        %v4598 = vsel %vm4572, %v4565, %v4094
        %v4599 = vsel %vm4572, %v4566, %v4096
        %v4600 = vsel %vm4572, %v4567, %v4098
        %v4601 = vsel %vm4572, %v4568, %v4100
        %v4602 = vsel %vm4572, %v4569, %v4102
        %v4603 = vsel %vm4572, %v4570, %v4104
        %v4604 = vsel %vm4572, %v4571, %v4104
        %4605 = vrot.lane.b32.xlu0 %v2379, 4
        %v4606 = vpop.permute.xlu0 %4605
        %4607 = vrot.lane.b32.xlu0 %v2381, 4
        %v4608 = vpop.permute.xlu0 %4607
        %4609 = vrot.lane.b32.xlu0 %v2383, 4
        %v4610 = vpop.permute.xlu0 %4609
        %4611 = vrot.lane.b32.xlu0 %v2385, 4
        %v4612 = vpop.permute.xlu0 %4611
        %4613 = vrot.lane.b32.xlu0 %v2387, 4
        %v4614 = vpop.permute.xlu0 %4613
        %4615 = vrot.lane.b32.xlu0 %v2389, 4
        %v4616 = vpop.permute.xlu0 %4615
        %4617 = vrot.lane.b32.xlu0 %v2391, 4
        %v4618 = vpop.permute.xlu0 %4617
        %4619 = vrot.lane.b32.xlu0 %v2393, 4
        %v4620 = vpop.permute.xlu0 %4619
        %4621 = vrot.lane.b32.xlu0 %v2395, 4
        %v4622 = vpop.permute.xlu0 %4621
        %4623 = vrot.lane.b32.xlu0 %v2397, 4
        %v4624 = vpop.permute.xlu0 %4623
        %4625 = vrot.lane.b32.xlu0 %v2399, 4
        %v4626 = vpop.permute.xlu0 %4625
        %4627 = vrot.lane.b32.xlu0 %v2401, 4
        %v4628 = vpop.permute.xlu0 %4627
        %4629 = vrot.lane.b32.xlu0 %v2403, 4
        %v4630 = vpop.permute.xlu0 %4629
        %4631 = vrot.lane.b32.xlu0 %v2405, 4
        %v4632 = vpop.permute.xlu0 %4631
        %4633 = vrot.lane.b32.xlu0 %v2407, 4
        %v4634 = vpop.permute.xlu0 %4633
        %4635 = vrot.lane.b32.xlu0 %v2409, 4
        %v4636 = vpop.permute.xlu0 %4635
        %4637 = vrot.lane.b32.xlu0 %v2411, 4
        %v4638 = vpop.permute.xlu0 %4637
        %4639 = vrot.lane.b32.xlu0 %v2413, 4
        %v4640 = vpop.permute.xlu0 %4639
        %4641 = vrot.lane.b32.xlu0 %v2415, 4
        %v4642 = vpop.permute.xlu0 %4641
        %4643 = vrot.lane.b32.xlu0 %v2417, 4
        %v4644 = vpop.permute.xlu0 %4643
        %4645 = vrot.lane.b32.xlu0 %v2419, 4
        %v4646 = vpop.permute.xlu0 %4645
        %4647 = vrot.lane.b32.xlu0 %v2421, 4
        %v4648 = vpop.permute.xlu0 %4647
        %4649 = vrot.lane.b32.xlu0 %v2423, 4
        %v4650 = vpop.permute.xlu0 %4649
        %4651 = vrot.lane.b32.xlu0 %v2425, 4
        %v4652 = vpop.permute.xlu0 %4651
        %4653 = vrot.lane.b32.xlu0 %v2427, 4
        %v4654 = vpop.permute.xlu0 %4653
        %4655 = vrot.lane.b32.xlu0 %v2429, 4
        %v4656 = vpop.permute.xlu0 %4655
        %4657 = vrot.lane.b32.xlu0 %v2431, 4
        %v4658 = vpop.permute.xlu0 %4657
        %4659 = vrot.lane.b32.xlu0 %v2433, 4
        %v4660 = vpop.permute.xlu0 %4659
        %4661 = vrot.lane.b32.xlu0 %v2435, 4
        %v4662 = vpop.permute.xlu0 %4661
        %4663 = vrot.lane.b32.xlu0 %v2437, 4
        %v4664 = vpop.permute.xlu0 %4663
        %4695 = vrot.lane.b32.xlu0 %v2588, 8
        %v4696 = vpop.permute.xlu0 %4695
        %4697 = vrot.lane.b32.xlu0 %v2589, 8
        %v4698 = vpop.permute.xlu0 %4697
        %4699 = vrot.lane.b32.xlu0 %v2592, 8
        %v4700 = vpop.permute.xlu0 %4699
        %4701 = vrot.lane.b32.xlu0 %v2593, 8
        %v4702 = vpop.permute.xlu0 %4701
        %4703 = vrot.lane.b32.xlu0 %v2596, 8
        %v4704 = vpop.permute.xlu0 %4703
        %4705 = vrot.lane.b32.xlu0 %v2597, 8
        %v4706 = vpop.permute.xlu0 %4705
        %4707 = vrot.lane.b32.xlu0 %v2600, 8
        %v4708 = vpop.permute.xlu0 %4707
        %4709 = vrot.lane.b32.xlu0 %v2601, 8
        %v4710 = vpop.permute.xlu0 %4709
        %4711 = vrot.lane.b32.xlu0 %v2604, 8
        %v4712 = vpop.permute.xlu0 %4711
        %4713 = vrot.lane.b32.xlu0 %v2605, 8
        %v4714 = vpop.permute.xlu0 %4713
        %4715 = vrot.lane.b32.xlu0 %v2608, 8
        %v4716 = vpop.permute.xlu0 %4715
        %4717 = vrot.lane.b32.xlu0 %v2609, 8
        %v4718 = vpop.permute.xlu0 %4717
        %4719 = vrot.lane.b32.xlu0 %v2612, 8
        %v4720 = vpop.permute.xlu0 %4719
        %4721 = vrot.lane.b32.xlu0 %v2613, 8
        %v4722 = vpop.permute.xlu0 %4721
        %4723 = vrot.lane.b32.xlu0 %v2616, 8
        %v4724 = vpop.permute.xlu0 %4723
        %4725 = vrot.lane.b32.xlu0 %v2617, 8
        %v4726 = vpop.permute.xlu0 %4725
        %4727 = vrot.lane.b32.xlu0 %v2620, 8
        %v4728 = vpop.permute.xlu0 %4727
        %4729 = vrot.lane.b32.xlu0 %v2621, 8
        %v4730 = vpop.permute.xlu0 %4729
        %4731 = vrot.lane.b32.xlu0 %v2624, 8
        %v4732 = vpop.permute.xlu0 %4731
        %4733 = vrot.lane.b32.xlu0 %v2625, 8
        %v4734 = vpop.permute.xlu0 %4733
        %4735 = vrot.lane.b32.xlu0 %v2628, 8
        %v4736 = vpop.permute.xlu0 %4735
        %4737 = vrot.lane.b32.xlu0 %v2629, 8
        %v4738 = vpop.permute.xlu0 %4737
        %4739 = vrot.lane.b32.xlu0 %v2632, 8
        %v4740 = vpop.permute.xlu0 %4739
        %4741 = vrot.lane.b32.xlu0 %v2633, 8
        %v4742 = vpop.permute.xlu0 %4741
        %4743 = vrot.lane.b32.xlu0 %v2636, 8
        %v4744 = vpop.permute.xlu0 %4743
        %4745 = vrot.lane.b32.xlu0 %v2637, 8
        %v4746 = vpop.permute.xlu0 %4745
        %4747 = vrot.lane.b32.xlu0 %v2707, 8
        %v4748 = vpop.permute.xlu0 %4747
        %4749 = vrot.lane.b32.xlu0 %v2708, 8
        %v4750 = vpop.permute.xlu0 %4749
        %4751 = vrot.lane.b32.xlu0 %v2723, 8
        %v4752 = vpop.permute.xlu0 %4751
        %4753 = vrot.lane.b32.xlu0 %v2724, 8
        %v4754 = vpop.permute.xlu0 %4753
        %4785 = vrot.lane.b32.xlu0 %v2647, 12
        %v4786 = vpop.permute.xlu0 %4785
        %4787 = vrot.lane.b32.xlu0 %v2648, 12
        %v4788 = vpop.permute.xlu0 %4787
        %4789 = vrot.lane.b32.xlu0 %v2651, 12
        %v4790 = vpop.permute.xlu0 %4789
        %4791 = vrot.lane.b32.xlu0 %v2652, 12
        %v4792 = vpop.permute.xlu0 %4791
        %4793 = vrot.lane.b32.xlu0 %v2655, 12
        %v4794 = vpop.permute.xlu0 %4793
        %4795 = vrot.lane.b32.xlu0 %v2656, 12
        %v4796 = vpop.permute.xlu0 %4795
        %4797 = vrot.lane.b32.xlu0 %v2659, 12
        %v4798 = vpop.permute.xlu0 %4797
        %4799 = vrot.lane.b32.xlu0 %v2660, 12
        %v4800 = vpop.permute.xlu0 %4799
        %4801 = vrot.lane.b32.xlu0 %v2663, 12
        %v4802 = vpop.permute.xlu0 %4801
        %4803 = vrot.lane.b32.xlu0 %v2664, 12
        %v4804 = vpop.permute.xlu0 %4803
        %4805 = vrot.lane.b32.xlu0 %v2667, 12
        %v4806 = vpop.permute.xlu0 %4805
        %4807 = vrot.lane.b32.xlu0 %v2668, 12
        %v4808 = vpop.permute.xlu0 %4807
        %4809 = vrot.lane.b32.xlu0 %v2671, 12
        %v4810 = vpop.permute.xlu0 %4809
        %4811 = vrot.lane.b32.xlu0 %v2672, 12
        %v4812 = vpop.permute.xlu0 %4811
        %4813 = vrot.lane.b32.xlu0 %v2675, 12
        %v4814 = vpop.permute.xlu0 %4813
        %4815 = vrot.lane.b32.xlu0 %v2676, 12
        %v4816 = vpop.permute.xlu0 %4815
        %4817 = vrot.lane.b32.xlu0 %v2679, 12
        %v4818 = vpop.permute.xlu0 %4817
        %4819 = vrot.lane.b32.xlu0 %v2680, 12
        %v4820 = vpop.permute.xlu0 %4819
        %4821 = vrot.lane.b32.xlu0 %v2683, 12
        %v4822 = vpop.permute.xlu0 %4821
        %4823 = vrot.lane.b32.xlu0 %v2684, 12
        %v4824 = vpop.permute.xlu0 %4823
        %4825 = vrot.lane.b32.xlu0 %v2687, 12
        %v4826 = vpop.permute.xlu0 %4825
        %4827 = vrot.lane.b32.xlu0 %v2688, 12
        %v4828 = vpop.permute.xlu0 %4827
        %4829 = vrot.lane.b32.xlu0 %v2691, 12
        %v4830 = vpop.permute.xlu0 %4829
        %4831 = vrot.lane.b32.xlu0 %v2692, 12
        %v4832 = vpop.permute.xlu0 %4831
        %4833 = vrot.lane.b32.xlu0 %v2695, 12
        %v4834 = vpop.permute.xlu0 %4833
        %4835 = vrot.lane.b32.xlu0 %v2696, 12
        %v4836 = vpop.permute.xlu0 %4835
        %4837 = vrot.lane.b32.xlu0 %v2711, 12
        %v4838 = vpop.permute.xlu0 %4837
        %4839 = vrot.lane.b32.xlu0 %v2712, 12
        %v4840 = vpop.permute.xlu0 %4839
        %4841 = vrot.lane.b32.xlu0 %v2727, 12
        %v4842 = vpop.permute.xlu0 %4841
        %4843 = vrot.lane.b32.xlu0 %v2728, 12
        %v4844 = vpop.permute.xlu0 %4843
        %4845 = vrot.lane.b32.xlu0 %v2640, 12
        %v4846 = vpop.permute.xlu0 %4845
        %4878 = vrot.lane.b32.xlu0 %v2450, 16
        %v4879 = vpop.permute.xlu0 %4878
        %4880 = vrot.lane.b32.xlu0 %v2452, 16
        %v4881 = vpop.permute.xlu0 %4880
        %4882 = vrot.lane.b32.xlu0 %v2454, 16
        %v4883 = vpop.permute.xlu0 %4882
        %4884 = vrot.lane.b32.xlu0 %v2456, 16
        %v4885 = vpop.permute.xlu0 %4884
        %4886 = vrot.lane.b32.xlu0 %v2458, 16
        %v4887 = vpop.permute.xlu0 %4886
        %4888 = vrot.lane.b32.xlu0 %v2460, 16
        %v4889 = vpop.permute.xlu0 %4888
        %4890 = vrot.lane.b32.xlu0 %v2462, 16
        %v4891 = vpop.permute.xlu0 %4890
        %4892 = vrot.lane.b32.xlu0 %v2464, 16
        %v4893 = vpop.permute.xlu0 %4892
        %4894 = vrot.lane.b32.xlu0 %v2466, 16
        %v4895 = vpop.permute.xlu0 %4894
        %4896 = vrot.lane.b32.xlu0 %v2468, 16
        %v4897 = vpop.permute.xlu0 %4896
        %4898 = vrot.lane.b32.xlu0 %v2470, 16
        %v4899 = vpop.permute.xlu0 %4898
        %4900 = vrot.lane.b32.xlu0 %v2472, 16
        %v4901 = vpop.permute.xlu0 %4900
        %4902 = vrot.lane.b32.xlu0 %v2474, 16
        %v4903 = vpop.permute.xlu0 %4902
        %4904 = vrot.lane.b32.xlu0 %v2476, 16
        %v4905 = vpop.permute.xlu0 %4904
        %4906 = vrot.lane.b32.xlu0 %v2478, 16
        %v4907 = vpop.permute.xlu0 %4906
        %4908 = vrot.lane.b32.xlu0 %v2480, 16
        %v4909 = vpop.permute.xlu0 %4908
        %4910 = vrot.lane.b32.xlu0 %v2482, 16
        %v4911 = vpop.permute.xlu0 %4910
        %4912 = vrot.lane.b32.xlu0 %v2484, 16
        %v4913 = vpop.permute.xlu0 %4912
        %4914 = vrot.lane.b32.xlu0 %v2486, 16
        %v4915 = vpop.permute.xlu0 %4914
        %4916 = vrot.lane.b32.xlu0 %v2488, 16
        %v4917 = vpop.permute.xlu0 %4916
        %4918 = vrot.lane.b32.xlu0 %v2490, 16
        %v4919 = vpop.permute.xlu0 %4918
        %4920 = vrot.lane.b32.xlu0 %v2492, 16
        %v4921 = vpop.permute.xlu0 %4920
        %4922 = vrot.lane.b32.xlu0 %v2494, 16
        %v4923 = vpop.permute.xlu0 %4922
        %4924 = vrot.lane.b32.xlu0 %v2496, 16
        %v4925 = vpop.permute.xlu0 %4924
        %4926 = vrot.lane.b32.xlu0 %v2698, 16
        %v4927 = vpop.permute.xlu0 %4926
        %4928 = vrot.lane.b32.xlu0 %v2700, 16
        %v4929 = vpop.permute.xlu0 %4928
        %4930 = vrot.lane.b32.xlu0 %v2714, 16
        %v4931 = vpop.permute.xlu0 %4930
        %4932 = vrot.lane.b32.xlu0 %v2716, 16
        %v4933 = vpop.permute.xlu0 %4932
        %4934 = vrot.lane.b32.xlu0 %v2440, 16
        %v4935 = vpop.permute.xlu0 %4934
        %4965 = vrot.lane.b32.xlu0 %v2535, 20
        %v4966 = vpop.permute.xlu0 %4965
        %4967 = vrot.lane.b32.xlu0 %v2537, 20
        %v4968 = vpop.permute.xlu0 %4967
        %4969 = vrot.lane.b32.xlu0 %v2539, 20
        %v4970 = vpop.permute.xlu0 %4969
        %4971 = vrot.lane.b32.xlu0 %v2541, 20
        %v4972 = vpop.permute.xlu0 %4971
        %4973 = vrot.lane.b32.xlu0 %v2543, 20
        %v4974 = vpop.permute.xlu0 %4973
        %4975 = vrot.lane.b32.xlu0 %v2545, 20
        %v4976 = vpop.permute.xlu0 %4975
        %4977 = vrot.lane.b32.xlu0 %v2547, 20
        %v4978 = vpop.permute.xlu0 %4977
        %4979 = vrot.lane.b32.xlu0 %v2549, 20
        %v4980 = vpop.permute.xlu0 %4979
        %4981 = vrot.lane.b32.xlu0 %v2551, 20
        %v4982 = vpop.permute.xlu0 %4981
        %4983 = vrot.lane.b32.xlu0 %v2553, 20
        %v4984 = vpop.permute.xlu0 %4983
        %4985 = vrot.lane.b32.xlu0 %v2555, 20
        %v4986 = vpop.permute.xlu0 %4985
        %4987 = vrot.lane.b32.xlu0 %v2557, 20
        %v4988 = vpop.permute.xlu0 %4987
        %4989 = vrot.lane.b32.xlu0 %v2559, 20
        %v4990 = vpop.permute.xlu0 %4989
        %4991 = vrot.lane.b32.xlu0 %v2561, 20
        %v4992 = vpop.permute.xlu0 %4991
        %4993 = vrot.lane.b32.xlu0 %v2563, 20
        %v4994 = vpop.permute.xlu0 %4993
        %4995 = vrot.lane.b32.xlu0 %v2565, 20
        %v4996 = vpop.permute.xlu0 %4995
        %4997 = vrot.lane.b32.xlu0 %v2567, 20
        %v4998 = vpop.permute.xlu0 %4997
        %4999 = vrot.lane.b32.xlu0 %v2569, 20
        %v5000 = vpop.permute.xlu0 %4999
        %5001 = vrot.lane.b32.xlu0 %v2571, 20
        %v5002 = vpop.permute.xlu0 %5001
        %5003 = vrot.lane.b32.xlu0 %v2573, 20
        %v5004 = vpop.permute.xlu0 %5003
        %5005 = vrot.lane.b32.xlu0 %v2575, 20
        %v5006 = vpop.permute.xlu0 %5005
        %5007 = vrot.lane.b32.xlu0 %v2577, 20
        %v5008 = vpop.permute.xlu0 %5007
        %5009 = vrot.lane.b32.xlu0 %v2579, 20
        %v5010 = vpop.permute.xlu0 %5009
        %5011 = vrot.lane.b32.xlu0 %v2581, 20
        %v5012 = vpop.permute.xlu0 %5011
        %5013 = vrot.lane.b32.xlu0 %v2702, 20
        %v5014 = vpop.permute.xlu0 %5013
        %5015 = vrot.lane.b32.xlu0 %v2704, 20
        %v5016 = vpop.permute.xlu0 %5015
        %5017 = vrot.lane.b32.xlu0 %v2718, 20
        %v5018 = vpop.permute.xlu0 %5017
        %5019 = vrot.lane.b32.xlu0 %v2720, 20
        %v5020 = vpop.permute.xlu0 %5019
        %5021 = vrot.lane.b32.xlu0 %v828, 20
        %v5022 = vpop.permute.xlu0 %5021
        %5052 = vrot.lane.b32.xlu0 %v2383, 24
        %v5053 = vpop.permute.xlu0 %5052
        %5054 = vrot.lane.b32.xlu0 %v2385, 24
        %v5055 = vpop.permute.xlu0 %5054
        %5056 = vrot.lane.b32.xlu0 %v2387, 24
        %v5057 = vpop.permute.xlu0 %5056
        %5058 = vrot.lane.b32.xlu0 %v2389, 24
        %v5059 = vpop.permute.xlu0 %5058
        %5060 = vrot.lane.b32.xlu0 %v2391, 24
        %v5061 = vpop.permute.xlu0 %5060
        %5062 = vrot.lane.b32.xlu0 %v2393, 24
        %v5063 = vpop.permute.xlu0 %5062
        %5064 = vrot.lane.b32.xlu0 %v2395, 24
        %v5065 = vpop.permute.xlu0 %5064
        %5066 = vrot.lane.b32.xlu0 %v2397, 24
        %v5067 = vpop.permute.xlu0 %5066
        %5068 = vrot.lane.b32.xlu0 %v2399, 24
        %v5069 = vpop.permute.xlu0 %5068
        %5070 = vrot.lane.b32.xlu0 %v2401, 24
        %v5071 = vpop.permute.xlu0 %5070
        %5072 = vrot.lane.b32.xlu0 %v2403, 24
        %v5073 = vpop.permute.xlu0 %5072
        %5074 = vrot.lane.b32.xlu0 %v2405, 24
        %v5075 = vpop.permute.xlu0 %5074
        %5076 = vrot.lane.b32.xlu0 %v2407, 24
        %v5077 = vpop.permute.xlu0 %5076
        %5078 = vrot.lane.b32.xlu0 %v2409, 24
        %v5079 = vpop.permute.xlu0 %5078
        %5080 = vrot.lane.b32.xlu0 %v2411, 24
        %v5081 = vpop.permute.xlu0 %5080
        %5082 = vrot.lane.b32.xlu0 %v2413, 24
        %v5083 = vpop.permute.xlu0 %5082
        %5084 = vrot.lane.b32.xlu0 %v2415, 24
        %v5085 = vpop.permute.xlu0 %5084
        %5086 = vrot.lane.b32.xlu0 %v2417, 24
        %v5087 = vpop.permute.xlu0 %5086
        %5088 = vrot.lane.b32.xlu0 %v2419, 24
        %v5089 = vpop.permute.xlu0 %5088
        %5090 = vrot.lane.b32.xlu0 %v2421, 24
        %v5091 = vpop.permute.xlu0 %5090
        %5092 = vrot.lane.b32.xlu0 %v2423, 24
        %v5093 = vpop.permute.xlu0 %5092
        %5094 = vrot.lane.b32.xlu0 %v2425, 24
        %v5095 = vpop.permute.xlu0 %5094
        %5096 = vrot.lane.b32.xlu0 %v2427, 24
        %v5097 = vpop.permute.xlu0 %5096
        %5098 = vrot.lane.b32.xlu0 %v2429, 24
        %v5099 = vpop.permute.xlu0 %5098
        %5100 = vrot.lane.b32.xlu0 %v2431, 24
        %v5101 = vpop.permute.xlu0 %5100
        %5102 = vrot.lane.b32.xlu0 %v2433, 24
        %v5103 = vpop.permute.xlu0 %5102
        %5104 = vrot.lane.b32.xlu0 %v2435, 24
        %v5105 = vpop.permute.xlu0 %5104
        %5106 = vrot.lane.b32.xlu0 %v2437, 24
        %v5107 = vpop.permute.xlu0 %5106
        %5108 = vrot.lane.b32.xlu0 0.0, 24
        %v5109 = vpop.permute.xlu0 %5108
        %5139 = vrot.lane.b32.xlu0 %v2592, 28
        %v5140 = vpop.permute.xlu0 %5139
        %5141 = vrot.lane.b32.xlu0 %v2593, 28
        %v5142 = vpop.permute.xlu0 %5141
        %5143 = vrot.lane.b32.xlu0 %v2596, 28
        %v5144 = vpop.permute.xlu0 %5143
        %5145 = vrot.lane.b32.xlu0 %v2597, 28
        %v5146 = vpop.permute.xlu0 %5145
        %5147 = vrot.lane.b32.xlu0 %v2600, 28
        %v5148 = vpop.permute.xlu0 %5147
        %5149 = vrot.lane.b32.xlu0 %v2601, 28
        %v5150 = vpop.permute.xlu0 %5149
        %5151 = vrot.lane.b32.xlu0 %v2604, 28
        %v5152 = vpop.permute.xlu0 %5151
        %5153 = vrot.lane.b32.xlu0 %v2605, 28
        %v5154 = vpop.permute.xlu0 %5153
        %5155 = vrot.lane.b32.xlu0 %v2608, 28
        %v5156 = vpop.permute.xlu0 %5155
        %5157 = vrot.lane.b32.xlu0 %v2609, 28
        %v5158 = vpop.permute.xlu0 %5157
        %5159 = vrot.lane.b32.xlu0 %v2612, 28
        %v5160 = vpop.permute.xlu0 %5159
        %5161 = vrot.lane.b32.xlu0 %v2613, 28
        %v5162 = vpop.permute.xlu0 %5161
        %5163 = vrot.lane.b32.xlu0 %v2616, 28
        %v5164 = vpop.permute.xlu0 %5163
        %5165 = vrot.lane.b32.xlu0 %v2617, 28
        %v5166 = vpop.permute.xlu0 %5165
        %5167 = vrot.lane.b32.xlu0 %v2620, 28
        %v5168 = vpop.permute.xlu0 %5167
        %5169 = vrot.lane.b32.xlu0 %v2621, 28
        %v5170 = vpop.permute.xlu0 %5169
        %5171 = vrot.lane.b32.xlu0 %v2624, 28
        %v5172 = vpop.permute.xlu0 %5171
        %5173 = vrot.lane.b32.xlu0 %v2625, 28
        %v5174 = vpop.permute.xlu0 %5173
        %5175 = vrot.lane.b32.xlu0 %v2628, 28
        %v5176 = vpop.permute.xlu0 %5175
        %5177 = vrot.lane.b32.xlu0 %v2629, 28
        %v5178 = vpop.permute.xlu0 %5177
        %5179 = vrot.lane.b32.xlu0 %v2632, 28
        %v5180 = vpop.permute.xlu0 %5179
        %5181 = vrot.lane.b32.xlu0 %v2633, 28
        %v5182 = vpop.permute.xlu0 %5181
        %5183 = vrot.lane.b32.xlu0 %v2636, 28
        %v5184 = vpop.permute.xlu0 %5183
        %5185 = vrot.lane.b32.xlu0 %v2637, 28
        %v5186 = vpop.permute.xlu0 %5185
        %5187 = vrot.lane.b32.xlu0 %v2707, 28
        %v5188 = vpop.permute.xlu0 %5187
        %5189 = vrot.lane.b32.xlu0 %v2708, 28
        %v5190 = vpop.permute.xlu0 %5189
        %5191 = vrot.lane.b32.xlu0 %v2723, 28
        %v5192 = vpop.permute.xlu0 %5191
        %5193 = vrot.lane.b32.xlu0 %v2724, 28
        %v5194 = vpop.permute.xlu0 %5193
        %5195 = vrot.lane.b32.xlu0 %v922, 28
        %v5196 = vpop.permute.xlu0 %5195
        %5226 = vrot.lane.b32.xlu0 %v2651, 32
        %v5227 = vpop.permute.xlu0 %5226
        %5228 = vrot.lane.b32.xlu0 %v2652, 32
        %v5229 = vpop.permute.xlu0 %5228
        %5230 = vrot.lane.b32.xlu0 %v2655, 32
        %v5231 = vpop.permute.xlu0 %5230
        %5232 = vrot.lane.b32.xlu0 %v2656, 32
        %v5233 = vpop.permute.xlu0 %5232
        %5234 = vrot.lane.b32.xlu0 %v2659, 32
        %v5235 = vpop.permute.xlu0 %5234
        %5236 = vrot.lane.b32.xlu0 %v2660, 32
        %v5237 = vpop.permute.xlu0 %5236
        %5238 = vrot.lane.b32.xlu0 %v2663, 32
        %v5239 = vpop.permute.xlu0 %5238
        %5240 = vrot.lane.b32.xlu0 %v2664, 32
        %v5241 = vpop.permute.xlu0 %5240
        %5242 = vrot.lane.b32.xlu0 %v2667, 32
        %v5243 = vpop.permute.xlu0 %5242
        %5244 = vrot.lane.b32.xlu0 %v2668, 32
        %v5245 = vpop.permute.xlu0 %5244
        %5246 = vrot.lane.b32.xlu0 %v2671, 32
        %v5247 = vpop.permute.xlu0 %5246
        %5248 = vrot.lane.b32.xlu0 %v2672, 32
        %v5249 = vpop.permute.xlu0 %5248
        %5250 = vrot.lane.b32.xlu0 %v2675, 32
        %v5251 = vpop.permute.xlu0 %5250
        %5252 = vrot.lane.b32.xlu0 %v2676, 32
        %v5253 = vpop.permute.xlu0 %5252
        %5254 = vrot.lane.b32.xlu0 %v2679, 32
        %v5255 = vpop.permute.xlu0 %5254
        %5256 = vrot.lane.b32.xlu0 %v2680, 32
        %v5257 = vpop.permute.xlu0 %5256
        %5258 = vrot.lane.b32.xlu0 %v2683, 32
        %v5259 = vpop.permute.xlu0 %5258
        %5260 = vrot.lane.b32.xlu0 %v2684, 32
        %v5261 = vpop.permute.xlu0 %5260
        %5262 = vrot.lane.b32.xlu0 %v2687, 32
        %v5263 = vpop.permute.xlu0 %5262
        %5264 = vrot.lane.b32.xlu0 %v2688, 32
        %v5265 = vpop.permute.xlu0 %5264
        %5266 = vrot.lane.b32.xlu0 %v2691, 32
        %v5267 = vpop.permute.xlu0 %5266
        %5268 = vrot.lane.b32.xlu0 %v2692, 32
        %v5269 = vpop.permute.xlu0 %5268
        %5270 = vrot.lane.b32.xlu0 %v2695, 32
        %v5271 = vpop.permute.xlu0 %5270
        %5272 = vrot.lane.b32.xlu0 %v2696, 32
        %v5273 = vpop.permute.xlu0 %5272
        %5274 = vrot.lane.b32.xlu0 %v2711, 32
        %v5275 = vpop.permute.xlu0 %5274
        %5276 = vrot.lane.b32.xlu0 %v2712, 32
        %v5277 = vpop.permute.xlu0 %5276
        %5278 = vrot.lane.b32.xlu0 %v2727, 32
        %v5279 = vpop.permute.xlu0 %5278
        %5280 = vrot.lane.b32.xlu0 %v2728, 32
        %v5281 = vpop.permute.xlu0 %5280
        %5282 = vrot.lane.b32.xlu0 %v2640, 32
        %v5283 = vpop.permute.xlu0 %5282
        %v5313 = vsel %vm371, %v2531, %v4606
        %v5314 = vsel %vm371, %v2533, %v4608
        %v5315 = vsel %vm371, %v2535, %v4610
        %v5316 = vsel %vm371, %v2537, %v4612
        %v5317 = vsel %vm371, %v2539, %v4614
        %v5318 = vsel %vm371, %v2541, %v4616
        %v5319 = vsel %vm371, %v2543, %v4618
        %v5320 = vsel %vm371, %v2545, %v4620
        %v5321 = vsel %vm371, %v2547, %v4622
        %v5322 = vsel %vm371, %v2549, %v4624
        %v5323 = vsel %vm371, %v2551, %v4626
        %v5324 = vsel %vm371, %v2553, %v4628
        %v5325 = vsel %vm371, %v2555, %v4630
        %v5326 = vsel %vm371, %v2557, %v4632
        %v5327 = vsel %vm371, %v2559, %v4634
        %v5328 = vsel %vm371, %v2561, %v4636
        %v5329 = vsel %vm371, %v2563, %v4638
        %v5330 = vsel %vm371, %v2565, %v4640
        %v5331 = vsel %vm371, %v2567, %v4642
        %v5332 = vsel %vm371, %v2569, %v4644
        %v5333 = vsel %vm371, %v2571, %v4646
        %v5334 = vsel %vm371, %v2573, %v4648
        %v5335 = vsel %vm371, %v2575, %v4650
        %v5336 = vsel %vm371, %v2577, %v4652
        %v5337 = vsel %vm371, %v2579, %v4654
        %v5338 = vsel %vm371, %v2581, %v4656
        %v5339 = vsel %vm371, %v2702, %v4658
        %v5340 = vsel %vm371, %v2704, %v4660
        %v5341 = vsel %vm371, %v2718, %v4662
        %v5342 = vsel %vm371, %v2720, %v4664
        %v5343 = vsel %vm1775, %v5313, %v4696
        %v5344 = vsel %vm1775, %v5314, %v4698
        %v5345 = vsel %vm1775, %v5315, %v4700
        %v5346 = vsel %vm1775, %v5316, %v4702
        %v5347 = vsel %vm1775, %v5317, %v4704
        %v5348 = vsel %vm1775, %v5318, %v4706
        %v5349 = vsel %vm1775, %v5319, %v4708
        %v5350 = vsel %vm1775, %v5320, %v4710
        %v5351 = vsel %vm1775, %v5321, %v4712
        %v5352 = vsel %vm1775, %v5322, %v4714
        %v5353 = vsel %vm1775, %v5323, %v4716
        %v5354 = vsel %vm1775, %v5324, %v4718
        %v5355 = vsel %vm1775, %v5325, %v4720
        %v5356 = vsel %vm1775, %v5326, %v4722
        %v5357 = vsel %vm1775, %v5327, %v4724
        %v5358 = vsel %vm1775, %v5328, %v4726
        %v5359 = vsel %vm1775, %v5329, %v4728
        %v5360 = vsel %vm1775, %v5330, %v4730
        %v5361 = vsel %vm1775, %v5331, %v4732
        %v5362 = vsel %vm1775, %v5332, %v4734
        %v5363 = vsel %vm1775, %v5333, %v4736
        %v5364 = vsel %vm1775, %v5334, %v4738
        %v5365 = vsel %vm1775, %v5335, %v4740
        %v5366 = vsel %vm1775, %v5336, %v4742
        %v5367 = vsel %vm1775, %v5337, %v4744
        %v5368 = vsel %vm1775, %v5338, %v4746
        %v5369 = vsel %vm1775, %v5339, %v4748
        %v5370 = vsel %vm1775, %v5340, %v4750
        %v5371 = vsel %vm1775, %v5341, %v4752
        %v5372 = vsel %vm1775, %v5342, %v4754
        %v5373 = vsel %vm1807, %v5343, %v4786
        %v5374 = vsel %vm1807, %v5344, %v4788
        %v5375 = vsel %vm1807, %v5345, %v4790
        %v5376 = vsel %vm1807, %v5346, %v4792
        %v5377 = vsel %vm1807, %v5347, %v4794
        %v5378 = vsel %vm1807, %v5348, %v4796
        %v5379 = vsel %vm1807, %v5349, %v4798
        %v5380 = vsel %vm1807, %v5350, %v4800
        %v5381 = vsel %vm1807, %v5351, %v4802
        %v5382 = vsel %vm1807, %v5352, %v4804
        %v5383 = vsel %vm1807, %v5353, %v4806
        %v5384 = vsel %vm1807, %v5354, %v4808
        %v5385 = vsel %vm1807, %v5355, %v4810
        %v5386 = vsel %vm1807, %v5356, %v4812
        %v5387 = vsel %vm1807, %v5357, %v4814
        %v5388 = vsel %vm1807, %v5358, %v4816
        %v5389 = vsel %vm1807, %v5359, %v4818
        %v5390 = vsel %vm1807, %v5360, %v4820
        %v5391 = vsel %vm1807, %v5361, %v4822
        %v5392 = vsel %vm1807, %v5362, %v4824
        %v5393 = vsel %vm1807, %v5363, %v4826
        %v5394 = vsel %vm1807, %v5364, %v4828
        %v5395 = vsel %vm1807, %v5365, %v4830
        %v5396 = vsel %vm1807, %v5366, %v4832
        %v5397 = vsel %vm1807, %v5367, %v4834
        %v5398 = vsel %vm1807, %v5368, %v4836
        %v5399 = vsel %vm1807, %v5369, %v4838
        %v5400 = vsel %vm1807, %v5370, %v4840
        %v5401 = vsel %vm1807, %v5371, %v4842
        %v5402 = vsel %vm1807, %v5372, %v4844
        %v5403 = vsel %vm1807, %v1776, %v4846
        %v5404 = vsel %vm1840, %v5373, %v4879
        %v5405 = vsel %vm1840, %v5374, %v4881
        %v5406 = vsel %vm1840, %v5375, %v4883
        %v5407 = vsel %vm1840, %v5376, %v4885
        %v5408 = vsel %vm1840, %v5377, %v4887
        %v5409 = vsel %vm1840, %v5378, %v4889
        %v5410 = vsel %vm1840, %v5379, %v4891
        %v5411 = vsel %vm1840, %v5380, %v4893
        %v5412 = vsel %vm1840, %v5381, %v4895
        %v5413 = vsel %vm1840, %v5382, %v4897
        %v5414 = vsel %vm1840, %v5383, %v4899
        %v5415 = vsel %vm1840, %v5384, %v4901
        %v5416 = vsel %vm1840, %v5385, %v4903
        %v5417 = vsel %vm1840, %v5386, %v4905
        %v5418 = vsel %vm1840, %v5387, %v4907
        %v5419 = vsel %vm1840, %v5388, %v4909
        %v5420 = vsel %vm1840, %v5389, %v4911
        %v5421 = vsel %vm1840, %v5390, %v4913
        %v5422 = vsel %vm1840, %v5391, %v4915
        %v5423 = vsel %vm1840, %v5392, %v4917
        %v5424 = vsel %vm1840, %v5393, %v4919
        %v5425 = vsel %vm1840, %v5394, %v4921
        %v5426 = vsel %vm1840, %v5395, %v4923
        %v5427 = vsel %vm1840, %v5396, %v4925
        %v5428 = vsel %vm1840, %v5397, %v4927
        %v5429 = vsel %vm1840, %v5398, %v4929
        %v5430 = vsel %vm1840, %v5399, %v4931
        %v5431 = vsel %vm1840, %v5400, %v4933
        %v5432 = vsel %vm1840, %v5401, %v4935
        %v5433 = vsel %vm1840, %v5402, %v4935
        %v5434 = vsel %vm1840, %v5403, %v4935
        %v5435 = vsel %vm1873, %v5404, %v4966
        %v5436 = vsel %vm1873, %v5405, %v4968
        %v5437 = vsel %vm1873, %v5406, %v4970
        %v5438 = vsel %vm1873, %v5407, %v4972
        %v5439 = vsel %vm1873, %v5408, %v4974
        %v5440 = vsel %vm1873, %v5409, %v4976
        %v5441 = vsel %vm1873, %v5410, %v4978
        %v5442 = vsel %vm1873, %v5411, %v4980
        %v5443 = vsel %vm1873, %v5412, %v4982
        %v5444 = vsel %vm1873, %v5413, %v4984
        %v5445 = vsel %vm1873, %v5414, %v4986
        %v5446 = vsel %vm1873, %v5415, %v4988
        %v5447 = vsel %vm1873, %v5416, %v4990
        %v5448 = vsel %vm1873, %v5417, %v4992
        %v5449 = vsel %vm1873, %v5418, %v4994
        %v5450 = vsel %vm1873, %v5419, %v4996
        %v5451 = vsel %vm1873, %v5420, %v4998
        %v5452 = vsel %vm1873, %v5421, %v5000
        %v5453 = vsel %vm1873, %v5422, %v5002
        %v5454 = vsel %vm1873, %v5423, %v5004
        %v5455 = vsel %vm1873, %v5424, %v5006
        %v5456 = vsel %vm1873, %v5425, %v5008
        %v5457 = vsel %vm1873, %v5426, %v5010
        %v5458 = vsel %vm1873, %v5427, %v5012
        %v5459 = vsel %vm1873, %v5428, %v5014
        %v5460 = vsel %vm1873, %v5429, %v5016
        %v5461 = vsel %vm1873, %v5430, %v5018
        %v5462 = vsel %vm1873, %v5431, %v5020
        %v5463 = vsel %vm1873, %v5432, %v5022
        %v5464 = vsel %vm1873, %v5433, %v5022
        %v5465 = vsel %vm1873, %v5434, %v5022
        %v5466 = vsel %vm1906, %v5435, %v5053
        %v5467 = vsel %vm1906, %v5436, %v5055
        %v5468 = vsel %vm1906, %v5437, %v5057
        %v5469 = vsel %vm1906, %v5438, %v5059
        %v5470 = vsel %vm1906, %v5439, %v5061
        %v5471 = vsel %vm1906, %v5440, %v5063
        %v5472 = vsel %vm1906, %v5441, %v5065
        %v5473 = vsel %vm1906, %v5442, %v5067
        %v5474 = vsel %vm1906, %v5443, %v5069
        %v5475 = vsel %vm1906, %v5444, %v5071
        %v5476 = vsel %vm1906, %v5445, %v5073
        %v5477 = vsel %vm1906, %v5446, %v5075
        %v5478 = vsel %vm1906, %v5447, %v5077
        %v5479 = vsel %vm1906, %v5448, %v5079
        %v5480 = vsel %vm1906, %v5449, %v5081
        %v5481 = vsel %vm1906, %v5450, %v5083
        %v5482 = vsel %vm1906, %v5451, %v5085
        %v5483 = vsel %vm1906, %v5452, %v5087
        %v5484 = vsel %vm1906, %v5453, %v5089
        %v5485 = vsel %vm1906, %v5454, %v5091
        %v5486 = vsel %vm1906, %v5455, %v5093
        %v5487 = vsel %vm1906, %v5456, %v5095
        %v5488 = vsel %vm1906, %v5457, %v5097
        %v5489 = vsel %vm1906, %v5458, %v5099
        %v5490 = vsel %vm1906, %v5459, %v5101
        %v5491 = vsel %vm1906, %v5460, %v5103
        %v5492 = vsel %vm1906, %v5461, %v5105
        %v5493 = vsel %vm1906, %v5462, %v5107
        %v5494 = vsel %vm1906, %v5463, %v5109
        %v5495 = vsel %vm1906, %v5464, %v5109
        %v5496 = vsel %vm1906, %v5465, %v5109
        %v5497 = vsel %vm1939, %v5466, %v5140
        %v5498 = vsel %vm1939, %v5467, %v5142
        %v5499 = vsel %vm1939, %v5468, %v5144
        %v5500 = vsel %vm1939, %v5469, %v5146
        %v5501 = vsel %vm1939, %v5470, %v5148
        %v5502 = vsel %vm1939, %v5471, %v5150
        %v5503 = vsel %vm1939, %v5472, %v5152
        %v5504 = vsel %vm1939, %v5473, %v5154
        %v5505 = vsel %vm1939, %v5474, %v5156
        %v5506 = vsel %vm1939, %v5475, %v5158
        %v5507 = vsel %vm1939, %v5476, %v5160
        %v5508 = vsel %vm1939, %v5477, %v5162
        %v5509 = vsel %vm1939, %v5478, %v5164
        %v5510 = vsel %vm1939, %v5479, %v5166
        %v5511 = vsel %vm1939, %v5480, %v5168
        %v5512 = vsel %vm1939, %v5481, %v5170
        %v5513 = vsel %vm1939, %v5482, %v5172
        %v5514 = vsel %vm1939, %v5483, %v5174
        %v5515 = vsel %vm1939, %v5484, %v5176
        %v5516 = vsel %vm1939, %v5485, %v5178
        %v5517 = vsel %vm1939, %v5486, %v5180
        %v5518 = vsel %vm1939, %v5487, %v5182
        %v5519 = vsel %vm1939, %v5488, %v5184
        %v5520 = vsel %vm1939, %v5489, %v5186
        %v5521 = vsel %vm1939, %v5490, %v5188
        %v5522 = vsel %vm1939, %v5491, %v5190
        %v5523 = vsel %vm1939, %v5492, %v5192
        %v5524 = vsel %vm1939, %v5493, %v5194
        %v5525 = vsel %vm1939, %v5494, %v5196
        %v5526 = vsel %vm1939, %v5495, %v5196
        %v5527 = vsel %vm1939, %v5496, %v5196
        %v5528 = vsel %vm1972, %v5497, %v5227
        %v5529 = vsel %vm1972, %v5498, %v5229
        %v5530 = vsel %vm1972, %v5499, %v5231
        %v5531 = vsel %vm1972, %v5500, %v5233
        %v5532 = vsel %vm1972, %v5501, %v5235
        %v5533 = vsel %vm1972, %v5502, %v5237
        %v5534 = vsel %vm1972, %v5503, %v5239
        %v5535 = vsel %vm1972, %v5504, %v5241
        %v5536 = vsel %vm1972, %v5505, %v5243
        %v5537 = vsel %vm1972, %v5506, %v5245
        %v5538 = vsel %vm1972, %v5507, %v5247
        %v5539 = vsel %vm1972, %v5508, %v5249
        %v5540 = vsel %vm1972, %v5509, %v5251
        %v5541 = vsel %vm1972, %v5510, %v5253
        %v5542 = vsel %vm1972, %v5511, %v5255
        %v5543 = vsel %vm1972, %v5512, %v5257
        %v5544 = vsel %vm1972, %v5513, %v5259
        %v5545 = vsel %vm1972, %v5514, %v5261
        %v5546 = vsel %vm1972, %v5515, %v5263
        %v5547 = vsel %vm1972, %v5516, %v5265
        %v5548 = vsel %vm1972, %v5517, %v5267
        %v5549 = vsel %vm1972, %v5518, %v5269
        %v5550 = vsel %vm1972, %v5519, %v5271
        %v5551 = vsel %vm1972, %v5520, %v5273
        %v5552 = vsel %vm1972, %v5521, %v5275
        %v5553 = vsel %vm1972, %v5522, %v5277
        %v5554 = vsel %vm1972, %v5523, %v5279
        %v5555 = vsel %vm1972, %v5524, %v5281
        %v5556 = vsel %vm1972, %v5525, %v5283
        %v5557 = vsel %vm1972, %v5526, %v5283
        %v5558 = vsel %vm1972, %v5527, %v5283
        %5590 = vrot.lane.b32.xlu0 %v5528, 64
        %v5591 = vpop.permute.xlu0 %5590
        %5592 = vrot.lane.b32.xlu0 %v5529, 64
        %v5593 = vpop.permute.xlu0 %5592
        %5594 = vrot.lane.b32.xlu0 %v5530, 64
        %v5595 = vpop.permute.xlu0 %5594
        %5596 = vrot.lane.b32.xlu0 %v5531, 64
        %v5597 = vpop.permute.xlu0 %5596
        %5598 = vrot.lane.b32.xlu0 %v5532, 64
        %v5599 = vpop.permute.xlu0 %5598
        %5600 = vrot.lane.b32.xlu0 %v5533, 64
        %v5601 = vpop.permute.xlu0 %5600
        %5602 = vrot.lane.b32.xlu0 %v5534, 64
        %v5603 = vpop.permute.xlu0 %5602
        %5604 = vrot.lane.b32.xlu0 %v5535, 64
        %v5605 = vpop.permute.xlu0 %5604
        %5606 = vrot.lane.b32.xlu0 %v5536, 64
        %v5607 = vpop.permute.xlu0 %5606
        %5608 = vrot.lane.b32.xlu0 %v5537, 64
        %v5609 = vpop.permute.xlu0 %5608
        %5610 = vrot.lane.b32.xlu0 %v5538, 64
        %v5611 = vpop.permute.xlu0 %5610
        %5612 = vrot.lane.b32.xlu0 %v5539, 64
        %v5613 = vpop.permute.xlu0 %5612
        %5614 = vrot.lane.b32.xlu0 %v5540, 64
        %v5615 = vpop.permute.xlu0 %5614
        %5616 = vrot.lane.b32.xlu0 %v5541, 64
        %v5617 = vpop.permute.xlu0 %5616
        %5618 = vrot.lane.b32.xlu0 %v5542, 64
        %v5619 = vpop.permute.xlu0 %5618
        %5620 = vrot.lane.b32.xlu0 %v5543, 64
        %v5621 = vpop.permute.xlu0 %5620
        %5622 = vrot.lane.b32.xlu0 %v5544, 64
        %v5623 = vpop.permute.xlu0 %5622
        %5624 = vrot.lane.b32.xlu0 %v5545, 64
        %v5625 = vpop.permute.xlu0 %5624
        %5626 = vrot.lane.b32.xlu0 %v5546, 64
        %v5627 = vpop.permute.xlu0 %5626
        %5628 = vrot.lane.b32.xlu0 %v5547, 64
        %v5629 = vpop.permute.xlu0 %5628
        %5630 = vrot.lane.b32.xlu0 %v5548, 64
        %v5631 = vpop.permute.xlu0 %5630
        %5632 = vrot.lane.b32.xlu0 %v5549, 64
        %v5633 = vpop.permute.xlu0 %5632
        %5634 = vrot.lane.b32.xlu0 %v5550, 64
        %v5635 = vpop.permute.xlu0 %5634
        %5636 = vrot.lane.b32.xlu0 %v5551, 64
        %v5637 = vpop.permute.xlu0 %5636
        %5638 = vrot.lane.b32.xlu0 %v5552, 64
        %v5639 = vpop.permute.xlu0 %5638
        %5640 = vrot.lane.b32.xlu0 %v5553, 64
        %v5641 = vpop.permute.xlu0 %5640
        %5642 = vrot.lane.b32.xlu0 %v5554, 64
        %v5643 = vpop.permute.xlu0 %5642
        %5644 = vrot.lane.b32.xlu0 %v5555, 64
        %v5645 = vpop.permute.xlu0 %5644
        %5646 = vrot.lane.b32.xlu0 %v5556, 64
        %v5647 = vpop.permute.xlu0 %5646
        %5648 = vrot.lane.b32.xlu0 %v5557, 64
        %v5649 = vpop.permute.xlu0 %5648
        %5650 = vrot.lane.b32.xlu0 %v5558, 64
        %v5651 = vpop.permute.xlu0 %5650
        %vm5683 = vcmask 523264
        %v5684 = vsel %vm5683, %v4573, %v5591
        %v5685 = vsel %vm5683, %v4574, %v5593
        %v5686 = vsel %vm5683, %v4575, %v5595
        %v5687 = vsel %vm5683, %v4576, %v5597
        %v5688 = vsel %vm5683, %v4577, %v5599
        %v5689 = vsel %vm5683, %v4578, %v5601
        %v5690 = vsel %vm5683, %v4579, %v5603
        %v5691 = vsel %vm5683, %v4580, %v5605
        %v5692 = vsel %vm5683, %v4581, %v5607
        %v5693 = vsel %vm5683, %v4582, %v5609
        %v5694 = vsel %vm5683, %v4583, %v5611
        %v5695 = vsel %vm5683, %v4584, %v5613
        %v5696 = vsel %vm5683, %v4585, %v5615
        %v5697 = vsel %vm5683, %v4586, %v5617
        %v5698 = vsel %vm5683, %v4587, %v5619
        %v5699 = vsel %vm5683, %v4588, %v5621
        %v5700 = vsel %vm5683, %v4589, %v5623
        %v5701 = vsel %vm5683, %v4590, %v5625
        %v5702 = vsel %vm5683, %v4591, %v5627
        %v5703 = vsel %vm5683, %v4592, %v5629
        %v5704 = vsel %vm5683, %v4593, %v5631
        %v5705 = vsel %vm5683, %v4594, %v5633
        %v5706 = vsel %vm5683, %v4595, %v5635
        %v5707 = vsel %vm5683, %v4596, %v5637
        %v5708 = vsel %vm5683, %v4597, %v5639
        %v5709 = vsel %vm5683, %v4598, %v5641
        %v5710 = vsel %vm5683, %v4599, %v5643
        %v5711 = vsel %vm5683, %v4600, %v5645
        %v5712 = vsel %vm5683, %v4601, %v5647
        %v5713 = vsel %vm5683, %v4602, %v5649
        %v5714 = vsel %vm5683, %v4603, %v5651
        %v5715 = vsel %vm5683, %v4604, %v5651
        %v5716 = vld [vmem:[%s5] sm:$0xff]
        %v5717 = vld [vmem:[%s5 + $0x8] sm:$0xff]
        %v5718 = vld [vmem:[%s5 + $0x10] sm:$0xff]
        %v5719 = vld [vmem:[%s5 + $0x18] sm:$0xff]
        %v5720 = vld [vmem:[%s5 + $0x20] sm:$0xff]
        %v5721 = vld [vmem:[%s5 + $0x28] sm:$0xff]
        %v5722 = vld [vmem:[%s5 + $0x30] sm:$0xff]
        %v5723 = vld [vmem:[%s5 + $0x38] sm:$0xff]
        %v5724 = vld [vmem:[%s5 + $0x40] sm:$0xff]
        %v5725 = vld [vmem:[%s5 + $0x48] sm:$0xff]
        %v5726 = vld [vmem:[%s5 + $0x50] sm:$0xff]
        %v5727 = vld [vmem:[%s5 + $0x58] sm:$0xff]
        %v5728 = vld [vmem:[%s5 + $0x60] sm:$0xf]
        %v5729 = vld [vmem:[%s6] sm:$0x1]
        %v5731 = vlaneseq
        %v5732 = vshrl.u32 %v5731, 7
        %v5733 = vsub.s32 0, %v5732
        %v5734 = vrot.slane %v5729, %v5733
        %vm5736 = vcmask 818176
        %v5738 = vsel %vm5736, %v5684, 0
        %v5741 = vsel %vm5736, %v5685, 0
        %v5744 = vsel %vm5736, %v5686, 0
        %v5747 = vsel %vm5736, %v5687, 0
        %v5750 = vsel %vm5736, %v5688, 0
        %v5753 = vsel %vm5736, %v5689, 0
        %v5756 = vsel %vm5736, %v5690, 0
        %v5759 = vsel %vm5736, %v5691, 0
        %v5762 = vsel %vm5736, %v5692, 0
        %v5765 = vsel %vm5736, %v5693, 0
        %v5768 = vsel %vm5736, %v5694, 0
        %v5771 = vsel %vm5736, %v5695, 0
        %v5774 = vsel %vm5736, %v5696, 0
        %v5777 = vsel %vm5736, %v5697, 0
        %v5780 = vsel %vm5736, %v5698, 0
        %v5783 = vsel %vm5736, %v5699, 0
        %v5786 = vsel %vm5736, %v5700, 0
        %v5789 = vsel %vm5736, %v5701, 0
        %v5792 = vsel %vm5736, %v5702, 0
        %v5795 = vsel %vm5736, %v5703, 0
        %v5798 = vsel %vm5736, %v5704, 0
        %v5801 = vsel %vm5736, %v5705, 0
        %v5804 = vsel %vm5736, %v5706, 0
        %v5807 = vsel %vm5736, %v5707, 0
        %v5810 = vsel %vm5736, %v5708, 0
        %v5813 = vsel %vm5736, %v5709, 0
        %v5816 = vsel %vm5736, %v5710, 0
        %v5819 = vsel %vm5736, %v5711, 0
        %v5822 = vsel %vm5736, %v5712, 0
        %v5825 = vsel %vm5736, %v5713, 0
        %v5828 = vsel %vm5736, %v5714, 0
        %v5831 = vsel %vm5736, %v5715, 0
        %v5834 = vsel %vm468, %v5728, 0
        %5836 = vmatprep.subr.mxu0 0.0
        %5837 = vmatpush1.msra.mxu0 0.0
        %5838 = vmatprep.subr.mxu0 0.0
        %5839 = vmatpush1.msra.mxu0 0.0
        %5840 = vmatprep.subr.mxu0 0.0
        %5841 = vmatpush1.msra.mxu0 0.0
        %5842 = vmatprep.subr.mxu0 0.0
        %5843 = vmatpush1.msra.mxu0 %v5834
        %5844 = vmatprep.subr.mxu0 0.0
        %5845 = vmatpush1.msra.mxu0 %v5727
        %5846 = vmatprep.subr.mxu0 0.0
        %5847 = vmatpush1.msra.mxu0 %v5726
        %5848 = vmatprep.subr.mxu0 0.0
        %5849 = vmatpush1.msra.mxu0 %v5725
        %5850 = vmatprep.subr.mxu0 0.0
        %5851 = vmatpush1.msra.mxu0 %v5724
        %5852 = vmatprep.subr.mxu0 0.0
        %5853 = vmatpush1.msra.mxu0 %v5723
        %5854 = vmatprep.subr.mxu0 0.0
        %5855 = vmatpush1.msra.mxu0 %v5722
        %5856 = vmatprep.subr.mxu0 0.0
        %5857 = vmatpush1.msra.mxu0 %v5721
        %5858 = vmatprep.subr.mxu0 0.0
        %5859 = vmatpush1.msra.mxu0 %v5720
        %5860 = vmatprep.subr.mxu0 0.0
        %5861 = vmatpush1.msra.mxu0 %v5719
        %5862 = vmatprep.subr.mxu0 0.0
        %5863 = vmatpush1.msra.mxu0 %v5718
        %5864 = vmatprep.subr.mxu0 0.0
        %5865 = vmatpush1.msra.mxu0 %v5717
        %5866 = vmatprep.subr.mxu0 0.0
        %5867 = vmatpush1.msra.mxu0 %v5716
        %5868 = vmatprep.subr.mxu0 0.0
        %5869 = vmatpush2.msra.mxu0 0.0
        %5870 = vmatprep.subr.mxu0 0.0
        %5871 = vmatpush2.msra.mxu0 0.0
        %5872 = vmatprep.subr.mxu0 0.0
        %5873 = vmatpush2.msra.mxu0 0.0
        %5874 = vmatprep.subr.mxu0 0.0
        %5875 = vmatpush2.msra.mxu0 0.0
        %5876 = vmatprep.subr.mxu0 0.0
        %5877 = vmatpush2.msra.mxu0 0.0
        %5878 = vmatprep.subr.mxu0 0.0
        %5879 = vmatpush2.msra.mxu0 0.0
        %5880 = vmatprep.subr.mxu0 0.0
        %5881 = vmatpush2.msra.mxu0 0.0
        %5882 = vmatprep.subr.mxu0 0.0
        %5883 = vmatpush2.msra.mxu0 0.0
        %5884 = vmatprep.subr.mxu0 0.0
        %5885 = vmatpush2.msra.mxu0 0.0
        %5886 = vmatprep.subr.mxu0 0.0
        %5887 = vmatpush2.msra.mxu0 0.0
        %5888 = vmatprep.subr.mxu0 0.0
        %5889 = vmatpush2.msra.mxu0 0.0
        %5890 = vmatprep.subr.mxu0 0.0
        %5891 = vmatpush2.msra.mxu0 0.0
        %5892 = vmatprep.subr.mxu0 0.0
        %5893 = vmatpush2.msra.mxu0 0.0
        %5894 = vmatprep.subr.mxu0 0.0
        %5895 = vmatpush2.msra.mxu0 0.0
        %5896 = vmatprep.subr.mxu0 0.0
        %5897 = vmatpush2.msra.mxu0 0.0
        %5898 = vmatprep.subr.mxu0 0.0
        %5899 = vmatpush2.msra.mxu0 0.0
        %5900 = vmatprep.mubr.f32.mxu0 0.0
        %5901 = vmatmul.mubr.f32.gmra.mxu0 %v5738
        %v5902 = vpop.f32.mrf.mxu0
        %v5903 = vadd.f32 %v5734, %v5902
        %v5904 = vpop.f32.mrf.mxu0
        %5905 = vmatprep.mubr.f32.mxu0 0.0
        %5906 = vmatmul.mubr.f32.gmra.mxu0 %v5741
        %v5907 = vpop.f32.mrf.mxu0
        %v5908 = vadd.f32 %v5734, %v5907
        %v5909 = vpop.f32.mrf.mxu0
        %5910 = vmatprep.mubr.f32.mxu0 0.0
        %5911 = vmatmul.mubr.f32.gmra.mxu0 %v5744
        %v5912 = vpop.f32.mrf.mxu0
        %v5913 = vadd.f32 %v5734, %v5912
        %v5914 = vpop.f32.mrf.mxu0
        %5915 = vmatprep.mubr.f32.mxu0 0.0
        %5916 = vmatmul.mubr.f32.gmra.mxu0 %v5747
        %v5917 = vpop.f32.mrf.mxu0
        %v5918 = vadd.f32 %v5734, %v5917
        %v5919 = vpop.f32.mrf.mxu0
        %5920 = vmatprep.mubr.f32.mxu0 0.0
        %5921 = vmatmul.mubr.f32.gmra.mxu0 %v5750
        %v5922 = vpop.f32.mrf.mxu0
        %v5923 = vadd.f32 %v5734, %v5922
        %v5924 = vpop.f32.mrf.mxu0
        %5925 = vmatprep.mubr.f32.mxu0 0.0
        %5926 = vmatmul.mubr.f32.gmra.mxu0 %v5753
        %v5927 = vpop.f32.mrf.mxu0
        %v5928 = vadd.f32 %v5734, %v5927
        %v5929 = vpop.f32.mrf.mxu0
        %5930 = vmatprep.mubr.f32.mxu0 0.0
        %5931 = vmatmul.mubr.f32.gmra.mxu0 %v5756
        %v5932 = vpop.f32.mrf.mxu0
        %v5933 = vadd.f32 %v5734, %v5932
        %v5934 = vpop.f32.mrf.mxu0
        %5935 = vmatprep.mubr.f32.mxu0 0.0
        %5936 = vmatmul.mubr.f32.gmra.mxu0 %v5759
        %v5937 = vpop.f32.mrf.mxu0
        %v5938 = vadd.f32 %v5734, %v5937
        %v5939 = vpop.f32.mrf.mxu0
        %5940 = vmatprep.mubr.f32.mxu0 0.0
        %5941 = vmatmul.mubr.f32.gmra.mxu0 %v5762
        %v5942 = vpop.f32.mrf.mxu0
        %v5943 = vadd.f32 %v5734, %v5942
        %v5944 = vpop.f32.mrf.mxu0
        %5945 = vmatprep.mubr.f32.mxu0 0.0
        %5946 = vmatmul.mubr.f32.gmra.mxu0 %v5765
        %v5947 = vpop.f32.mrf.mxu0
        %v5948 = vadd.f32 %v5734, %v5947
        %v5949 = vpop.f32.mrf.mxu0
        %5950 = vmatprep.mubr.f32.mxu0 0.0
        %5951 = vmatmul.mubr.f32.gmra.mxu0 %v5768
        %v5952 = vpop.f32.mrf.mxu0
        %v5953 = vadd.f32 %v5734, %v5952
        %v5954 = vpop.f32.mrf.mxu0
        %5955 = vmatprep.mubr.f32.mxu0 0.0
        %5956 = vmatmul.mubr.f32.gmra.mxu0 %v5771
        %v5957 = vpop.f32.mrf.mxu0
        %v5958 = vadd.f32 %v5734, %v5957
        %v5959 = vpop.f32.mrf.mxu0
        %5960 = vmatprep.mubr.f32.mxu0 0.0
        %5961 = vmatmul.mubr.f32.gmra.mxu0 %v5774
        %v5962 = vpop.f32.mrf.mxu0
        %v5963 = vadd.f32 %v5734, %v5962
        %v5964 = vpop.f32.mrf.mxu0
        %5965 = vmatprep.mubr.f32.mxu0 0.0
        %5966 = vmatmul.mubr.f32.gmra.mxu0 %v5777
        %v5967 = vpop.f32.mrf.mxu0
        %v5968 = vadd.f32 %v5734, %v5967
        %v5969 = vpop.f32.mrf.mxu0
        %5970 = vmatprep.mubr.f32.mxu0 0.0
        %5971 = vmatmul.mubr.f32.gmra.mxu0 %v5780
        %v5972 = vpop.f32.mrf.mxu0
        %v5973 = vadd.f32 %v5734, %v5972
        %v5974 = vpop.f32.mrf.mxu0
        %5975 = vmatprep.mubr.f32.mxu0 0.0
        %5976 = vmatmul.mubr.f32.gmra.mxu0 %v5783
        %v5977 = vpop.f32.mrf.mxu0
        %v5978 = vadd.f32 %v5734, %v5977
        %v5979 = vpop.f32.mrf.mxu0
        %5980 = vmatprep.mubr.f32.mxu0 0.0
        %5981 = vmatmul.mubr.f32.gmra.mxu0 %v5786
        %v5982 = vpop.f32.mrf.mxu0
        %v5983 = vadd.f32 %v5734, %v5982
        %v5984 = vpop.f32.mrf.mxu0
        %5985 = vmatprep.mubr.f32.mxu0 0.0
        %5986 = vmatmul.mubr.f32.gmra.mxu0 %v5789
        %v5987 = vpop.f32.mrf.mxu0
        %v5988 = vadd.f32 %v5734, %v5987
        %v5989 = vpop.f32.mrf.mxu0
        %5990 = vmatprep.mubr.f32.mxu0 0.0
        %5991 = vmatmul.mubr.f32.gmra.mxu0 %v5792
        %v5992 = vpop.f32.mrf.mxu0
        %v5993 = vadd.f32 %v5734, %v5992
        %v5994 = vpop.f32.mrf.mxu0
        %5995 = vmatprep.mubr.f32.mxu0 0.0
        %5996 = vmatmul.mubr.f32.gmra.mxu0 %v5795
        %v5997 = vpop.f32.mrf.mxu0
        %v5998 = vadd.f32 %v5734, %v5997
        %v5999 = vpop.f32.mrf.mxu0
        %6000 = vmatprep.mubr.f32.mxu0 0.0
        %6001 = vmatmul.mubr.f32.gmra.mxu0 %v5798
        %v6002 = vpop.f32.mrf.mxu0
        %v6003 = vadd.f32 %v5734, %v6002
        %v6004 = vpop.f32.mrf.mxu0
        %6005 = vmatprep.mubr.f32.mxu0 0.0
        %6006 = vmatmul.mubr.f32.gmra.mxu0 %v5801
        %v6007 = vpop.f32.mrf.mxu0
        %v6008 = vadd.f32 %v5734, %v6007
        %v6009 = vpop.f32.mrf.mxu0
        %6010 = vmatprep.mubr.f32.mxu0 0.0
        %6011 = vmatmul.mubr.f32.gmra.mxu0 %v5804
        %v6012 = vpop.f32.mrf.mxu0
        %v6013 = vadd.f32 %v5734, %v6012
        %v6014 = vpop.f32.mrf.mxu0
        %6015 = vmatprep.mubr.f32.mxu0 0.0
        %6016 = vmatmul.mubr.f32.gmra.mxu0 %v5807
        %v6017 = vpop.f32.mrf.mxu0
        %v6018 = vadd.f32 %v5734, %v6017
        %v6019 = vpop.f32.mrf.mxu0
        %6020 = vmatprep.mubr.f32.mxu0 0.0
        %6021 = vmatmul.mubr.f32.gmra.mxu0 %v5810
        %v6022 = vpop.f32.mrf.mxu0
        %v6023 = vadd.f32 %v5734, %v6022
        %v6024 = vpop.f32.mrf.mxu0
        %6025 = vmatprep.mubr.f32.mxu0 0.0
        %6026 = vmatmul.mubr.f32.gmra.mxu0 %v5813
        %v6027 = vpop.f32.mrf.mxu0
        %v6028 = vadd.f32 %v5734, %v6027
        %v6029 = vpop.f32.mrf.mxu0
        %6030 = vmatprep.mubr.f32.mxu0 0.0
        %6031 = vmatmul.mubr.f32.gmra.mxu0 %v5816
        %v6032 = vpop.f32.mrf.mxu0
        %v6033 = vadd.f32 %v5734, %v6032
        %v6034 = vpop.f32.mrf.mxu0
        %6035 = vmatprep.mubr.f32.mxu0 0.0
        %6036 = vmatmul.mubr.f32.gmra.mxu0 %v5819
        %v6037 = vpop.f32.mrf.mxu0
        %v6038 = vadd.f32 %v5734, %v6037
        %v6039 = vpop.f32.mrf.mxu0
        %6040 = vmatprep.mubr.f32.mxu0 0.0
        %6041 = vmatmul.mubr.f32.gmra.mxu0 %v5822
        %v6042 = vpop.f32.mrf.mxu0
        %v6043 = vadd.f32 %v5734, %v6042
        %v6044 = vpop.f32.mrf.mxu0
        %6045 = vmatprep.mubr.f32.mxu0 0.0
        %6046 = vmatmul.mubr.f32.gmra.mxu0 %v5825
        %v6047 = vpop.f32.mrf.mxu0
        %v6048 = vadd.f32 %v5734, %v6047
        %v6049 = vpop.f32.mrf.mxu0
        %6050 = vmatprep.mubr.f32.mxu0 0.0
        %6051 = vmatmul.mubr.f32.gmra.mxu0 %v5828
        %v6052 = vpop.f32.mrf.mxu0
        %v6053 = vadd.f32 %v5734, %v6052
        %v6054 = vpop.f32.mrf.mxu0
        %6055 = vmatprep.mubr.f32.mxu0 0.0
        %6056 = vmatmul.mubr.f32.gmra.mxu0 %v5831
        %v6057 = vpop.f32.mrf.mxu0
        %v6058 = vadd.f32 %v5734, %v6057
        %v6059 = vpop.f32.mrf.mxu0
        %6060 = vdwg.mxu0
        %v6061 = vmax.f32 %v5903, 0.0
        %v6062 = vmax.f32 %v5908, 0.0
        %v6063 = vmax.f32 %v5913, 0.0
        %v6064 = vmax.f32 %v5918, 0.0
        %v6065 = vmax.f32 %v5923, 0.0
        %v6066 = vmax.f32 %v5928, 0.0
        %v6067 = vmax.f32 %v5933, 0.0
        %v6068 = vmax.f32 %v5938, 0.0
        %v6069 = vmax.f32 %v5943, 0.0
        %v6070 = vmax.f32 %v5948, 0.0
        %v6071 = vmax.f32 %v5953, 0.0
        %v6072 = vmax.f32 %v5958, 0.0
        %v6073 = vmax.f32 %v5963, 0.0
        %v6074 = vmax.f32 %v5968, 0.0
        %v6075 = vmax.f32 %v5973, 0.0
        %v6076 = vmax.f32 %v5978, 0.0
        %v6077 = vmax.f32 %v5983, 0.0
        %v6078 = vmax.f32 %v5988, 0.0
        %v6079 = vmax.f32 %v5993, 0.0
        %v6080 = vmax.f32 %v5998, 0.0
        %v6081 = vmax.f32 %v6003, 0.0
        %v6082 = vmax.f32 %v6008, 0.0
        %v6083 = vmax.f32 %v6013, 0.0
        %v6084 = vmax.f32 %v6018, 0.0
        %v6085 = vmax.f32 %v6023, 0.0
        %v6086 = vmax.f32 %v6028, 0.0
        %v6087 = vmax.f32 %v6033, 0.0
        %v6088 = vmax.f32 %v6038, 0.0
        %v6089 = vmax.f32 %v6043, 0.0
        %v6090 = vmax.f32 %v6048, 0.0
        %v6091 = vmax.f32 %v6053, 0.0
        %v6092 = vmax.f32 %v6058, 0.0
        %v6094 = vrot.slane -inf, 1
        %v6095 = vsel %vm920, %v6094, %v6094
        %v6096 = vrot.slane %v331, 1
        %v6097 = vrot.slane %v332, 1
        %v6098 = vsel %vm920, %v6096, %v6097
        %v6099 = vrot.slane %v333, 1
        %v6100 = vrot.slane %v334, 1
        %v6101 = vsel %vm920, %v6099, %v6100
        %v6102 = vrot.slane %v335, 1
        %v6103 = vrot.slane %v336, 1
        %v6104 = vsel %vm920, %v6102, %v6103
        %v6105 = vrot.slane %v337, 1
        %v6106 = vrot.slane %v338, 1
        %v6107 = vsel %vm920, %v6105, %v6106
        %v6108 = vrot.slane %v339, 1
        %v6109 = vrot.slane %v340, 1
        %v6110 = vsel %vm920, %v6108, %v6109
        %v6111 = vrot.slane %v341, 1
        %v6112 = vrot.slane %v342, 1
        %v6113 = vsel %vm920, %v6111, %v6112
        %v6114 = vrot.slane %v343, 1
        %v6115 = vrot.slane %v344, 1
        %v6116 = vsel %vm920, %v6114, %v6115
        %v6117 = vrot.slane %v345, 1
        %v6118 = vrot.slane %v346, 1
        %v6119 = vsel %vm920, %v6117, %v6118
        %v6120 = vrot.slane %v347, 1
        %v6121 = vrot.slane %v348, 1
        %v6122 = vsel %vm920, %v6120, %v6121
        %v6123 = vrot.slane %v349, 1
        %v6124 = vrot.slane %v350, 1
        %v6125 = vsel %vm920, %v6123, %v6124
        %v6126 = vrot.slane %v351, 1
        %v6127 = vrot.slane %v352, 1
        %v6128 = vsel %vm920, %v6126, %v6127
        %v6129 = vrot.slane %v353, 1
        %v6130 = vrot.slane %v354, 1
        %v6131 = vsel %vm920, %v6129, %v6130
        %v6132 = vrot.slane %v355, 1
        %v6133 = vrot.slane %v356, 1
        %v6134 = vsel %vm920, %v6132, %v6133
        %v6135 = vrot.slane %v357, 1
        %v6136 = vrot.slane %v358, 1
        %v6137 = vsel %vm920, %v6135, %v6136
        %v6138 = vrot.slane %v359, 1
        %v6139 = vrot.slane %v360, 1
        %v6140 = vsel %vm920, %v6138, %v6139
        %v6188 = vmax.f32 %v331, %v6098
        %v6189 = vmax.f32 %v332, %v6097
        %v6190 = vmax.f32 %v333, %v6101
        %v6191 = vmax.f32 %v334, %v6100
        %v6192 = vmax.f32 %v335, %v6104
        %v6193 = vmax.f32 %v336, %v6103
        %v6194 = vmax.f32 %v337, %v6107
        %v6195 = vmax.f32 %v338, %v6106
        %v6196 = vmax.f32 %v339, %v6110
        %v6197 = vmax.f32 %v340, %v6109
        %v6198 = vmax.f32 %v341, %v6113
        %v6199 = vmax.f32 %v342, %v6112
        %v6200 = vmax.f32 %v343, %v6116
        %v6201 = vmax.f32 %v344, %v6115
        %v6202 = vmax.f32 %v345, %v6119
        %v6203 = vmax.f32 %v346, %v6118
        %v6204 = vmax.f32 %v347, %v6122
        %v6205 = vmax.f32 %v348, %v6121
        %v6206 = vmax.f32 %v349, %v6125
        %v6207 = vmax.f32 %v350, %v6124
        %v6208 = vmax.f32 %v351, %v6128
        %v6209 = vmax.f32 %v352, %v6127
        %v6210 = vmax.f32 %v353, %v6131
        %v6211 = vmax.f32 %v354, %v6130
        %v6212 = vmax.f32 %v355, %v6134
        %v6213 = vmax.f32 %v356, %v6133
        %v6214 = vmax.f32 %v357, %v6137
        %v6215 = vmax.f32 %v358, %v6136
        %v6216 = vmax.f32 %v359, %v6140
        %v6217 = vmax.f32 %v360, %v6139
        %v6218 = vrot.slane -inf, 2
        %v6219 = vsel %vm2638, %v6218, %v6218
        %v6220 = vrot.slane %v331, 2
        %v6221 = vrot.slane %v332, 2
        %v6222 = vsel %vm2638, %v6220, %v6221
        %v6223 = vsel %vm2638, %v6221, %v6218
        %v6224 = vrot.slane %v333, 2
        %v6225 = vrot.slane %v334, 2
        %v6226 = vsel %vm2638, %v6224, %v6225
        %v6227 = vsel %vm2638, %v6225, %v6218
        %v6228 = vrot.slane %v335, 2
        %v6229 = vrot.slane %v336, 2
        %v6230 = vsel %vm2638, %v6228, %v6229
        %v6231 = vsel %vm2638, %v6229, %v6218
        %v6232 = vrot.slane %v337, 2
        %v6233 = vrot.slane %v338, 2
        %v6234 = vsel %vm2638, %v6232, %v6233
        %v6235 = vsel %vm2638, %v6233, %v6218
        %v6236 = vrot.slane %v339, 2
        %v6237 = vrot.slane %v340, 2
        %v6238 = vsel %vm2638, %v6236, %v6237
        %v6239 = vsel %vm2638, %v6237, %v6218
        %v6240 = vrot.slane %v341, 2
        %v6241 = vrot.slane %v342, 2
        %v6242 = vsel %vm2638, %v6240, %v6241
        %v6243 = vsel %vm2638, %v6241, %v6218
        %v6244 = vrot.slane %v343, 2
        %v6245 = vrot.slane %v344, 2
        %v6246 = vsel %vm2638, %v6244, %v6245
        %v6247 = vsel %vm2638, %v6245, %v6218
        %v6248 = vrot.slane %v345, 2
        %v6249 = vrot.slane %v346, 2
        %v6250 = vsel %vm2638, %v6248, %v6249
        %v6251 = vsel %vm2638, %v6249, %v6218
        %v6252 = vrot.slane %v347, 2
        %v6253 = vrot.slane %v348, 2
        %v6254 = vsel %vm2638, %v6252, %v6253
        %v6255 = vsel %vm2638, %v6253, %v6218
        %v6256 = vrot.slane %v349, 2
        %v6257 = vrot.slane %v350, 2
        %v6258 = vsel %vm2638, %v6256, %v6257
        %v6259 = vsel %vm2638, %v6257, %v6218
        %v6260 = vrot.slane %v351, 2
        %v6261 = vrot.slane %v352, 2
        %v6262 = vsel %vm2638, %v6260, %v6261
        %v6263 = vsel %vm2638, %v6261, %v6218
        %v6264 = vrot.slane %v353, 2
        %v6265 = vrot.slane %v354, 2
        %v6266 = vsel %vm2638, %v6264, %v6265
        %v6267 = vsel %vm2638, %v6265, %v6218
        %v6268 = vrot.slane %v355, 2
        %v6269 = vrot.slane %v356, 2
        %v6270 = vsel %vm2638, %v6268, %v6269
        %v6271 = vsel %vm2638, %v6269, %v6218
        %v6272 = vrot.slane %v357, 2
        %v6273 = vrot.slane %v358, 2
        %v6274 = vsel %vm2638, %v6272, %v6273
        %v6275 = vsel %vm2638, %v6273, %v6218
        %v6276 = vrot.slane %v359, 2
        %v6277 = vrot.slane %v360, 2
        %v6278 = vsel %vm2638, %v6276, %v6277
        %v6279 = vsel %vm2638, %v6277, %v6218
        %v6327 = vmax.f32 %v6094, %v6218
        %v6328 = vmax.f32 %v6095, %v6219
        %v6329 = vmax.f32 %v6094, %v6219
        %v6330 = vmax.f32 %v6096, %v6220
        %v6331 = vmax.f32 %v6188, %v6222
        %v6332 = vmax.f32 %v6189, %v6223
        %v6333 = vmax.f32 %v6099, %v6224
        %v6334 = vmax.f32 %v6190, %v6226
        %v6335 = vmax.f32 %v6191, %v6227
        %v6336 = vmax.f32 %v6102, %v6228
        %v6337 = vmax.f32 %v6192, %v6230
        %v6338 = vmax.f32 %v6193, %v6231
        %v6339 = vmax.f32 %v6105, %v6232
        %v6340 = vmax.f32 %v6194, %v6234
        %v6341 = vmax.f32 %v6195, %v6235
        %v6342 = vmax.f32 %v6108, %v6236
        %v6343 = vmax.f32 %v6196, %v6238
        %v6344 = vmax.f32 %v6197, %v6239
        %v6345 = vmax.f32 %v6111, %v6240
        %v6346 = vmax.f32 %v6198, %v6242
        %v6347 = vmax.f32 %v6199, %v6243
        %v6348 = vmax.f32 %v6114, %v6244
        %v6349 = vmax.f32 %v6200, %v6246
        %v6350 = vmax.f32 %v6201, %v6247
        %v6351 = vmax.f32 %v6117, %v6248
        %v6352 = vmax.f32 %v6202, %v6250
        %v6353 = vmax.f32 %v6203, %v6251
        %v6354 = vmax.f32 %v6120, %v6252
        %v6355 = vmax.f32 %v6204, %v6254
        %v6356 = vmax.f32 %v6205, %v6255
        %v6357 = vmax.f32 %v6123, %v6256
        %v6358 = vmax.f32 %v6206, %v6258
        %v6359 = vmax.f32 %v6207, %v6259
        %v6360 = vmax.f32 %v6126, %v6260
        %v6361 = vmax.f32 %v6208, %v6262
        %v6362 = vmax.f32 %v6209, %v6263
        %v6363 = vmax.f32 %v6129, %v6264
        %v6364 = vmax.f32 %v6210, %v6266
        %v6365 = vmax.f32 %v6211, %v6267
        %v6366 = vmax.f32 %v6132, %v6268
        %v6367 = vmax.f32 %v6212, %v6270
        %v6368 = vmax.f32 %v6213, %v6271
        %v6369 = vmax.f32 %v6135, %v6272
        %v6370 = vmax.f32 %v6214, %v6274
        %v6371 = vmax.f32 %v6215, %v6275
        %v6372 = vmax.f32 %v6138, %v6276
        %v6373 = vmax.f32 %v6216, %v6278
        %v6374 = vmax.f32 %v6217, %v6279
        %v6375 = vmax.f32 %v6328, %v331
        %v6376 = vmax.f32 %v6329, %v332
        %v6377 = vmax.f32 %v6331, %v333
        %v6378 = vmax.f32 %v6332, %v334
        %v6379 = vmax.f32 %v6334, %v335
        %v6380 = vmax.f32 %v6335, %v336
        %v6381 = vmax.f32 %v6337, %v337
        %v6382 = vmax.f32 %v6338, %v338
        %v6383 = vmax.f32 %v6340, %v339
        %v6384 = vmax.f32 %v6341, %v340
        %v6385 = vmax.f32 %v6343, %v341
        %v6386 = vmax.f32 %v6344, %v342
        %v6387 = vmax.f32 %v6346, %v343
        %v6388 = vmax.f32 %v6347, %v344
        %v6389 = vmax.f32 %v6349, %v345
        %v6390 = vmax.f32 %v6350, %v346
        %v6391 = vmax.f32 %v6352, %v347
        %v6392 = vmax.f32 %v6353, %v348
        %v6393 = vmax.f32 %v6355, %v349
        %v6394 = vmax.f32 %v6356, %v350
        %v6395 = vmax.f32 %v6358, %v351
        %v6396 = vmax.f32 %v6359, %v352
        %v6397 = vmax.f32 %v6361, %v353
        %v6398 = vmax.f32 %v6362, %v354
        %v6399 = vmax.f32 %v6364, %v355
        %v6400 = vmax.f32 %v6365, %v356
        %v6401 = vmax.f32 %v6367, %v357
        %v6402 = vmax.f32 %v6368, %v358
        %v6403 = vmax.f32 %v6370, %v359
        %v6404 = vmax.f32 %v6371, %v360
        %v6405 = vmax.f32 %v6373, %v361
        %v6406 = vmax.f32 %v6374, %v362
        %v6407 = vrot.slane %v361, 1
        %v6408 = vrot.slane %v362, 1
        %v6409 = vsel %vm920, %v6407, %v6408
        %v6413 = vmax.f32 %v6327, %v6096
        %v6414 = vmax.f32 %v6375, %v6098
        %v6415 = vmax.f32 %v6376, %v6097
        %v6416 = vmax.f32 %v6330, %v6099
        %v6417 = vmax.f32 %v6377, %v6101
        %v6418 = vmax.f32 %v6378, %v6100
        %v6419 = vmax.f32 %v6333, %v6102
        %v6420 = vmax.f32 %v6379, %v6104
        %v6421 = vmax.f32 %v6380, %v6103
        %v6422 = vmax.f32 %v6336, %v6105
        %v6423 = vmax.f32 %v6381, %v6107
        %v6424 = vmax.f32 %v6382, %v6106
        %v6425 = vmax.f32 %v6339, %v6108
        %v6426 = vmax.f32 %v6383, %v6110
        %v6427 = vmax.f32 %v6384, %v6109
        %v6428 = vmax.f32 %v6342, %v6111
        %v6429 = vmax.f32 %v6385, %v6113
        %v6430 = vmax.f32 %v6386, %v6112
        %v6431 = vmax.f32 %v6345, %v6114
        %v6432 = vmax.f32 %v6387, %v6116
        %v6433 = vmax.f32 %v6388, %v6115
        %v6434 = vmax.f32 %v6348, %v6117
        %v6435 = vmax.f32 %v6389, %v6119
        %v6436 = vmax.f32 %v6390, %v6118
        %v6437 = vmax.f32 %v6351, %v6120
        %v6438 = vmax.f32 %v6391, %v6122
        %v6439 = vmax.f32 %v6392, %v6121
        %v6440 = vmax.f32 %v6354, %v6123
        %v6441 = vmax.f32 %v6393, %v6125
        %v6442 = vmax.f32 %v6394, %v6124
        %v6443 = vmax.f32 %v6357, %v6126
        %v6444 = vmax.f32 %v6395, %v6128
        %v6445 = vmax.f32 %v6396, %v6127
        %v6446 = vmax.f32 %v6360, %v6129
        %v6447 = vmax.f32 %v6397, %v6131
        %v6448 = vmax.f32 %v6398, %v6130
        %v6449 = vmax.f32 %v6363, %v6132
        %v6450 = vmax.f32 %v6399, %v6134
        %v6451 = vmax.f32 %v6400, %v6133
        %v6452 = vmax.f32 %v6366, %v6135
        %v6453 = vmax.f32 %v6401, %v6137
        %v6454 = vmax.f32 %v6402, %v6136
        %v6455 = vmax.f32 %v6369, %v6138
        %v6456 = vmax.f32 %v6403, %v6140
        %v6457 = vmax.f32 %v6404, %v6139
        %v6458 = vmax.f32 %v6372, %v6407
        %v6459 = vmax.f32 %v6405, %v6409
        %v6460 = vmax.f32 %v6406, %v6408
        %v6461 = vrot.slane %v361, 2
        %v6462 = vrot.slane %v362, 2
        %v6463 = vsel %vm2638, %v6461, %v6462
        %v6464 = vsel %vm2638, %v6462, %v6218
        %v6468 = vmax.f32 %v6413, %v6220
        %v6469 = vmax.f32 %v6414, %v6222
        %v6470 = vmax.f32 %v6415, %v6223
        %v6471 = vmax.f32 %v6416, %v6224
        %v6472 = vmax.f32 %v6417, %v6226
        %v6473 = vmax.f32 %v6418, %v6227
        %v6474 = vmax.f32 %v6419, %v6228
        %v6475 = vmax.f32 %v6420, %v6230
        %v6476 = vmax.f32 %v6421, %v6231
        %v6477 = vmax.f32 %v6422, %v6232
        %v6478 = vmax.f32 %v6423, %v6234
        %v6479 = vmax.f32 %v6424, %v6235
        %v6480 = vmax.f32 %v6425, %v6236
        %v6481 = vmax.f32 %v6426, %v6238
        %v6482 = vmax.f32 %v6427, %v6239
        %v6483 = vmax.f32 %v6428, %v6240
        %v6484 = vmax.f32 %v6429, %v6242
        %v6485 = vmax.f32 %v6430, %v6243
        %v6486 = vmax.f32 %v6431, %v6244
        %v6487 = vmax.f32 %v6432, %v6246
        %v6488 = vmax.f32 %v6433, %v6247
        %v6489 = vmax.f32 %v6434, %v6248
        %v6490 = vmax.f32 %v6435, %v6250
        %v6491 = vmax.f32 %v6436, %v6251
        %v6492 = vmax.f32 %v6437, %v6252
        %v6493 = vmax.f32 %v6438, %v6254
        %v6494 = vmax.f32 %v6439, %v6255
        %v6495 = vmax.f32 %v6440, %v6256
        %v6496 = vmax.f32 %v6441, %v6258
        %v6497 = vmax.f32 %v6442, %v6259
        %v6498 = vmax.f32 %v6443, %v6260
        %v6499 = vmax.f32 %v6444, %v6262
        %v6500 = vmax.f32 %v6445, %v6263
        %v6501 = vmax.f32 %v6446, %v6264
        %v6502 = vmax.f32 %v6447, %v6266
        %v6503 = vmax.f32 %v6448, %v6267
        %v6504 = vmax.f32 %v6449, %v6268
        %v6505 = vmax.f32 %v6450, %v6270
        %v6506 = vmax.f32 %v6451, %v6271
        %v6507 = vmax.f32 %v6452, %v6272
        %v6508 = vmax.f32 %v6453, %v6274
        %v6509 = vmax.f32 %v6454, %v6275
        %v6510 = vmax.f32 %v6455, %v6276
        %v6511 = vmax.f32 %v6456, %v6278
        %v6512 = vmax.f32 %v6457, %v6279
        %v6513 = vmax.f32 %v6458, %v6461
        %v6514 = vmax.f32 %v6459, %v6463
        %v6515 = vmax.f32 %v6460, %v6464
        %v6516 = vmax.f32 %v6469, %v333
        %v6517 = vmax.f32 %v6470, %v334
        %v6518 = vmax.f32 %v6472, %v335
        %v6519 = vmax.f32 %v6473, %v336
        %v6520 = vmax.f32 %v6475, %v337
        %v6521 = vmax.f32 %v6476, %v338
        %v6522 = vmax.f32 %v6478, %v339
        %v6523 = vmax.f32 %v6479, %v340
        %v6524 = vmax.f32 %v6481, %v341
        %v6525 = vmax.f32 %v6482, %v342
        %v6526 = vmax.f32 %v6484, %v343
        %v6527 = vmax.f32 %v6485, %v344
        %v6528 = vmax.f32 %v6487, %v345
        %v6529 = vmax.f32 %v6488, %v346
        %v6530 = vmax.f32 %v6490, %v347
        %v6531 = vmax.f32 %v6491, %v348
        %v6532 = vmax.f32 %v6493, %v349
        %v6533 = vmax.f32 %v6494, %v350
        %v6534 = vmax.f32 %v6496, %v351
        %v6535 = vmax.f32 %v6497, %v352
        %v6536 = vmax.f32 %v6499, %v353
        %v6537 = vmax.f32 %v6500, %v354
        %v6538 = vmax.f32 %v6502, %v355
        %v6539 = vmax.f32 %v6503, %v356
        %v6540 = vmax.f32 %v6505, %v357
        %v6541 = vmax.f32 %v6506, %v358
        %v6542 = vmax.f32 %v6508, %v359
        %v6543 = vmax.f32 %v6509, %v360
        %v6544 = vmax.f32 %v6511, %v361
        %v6545 = vmax.f32 %v6512, %v362
        %v6546 = vmax.f32 %v6468, %v6099
        %v6547 = vmax.f32 %v6516, %v6101
        %v6548 = vmax.f32 %v6517, %v6100
        %v6549 = vmax.f32 %v6471, %v6102
        %v6550 = vmax.f32 %v6518, %v6104
        %v6551 = vmax.f32 %v6519, %v6103
        %v6552 = vmax.f32 %v6474, %v6105
        %v6553 = vmax.f32 %v6520, %v6107
        %v6554 = vmax.f32 %v6521, %v6106
        %v6555 = vmax.f32 %v6477, %v6108
        %v6556 = vmax.f32 %v6522, %v6110
        %v6557 = vmax.f32 %v6523, %v6109
        %v6558 = vmax.f32 %v6480, %v6111
        %v6559 = vmax.f32 %v6524, %v6113
        %v6560 = vmax.f32 %v6525, %v6112
        %v6561 = vmax.f32 %v6483, %v6114
        %v6562 = vmax.f32 %v6526, %v6116
        %v6563 = vmax.f32 %v6527, %v6115
        %v6564 = vmax.f32 %v6486, %v6117
        %v6565 = vmax.f32 %v6528, %v6119
        %v6566 = vmax.f32 %v6529, %v6118
        %v6567 = vmax.f32 %v6489, %v6120
        %v6568 = vmax.f32 %v6530, %v6122
        %v6569 = vmax.f32 %v6531, %v6121
        %v6570 = vmax.f32 %v6492, %v6123
        %v6571 = vmax.f32 %v6532, %v6125
        %v6572 = vmax.f32 %v6533, %v6124
        %v6573 = vmax.f32 %v6495, %v6126
        %v6574 = vmax.f32 %v6534, %v6128
        %v6575 = vmax.f32 %v6535, %v6127
        %v6576 = vmax.f32 %v6498, %v6129
        %v6577 = vmax.f32 %v6536, %v6131
        %v6578 = vmax.f32 %v6537, %v6130
        %v6579 = vmax.f32 %v6501, %v6132
        %v6580 = vmax.f32 %v6538, %v6134
        %v6581 = vmax.f32 %v6539, %v6133
        %v6582 = vmax.f32 %v6504, %v6135
        %v6583 = vmax.f32 %v6540, %v6137
        %v6584 = vmax.f32 %v6541, %v6136
        %v6585 = vmax.f32 %v6507, %v6138
        %v6586 = vmax.f32 %v6542, %v6140
        %v6587 = vmax.f32 %v6543, %v6139
        %v6588 = vmax.f32 %v6510, %v6407
        %v6589 = vmax.f32 %v6544, %v6409
        %v6590 = vmax.f32 %v6545, %v6408
        %v6591 = vmax.f32 %v6513, %v6094
        %v6592 = vmax.f32 %v6514, %v6095
        %v6593 = vmax.f32 %v6515, %v6094
        %v6594 = vmax.f32 %v6546, %v6224
        %v6595 = vmax.f32 %v6547, %v6226
        %v6596 = vmax.f32 %v6548, %v6227
        %v6597 = vmax.f32 %v6549, %v6228
        %v6598 = vmax.f32 %v6550, %v6230
        %v6599 = vmax.f32 %v6551, %v6231
        %v6600 = vmax.f32 %v6552, %v6232
        %v6601 = vmax.f32 %v6553, %v6234
        %v6602 = vmax.f32 %v6554, %v6235
        %v6603 = vmax.f32 %v6555, %v6236
        %v6604 = vmax.f32 %v6556, %v6238
        %v6605 = vmax.f32 %v6557, %v6239
        %v6606 = vmax.f32 %v6558, %v6240
        %v6607 = vmax.f32 %v6559, %v6242
        %v6608 = vmax.f32 %v6560, %v6243
        %v6609 = vmax.f32 %v6561, %v6244
        %v6610 = vmax.f32 %v6562, %v6246
        %v6611 = vmax.f32 %v6563, %v6247
        %v6612 = vmax.f32 %v6564, %v6248
        %v6613 = vmax.f32 %v6565, %v6250
        %v6614 = vmax.f32 %v6566, %v6251
        %v6615 = vmax.f32 %v6567, %v6252
        %v6616 = vmax.f32 %v6568, %v6254
        %v6617 = vmax.f32 %v6569, %v6255
        %v6618 = vmax.f32 %v6570, %v6256
        %v6619 = vmax.f32 %v6571, %v6258
        %v6620 = vmax.f32 %v6572, %v6259
        %v6621 = vmax.f32 %v6573, %v6260
        %v6622 = vmax.f32 %v6574, %v6262
        %v6623 = vmax.f32 %v6575, %v6263
        %v6624 = vmax.f32 %v6576, %v6264
        %v6625 = vmax.f32 %v6577, %v6266
        %v6626 = vmax.f32 %v6578, %v6267
        %v6627 = vmax.f32 %v6579, %v6268
        %v6628 = vmax.f32 %v6580, %v6270
        %v6629 = vmax.f32 %v6581, %v6271
        %v6630 = vmax.f32 %v6582, %v6272
        %v6631 = vmax.f32 %v6583, %v6274
        %v6632 = vmax.f32 %v6584, %v6275
        %v6633 = vmax.f32 %v6585, %v6276
        %v6634 = vmax.f32 %v6586, %v6278
        %v6635 = vmax.f32 %v6587, %v6279
        %v6636 = vmax.f32 %v6588, %v6461
        %v6637 = vmax.f32 %v6589, %v6463
        %v6638 = vmax.f32 %v6590, %v6464
        %v6639 = vmax.f32 %v6591, %v6218
        %v6640 = vmax.f32 %v6592, %v6219
        %v6641 = vmax.f32 %v6593, %v6219
        %v6690 = vrot.slane %v6594, 7
        %v6691 = vrot.slane %v6595, 7
        %v6692 = vsel %vm826, %v6690, %v6691
        %v6693 = vrot.slane %v6596, 7
        %v6694 = vsel %vm826, %v6691, %v6693
        %v6695 = vrot.slane %v6597, 7
        %v6696 = vrot.slane %v6598, 7
        %v6697 = vsel %vm826, %v6695, %v6696
        %v6698 = vrot.slane %v6599, 7
        %v6699 = vsel %vm826, %v6696, %v6698
        %v6700 = vrot.slane %v6600, 7
        %v6701 = vrot.slane %v6601, 7
        %v6702 = vsel %vm826, %v6700, %v6701
        %v6703 = vrot.slane %v6602, 7
        %v6704 = vsel %vm826, %v6701, %v6703
        %v6705 = vrot.slane %v6603, 7
        %v6706 = vrot.slane %v6604, 7
        %v6707 = vsel %vm826, %v6705, %v6706
        %v6708 = vrot.slane %v6605, 7
        %v6709 = vsel %vm826, %v6706, %v6708
        %v6710 = vrot.slane %v6606, 7
        %v6711 = vrot.slane %v6607, 7
        %v6712 = vsel %vm826, %v6710, %v6711
        %v6713 = vrot.slane %v6608, 7
        %v6714 = vsel %vm826, %v6711, %v6713
        %v6715 = vrot.slane %v6609, 7
        %v6716 = vrot.slane %v6610, 7
        %v6717 = vsel %vm826, %v6715, %v6716
        %v6718 = vrot.slane %v6611, 7
        %v6719 = vsel %vm826, %v6716, %v6718
        %v6720 = vrot.slane %v6612, 7
        %v6721 = vrot.slane %v6613, 7
        %v6722 = vsel %vm826, %v6720, %v6721
        %v6723 = vrot.slane %v6614, 7
        %v6724 = vsel %vm826, %v6721, %v6723
        %v6725 = vrot.slane %v6615, 7
        %v6726 = vrot.slane %v6616, 7
        %v6727 = vsel %vm826, %v6725, %v6726
        %v6728 = vrot.slane %v6617, 7
        %v6729 = vsel %vm826, %v6726, %v6728
        %v6730 = vrot.slane %v6618, 7
        %v6731 = vrot.slane %v6619, 7
        %v6732 = vsel %vm826, %v6730, %v6731
        %v6733 = vrot.slane %v6620, 7
        %v6734 = vsel %vm826, %v6731, %v6733
        %v6735 = vrot.slane %v6621, 7
        %v6736 = vrot.slane %v6622, 7
        %v6737 = vsel %vm826, %v6735, %v6736
        %v6738 = vrot.slane %v6623, 7
        %v6739 = vsel %vm826, %v6736, %v6738
        %v6740 = vrot.slane %v6624, 7
        %v6741 = vrot.slane %v6625, 7
        %v6742 = vsel %vm826, %v6740, %v6741
        %v6743 = vrot.slane %v6626, 7
        %v6744 = vsel %vm826, %v6741, %v6743
        %v6745 = vrot.slane %v6627, 7
        %v6746 = vrot.slane %v6628, 7
        %v6747 = vsel %vm826, %v6745, %v6746
        %v6748 = vrot.slane %v6629, 7
        %v6749 = vsel %vm826, %v6746, %v6748
        %v6750 = vrot.slane %v6630, 7
        %v6751 = vrot.slane %v6631, 7
        %v6752 = vsel %vm826, %v6750, %v6751
        %v6753 = vrot.slane %v6632, 7
        %v6754 = vsel %vm826, %v6751, %v6753
        %v6755 = vrot.slane %v6633, 7
        %v6756 = vrot.slane %v6634, 7
        %v6757 = vsel %vm826, %v6755, %v6756
        %v6758 = vrot.slane %v6635, 7
        %v6759 = vsel %vm826, %v6756, %v6758
        %v6760 = vrot.slane %v6636, 7
        %v6761 = vrot.slane %v6637, 7
        %v6762 = vsel %vm826, %v6760, %v6761
        %v6763 = vrot.slane %v6638, 7
        %v6764 = vsel %vm826, %v6761, %v6763
        %v6765 = vrot.slane %v6639, 7
        %v6766 = vrot.slane %v6640, 7
        %v6767 = vsel %vm826, %v6765, %v6766
        %v6768 = vrot.slane %v6641, 7
        %v6769 = vsel %vm826, %v6766, %v6768
        %v6770 = vld [vmem:[%s7] sm:$0xf]
        %v6771 = vld [vmem:[%s8] sm:$0x1]
        %v6773 = vlaneseq
        %v6774 = vshrl.u32 %v6773, 7
        %v6775 = vsub.s32 0, %v6774
        %v6776 = vrot.slane %v6771, %v6775
        %v6778 = vsel %vm371, %v6692, 0
        %v6780 = vsel %vm371, %v6694, 0
        %v6782 = vsel %vm371, %v6697, 0
        %v6784 = vsel %vm371, %v6699, 0
        %v6786 = vsel %vm371, %v6702, 0
        %v6788 = vsel %vm371, %v6704, 0
        %v6790 = vsel %vm371, %v6707, 0
        %v6792 = vsel %vm371, %v6709, 0
        %v6794 = vsel %vm371, %v6712, 0
        %v6796 = vsel %vm371, %v6714, 0
        %v6798 = vsel %vm371, %v6717, 0
        %v6800 = vsel %vm371, %v6719, 0
        %v6802 = vsel %vm371, %v6722, 0
        %v6804 = vsel %vm371, %v6724, 0
        %v6806 = vsel %vm371, %v6727, 0
        %v6808 = vsel %vm371, %v6729, 0
        %v6810 = vsel %vm371, %v6732, 0
        %v6812 = vsel %vm371, %v6734, 0
        %v6814 = vsel %vm371, %v6737, 0
        %v6816 = vsel %vm371, %v6739, 0
        %v6818 = vsel %vm371, %v6742, 0
        %v6820 = vsel %vm371, %v6744, 0
        %v6822 = vsel %vm371, %v6747, 0
        %v6824 = vsel %vm371, %v6749, 0
        %v6826 = vsel %vm371, %v6752, 0
        %v6828 = vsel %vm371, %v6754, 0
        %v6830 = vsel %vm371, %v6757, 0
        %v6832 = vsel %vm371, %v6759, 0
        %v6834 = vsel %vm371, %v6762, 0
        %v6836 = vsel %vm371, %v6764, 0
        %v6838 = vsel %vm371, %v6767, 0
        %v6840 = vsel %vm371, %v6769, 0
        %v6843 = vsel %vm468, %v6770, 0
        %6845 = vmatprep.subr.mxu0 0.0
        %6846 = vmatpush1.msra.mxu0 0.0
        %6847 = vmatprep.subr.mxu0 0.0
        %6848 = vmatpush1.msra.mxu0 0.0
        %6849 = vmatprep.subr.mxu0 0.0
        %6850 = vmatpush1.msra.mxu0 0.0
        %6851 = vmatprep.subr.mxu0 0.0
        %6852 = vmatpush1.msra.mxu0 0.0
        %6853 = vmatprep.subr.mxu0 0.0
        %6854 = vmatpush1.msra.mxu0 0.0
        %6855 = vmatprep.subr.mxu0 0.0
        %6856 = vmatpush1.msra.mxu0 0.0
        %6857 = vmatprep.subr.mxu0 0.0
        %6858 = vmatpush1.msra.mxu0 0.0
        %6859 = vmatprep.subr.mxu0 0.0
        %6860 = vmatpush1.msra.mxu0 0.0
        %6861 = vmatprep.subr.mxu0 0.0
        %6862 = vmatpush1.msra.mxu0 0.0
        %6863 = vmatprep.subr.mxu0 0.0
        %6864 = vmatpush1.msra.mxu0 0.0
        %6865 = vmatprep.subr.mxu0 0.0
        %6866 = vmatpush1.msra.mxu0 0.0
        %6867 = vmatprep.subr.mxu0 0.0
        %6868 = vmatpush1.msra.mxu0 0.0
        %6869 = vmatprep.subr.mxu0 0.0
        %6870 = vmatpush1.msra.mxu0 0.0
        %6871 = vmatprep.subr.mxu0 0.0
        %6872 = vmatpush1.msra.mxu0 0.0
        %6873 = vmatprep.subr.mxu0 0.0
        %6874 = vmatpush1.msra.mxu0 0.0
        %6875 = vmatprep.subr.mxu0 0.0
        %6876 = vmatpush1.msra.mxu0 %v6843
        %6877 = vmatprep.subr.mxu0 0.0
        %6878 = vmatpush2.msra.mxu0 0.0
        %6879 = vmatprep.subr.mxu0 0.0
        %6880 = vmatpush2.msra.mxu0 0.0
        %6881 = vmatprep.subr.mxu0 0.0
        %6882 = vmatpush2.msra.mxu0 0.0
        %6883 = vmatprep.subr.mxu0 0.0
        %6884 = vmatpush2.msra.mxu0 0.0
        %6885 = vmatprep.subr.mxu0 0.0
        %6886 = vmatpush2.msra.mxu0 0.0
        %6887 = vmatprep.subr.mxu0 0.0
        %6888 = vmatpush2.msra.mxu0 0.0
        %6889 = vmatprep.subr.mxu0 0.0
        %6890 = vmatpush2.msra.mxu0 0.0
        %6891 = vmatprep.subr.mxu0 0.0
        %6892 = vmatpush2.msra.mxu0 0.0
        %6893 = vmatprep.subr.mxu0 0.0
        %6894 = vmatpush2.msra.mxu0 0.0
        %6895 = vmatprep.subr.mxu0 0.0
        %6896 = vmatpush2.msra.mxu0 0.0
        %6897 = vmatprep.subr.mxu0 0.0
        %6898 = vmatpush2.msra.mxu0 0.0
        %6899 = vmatprep.subr.mxu0 0.0
        %6900 = vmatpush2.msra.mxu0 0.0
        %6901 = vmatprep.subr.mxu0 0.0
        %6902 = vmatpush2.msra.mxu0 0.0
        %6903 = vmatprep.subr.mxu0 0.0
        %6904 = vmatpush2.msra.mxu0 0.0
        %6905 = vmatprep.subr.mxu0 0.0
        %6906 = vmatpush2.msra.mxu0 0.0
        %6907 = vmatprep.subr.mxu0 0.0
        %6908 = vmatpush2.msra.mxu0 0.0
        %6909 = vmatprep.mubr.f32.mxu0 0.0
        %6910 = vmatmul.mubr.f32.gmra.mxu0 %v6778
        %v6911 = vpop.f32.mrf.mxu0
        %v6912 = vadd.f32 %v6776, %v6911
        %v6913 = vpop.f32.mrf.mxu0
        %6914 = vmatprep.mubr.f32.mxu0 0.0
        %6915 = vmatmul.mubr.f32.gmra.mxu0 %v6780
        %v6916 = vpop.f32.mrf.mxu0
        %v6917 = vadd.f32 %v6776, %v6916
        %v6918 = vpop.f32.mrf.mxu0
        %6919 = vmatprep.mubr.f32.mxu0 0.0
        %6920 = vmatmul.mubr.f32.gmra.mxu0 %v6782
        %v6921 = vpop.f32.mrf.mxu0
        %v6922 = vadd.f32 %v6776, %v6921
        %v6923 = vpop.f32.mrf.mxu0
        %6924 = vmatprep.mubr.f32.mxu0 0.0
        %6925 = vmatmul.mubr.f32.gmra.mxu0 %v6784
        %v6926 = vpop.f32.mrf.mxu0
        %v6927 = vadd.f32 %v6776, %v6926
        %v6928 = vpop.f32.mrf.mxu0
        %6929 = vmatprep.mubr.f32.mxu0 0.0
        %6930 = vmatmul.mubr.f32.gmra.mxu0 %v6786
        %v6931 = vpop.f32.mrf.mxu0
        %v6932 = vadd.f32 %v6776, %v6931
        %v6933 = vpop.f32.mrf.mxu0
        %6934 = vmatprep.mubr.f32.mxu0 0.0
        %6935 = vmatmul.mubr.f32.gmra.mxu0 %v6788
        %v6936 = vpop.f32.mrf.mxu0
        %v6937 = vadd.f32 %v6776, %v6936
        %v6938 = vpop.f32.mrf.mxu0
        %6939 = vmatprep.mubr.f32.mxu0 0.0
        %6940 = vmatmul.mubr.f32.gmra.mxu0 %v6790
        %v6941 = vpop.f32.mrf.mxu0
        %v6942 = vadd.f32 %v6776, %v6941
        %v6943 = vpop.f32.mrf.mxu0
        %6944 = vmatprep.mubr.f32.mxu0 0.0
        %6945 = vmatmul.mubr.f32.gmra.mxu0 %v6792
        %v6946 = vpop.f32.mrf.mxu0
        %v6947 = vadd.f32 %v6776, %v6946
        %v6948 = vpop.f32.mrf.mxu0
        %6949 = vmatprep.mubr.f32.mxu0 0.0
        %6950 = vmatmul.mubr.f32.gmra.mxu0 %v6794
        %v6951 = vpop.f32.mrf.mxu0
        %v6952 = vadd.f32 %v6776, %v6951
        %v6953 = vpop.f32.mrf.mxu0
        %6954 = vmatprep.mubr.f32.mxu0 0.0
        %6955 = vmatmul.mubr.f32.gmra.mxu0 %v6796
        %v6956 = vpop.f32.mrf.mxu0
        %v6957 = vadd.f32 %v6776, %v6956
        %v6958 = vpop.f32.mrf.mxu0
        %6959 = vmatprep.mubr.f32.mxu0 0.0
        %6960 = vmatmul.mubr.f32.gmra.mxu0 %v6798
        %v6961 = vpop.f32.mrf.mxu0
        %v6962 = vadd.f32 %v6776, %v6961
        %v6963 = vpop.f32.mrf.mxu0
        %6964 = vmatprep.mubr.f32.mxu0 0.0
        %6965 = vmatmul.mubr.f32.gmra.mxu0 %v6800
        %v6966 = vpop.f32.mrf.mxu0
        %v6967 = vadd.f32 %v6776, %v6966
        %v6968 = vpop.f32.mrf.mxu0
        %6969 = vmatprep.mubr.f32.mxu0 0.0
        %6970 = vmatmul.mubr.f32.gmra.mxu0 %v6802
        %v6971 = vpop.f32.mrf.mxu0
        %v6972 = vadd.f32 %v6776, %v6971
        %v6973 = vpop.f32.mrf.mxu0
        %6974 = vmatprep.mubr.f32.mxu0 0.0
        %6975 = vmatmul.mubr.f32.gmra.mxu0 %v6804
        %v6976 = vpop.f32.mrf.mxu0
        %v6977 = vadd.f32 %v6776, %v6976
        %v6978 = vpop.f32.mrf.mxu0
        %6979 = vmatprep.mubr.f32.mxu0 0.0
        %6980 = vmatmul.mubr.f32.gmra.mxu0 %v6806
        %v6981 = vpop.f32.mrf.mxu0
        %v6982 = vadd.f32 %v6776, %v6981
        %v6983 = vpop.f32.mrf.mxu0
        %6984 = vmatprep.mubr.f32.mxu0 0.0
        %6985 = vmatmul.mubr.f32.gmra.mxu0 %v6808
        %v6986 = vpop.f32.mrf.mxu0
        %v6987 = vadd.f32 %v6776, %v6986
        %v6988 = vpop.f32.mrf.mxu0
        %6989 = vmatprep.mubr.f32.mxu0 0.0
        %6990 = vmatmul.mubr.f32.gmra.mxu0 %v6810
        %v6991 = vpop.f32.mrf.mxu0
        %v6992 = vadd.f32 %v6776, %v6991
        %v6993 = vpop.f32.mrf.mxu0
        %6994 = vmatprep.mubr.f32.mxu0 0.0
        %6995 = vmatmul.mubr.f32.gmra.mxu0 %v6812
        %v6996 = vpop.f32.mrf.mxu0
        %v6997 = vadd.f32 %v6776, %v6996
        %v6998 = vpop.f32.mrf.mxu0
        %6999 = vmatprep.mubr.f32.mxu0 0.0
        %7000 = vmatmul.mubr.f32.gmra.mxu0 %v6814
        %v7001 = vpop.f32.mrf.mxu0
        %v7002 = vadd.f32 %v6776, %v7001
        %v7003 = vpop.f32.mrf.mxu0
        %7004 = vmatprep.mubr.f32.mxu0 0.0
        %7005 = vmatmul.mubr.f32.gmra.mxu0 %v6816
        %v7006 = vpop.f32.mrf.mxu0
        %v7007 = vadd.f32 %v6776, %v7006
        %v7008 = vpop.f32.mrf.mxu0
        %7009 = vmatprep.mubr.f32.mxu0 0.0
        %7010 = vmatmul.mubr.f32.gmra.mxu0 %v6818
        %v7011 = vpop.f32.mrf.mxu0
        %v7012 = vadd.f32 %v6776, %v7011
        %v7013 = vpop.f32.mrf.mxu0
        %7014 = vmatprep.mubr.f32.mxu0 0.0
        %7015 = vmatmul.mubr.f32.gmra.mxu0 %v6820
        %v7016 = vpop.f32.mrf.mxu0
        %v7017 = vadd.f32 %v6776, %v7016
        %v7018 = vpop.f32.mrf.mxu0
        %7019 = vmatprep.mubr.f32.mxu0 0.0
        %7020 = vmatmul.mubr.f32.gmra.mxu0 %v6822
        %v7021 = vpop.f32.mrf.mxu0
        %v7022 = vadd.f32 %v6776, %v7021
        %v7023 = vpop.f32.mrf.mxu0
        %7024 = vmatprep.mubr.f32.mxu0 0.0
        %7025 = vmatmul.mubr.f32.gmra.mxu0 %v6824
        %v7026 = vpop.f32.mrf.mxu0
        %v7027 = vadd.f32 %v6776, %v7026
        %v7028 = vpop.f32.mrf.mxu0
        %7029 = vmatprep.mubr.f32.mxu0 0.0
        %7030 = vmatmul.mubr.f32.gmra.mxu0 %v6826
        %v7031 = vpop.f32.mrf.mxu0
        %v7032 = vadd.f32 %v6776, %v7031
        %v7033 = vpop.f32.mrf.mxu0
        %7034 = vmatprep.mubr.f32.mxu0 0.0
        %7035 = vmatmul.mubr.f32.gmra.mxu0 %v6828
        %v7036 = vpop.f32.mrf.mxu0
        %v7037 = vadd.f32 %v6776, %v7036
        %v7038 = vpop.f32.mrf.mxu0
        %7039 = vmatprep.mubr.f32.mxu0 0.0
        %7040 = vmatmul.mubr.f32.gmra.mxu0 %v6830
        %v7041 = vpop.f32.mrf.mxu0
        %v7042 = vadd.f32 %v6776, %v7041
        %v7043 = vpop.f32.mrf.mxu0
        %7044 = vmatprep.mubr.f32.mxu0 0.0
        %7045 = vmatmul.mubr.f32.gmra.mxu0 %v6832
        %v7046 = vpop.f32.mrf.mxu0
        %v7047 = vadd.f32 %v6776, %v7046
        %v7048 = vpop.f32.mrf.mxu0
        %7049 = vmatprep.mubr.f32.mxu0 0.0
        %7050 = vmatmul.mubr.f32.gmra.mxu0 %v6834
        %v7051 = vpop.f32.mrf.mxu0
        %v7052 = vadd.f32 %v6776, %v7051
        %v7053 = vpop.f32.mrf.mxu0
        %7054 = vmatprep.mubr.f32.mxu0 0.0
        %7055 = vmatmul.mubr.f32.gmra.mxu0 %v6836
        %v7056 = vpop.f32.mrf.mxu0
        %v7057 = vadd.f32 %v6776, %v7056
        %v7058 = vpop.f32.mrf.mxu0
        %7059 = vmatprep.mubr.f32.mxu0 0.0
        %7060 = vmatmul.mubr.f32.gmra.mxu0 %v6838
        %v7061 = vpop.f32.mrf.mxu0
        %v7062 = vadd.f32 %v6776, %v7061
        %v7063 = vpop.f32.mrf.mxu0
        %7064 = vmatprep.mubr.f32.mxu0 0.0
        %7065 = vmatmul.mubr.f32.gmra.mxu0 %v6840
        %v7066 = vpop.f32.mrf.mxu0
        %v7067 = vadd.f32 %v6776, %v7066
        %v7068 = vpop.f32.mrf.mxu0
        %7069 = vdwg.mxu0
        %v7070 = vmax.f32 %v6912, 0.0
        %v7071 = vmax.f32 %v6917, 0.0
        %v7072 = vmax.f32 %v6922, 0.0
        %v7073 = vmax.f32 %v6927, 0.0
        %v7074 = vmax.f32 %v6932, 0.0
        %v7075 = vmax.f32 %v6937, 0.0
        %v7076 = vmax.f32 %v6942, 0.0
        %v7077 = vmax.f32 %v6947, 0.0
        %v7078 = vmax.f32 %v6952, 0.0
        %v7079 = vmax.f32 %v6957, 0.0
        %v7080 = vmax.f32 %v6962, 0.0
        %v7081 = vmax.f32 %v6967, 0.0
        %v7082 = vmax.f32 %v6972, 0.0
        %v7083 = vmax.f32 %v6977, 0.0
        %v7084 = vmax.f32 %v6982, 0.0
        %v7085 = vmax.f32 %v6987, 0.0
        %v7086 = vmax.f32 %v6992, 0.0
        %v7087 = vmax.f32 %v6997, 0.0
        %v7088 = vmax.f32 %v7002, 0.0
        %v7089 = vmax.f32 %v7007, 0.0
        %v7090 = vmax.f32 %v7012, 0.0
        %v7091 = vmax.f32 %v7017, 0.0
        %v7092 = vmax.f32 %v7022, 0.0
        %v7093 = vmax.f32 %v7027, 0.0
        %v7094 = vmax.f32 %v7032, 0.0
        %v7095 = vmax.f32 %v7037, 0.0
        %v7096 = vmax.f32 %v7042, 0.0
        %v7097 = vmax.f32 %v7047, 0.0
        %v7098 = vmax.f32 %v7052, 0.0
        %v7099 = vmax.f32 %v7057, 0.0
        %v7100 = vmax.f32 %v7062, 0.0
        %v7101 = vmax.f32 %v7067, 0.0
        %7134 = vrot.lane.b32.xlu0 %v2342, 8
        %v7135 = vpop.permute.xlu0 %7134
        %7136 = vrot.lane.b32.xlu0 %v2343, 8
        %v7137 = vpop.permute.xlu0 %7136
        %7138 = vrot.lane.b32.xlu0 %v2344, 8
        %v7139 = vpop.permute.xlu0 %7138
        %7140 = vrot.lane.b32.xlu0 %v2345, 8
        %v7141 = vpop.permute.xlu0 %7140
        %7142 = vrot.lane.b32.xlu0 %v2346, 8
        %v7143 = vpop.permute.xlu0 %7142
        %7144 = vrot.lane.b32.xlu0 %v2347, 8
        %v7145 = vpop.permute.xlu0 %7144
        %7146 = vrot.lane.b32.xlu0 %v2348, 8
        %v7147 = vpop.permute.xlu0 %7146
        %7148 = vrot.lane.b32.xlu0 %v2349, 8
        %v7149 = vpop.permute.xlu0 %7148
        %7150 = vrot.lane.b32.xlu0 %v2350, 8
        %v7151 = vpop.permute.xlu0 %7150
        %7152 = vrot.lane.b32.xlu0 %v2351, 8
        %v7153 = vpop.permute.xlu0 %7152
        %7154 = vrot.lane.b32.xlu0 %v2352, 8
        %v7155 = vpop.permute.xlu0 %7154
        %7156 = vrot.lane.b32.xlu0 %v2353, 8
        %v7157 = vpop.permute.xlu0 %7156
        %7158 = vrot.lane.b32.xlu0 %v2354, 8
        %v7159 = vpop.permute.xlu0 %7158
        %7160 = vrot.lane.b32.xlu0 %v2355, 8
        %v7161 = vpop.permute.xlu0 %7160
        %7162 = vrot.lane.b32.xlu0 %v2356, 8
        %v7163 = vpop.permute.xlu0 %7162
        %7164 = vrot.lane.b32.xlu0 %v2357, 8
        %v7165 = vpop.permute.xlu0 %7164
        %7166 = vrot.lane.b32.xlu0 %v2358, 8
        %v7167 = vpop.permute.xlu0 %7166
        %7168 = vrot.lane.b32.xlu0 %v2359, 8
        %v7169 = vpop.permute.xlu0 %7168
        %7170 = vrot.lane.b32.xlu0 %v2360, 8
        %v7171 = vpop.permute.xlu0 %7170
        %7172 = vrot.lane.b32.xlu0 %v2361, 8
        %v7173 = vpop.permute.xlu0 %7172
        %7174 = vrot.lane.b32.xlu0 %v2362, 8
        %v7175 = vpop.permute.xlu0 %7174
        %7176 = vrot.lane.b32.xlu0 %v2363, 8
        %v7177 = vpop.permute.xlu0 %7176
        %7178 = vrot.lane.b32.xlu0 %v2364, 8
        %v7179 = vpop.permute.xlu0 %7178
        %7180 = vrot.lane.b32.xlu0 %v2365, 8
        %v7181 = vpop.permute.xlu0 %7180
        %7182 = vrot.lane.b32.xlu0 %v2366, 8
        %v7183 = vpop.permute.xlu0 %7182
        %7184 = vrot.lane.b32.xlu0 %v2367, 8
        %v7185 = vpop.permute.xlu0 %7184
        %7186 = vrot.lane.b32.xlu0 %v2368, 8
        %v7187 = vpop.permute.xlu0 %7186
        %7188 = vrot.lane.b32.xlu0 %v2369, 8
        %v7189 = vpop.permute.xlu0 %7188
        %7190 = vrot.lane.b32.xlu0 %v2370, 8
        %v7191 = vpop.permute.xlu0 %7190
        %7192 = vrot.lane.b32.xlu0 %v2371, 8
        %v7193 = vpop.permute.xlu0 %7192
        %7194 = vrot.lane.b32.xlu0 %v2372, 8
        %v7195 = vpop.permute.xlu0 %7194
        %7196 = vrot.lane.b32.xlu0 %v2373, 8
        %v7197 = vpop.permute.xlu0 %7196
        %7262 = vrot.lane.b32.xlu0 %v6061, 16
        %v7263 = vpop.permute.xlu0 %7262
        %7264 = vrot.lane.b32.xlu0 %v6062, 16
        %v7265 = vpop.permute.xlu0 %7264
        %7266 = vrot.lane.b32.xlu0 %v6063, 16
        %v7267 = vpop.permute.xlu0 %7266
        %7268 = vrot.lane.b32.xlu0 %v6064, 16
        %v7269 = vpop.permute.xlu0 %7268
        %7270 = vrot.lane.b32.xlu0 %v6065, 16
        %v7271 = vpop.permute.xlu0 %7270
        %7272 = vrot.lane.b32.xlu0 %v6066, 16
        %v7273 = vpop.permute.xlu0 %7272
        %7274 = vrot.lane.b32.xlu0 %v6067, 16
        %v7275 = vpop.permute.xlu0 %7274
        %7276 = vrot.lane.b32.xlu0 %v6068, 16
        %v7277 = vpop.permute.xlu0 %7276
        %7278 = vrot.lane.b32.xlu0 %v6069, 16
        %v7279 = vpop.permute.xlu0 %7278
        %7280 = vrot.lane.b32.xlu0 %v6070, 16
        %v7281 = vpop.permute.xlu0 %7280
        %7282 = vrot.lane.b32.xlu0 %v6071, 16
        %v7283 = vpop.permute.xlu0 %7282
        %7284 = vrot.lane.b32.xlu0 %v6072, 16
        %v7285 = vpop.permute.xlu0 %7284
        %7286 = vrot.lane.b32.xlu0 %v6073, 16
        %v7287 = vpop.permute.xlu0 %7286
        %7288 = vrot.lane.b32.xlu0 %v6074, 16
        %v7289 = vpop.permute.xlu0 %7288
        %7290 = vrot.lane.b32.xlu0 %v6075, 16
        %v7291 = vpop.permute.xlu0 %7290
        %7292 = vrot.lane.b32.xlu0 %v6076, 16
        %v7293 = vpop.permute.xlu0 %7292
        %7294 = vrot.lane.b32.xlu0 %v6077, 16
        %v7295 = vpop.permute.xlu0 %7294
        %7296 = vrot.lane.b32.xlu0 %v6078, 16
        %v7297 = vpop.permute.xlu0 %7296
        %7298 = vrot.lane.b32.xlu0 %v6079, 16
        %v7299 = vpop.permute.xlu0 %7298
        %7300 = vrot.lane.b32.xlu0 %v6080, 16
        %v7301 = vpop.permute.xlu0 %7300
        %7302 = vrot.lane.b32.xlu0 %v6081, 16
        %v7303 = vpop.permute.xlu0 %7302
        %7304 = vrot.lane.b32.xlu0 %v6082, 16
        %v7305 = vpop.permute.xlu0 %7304
        %7306 = vrot.lane.b32.xlu0 %v6083, 16
        %v7307 = vpop.permute.xlu0 %7306
        %7308 = vrot.lane.b32.xlu0 %v6084, 16
        %v7309 = vpop.permute.xlu0 %7308
        %7310 = vrot.lane.b32.xlu0 %v6085, 16
        %v7311 = vpop.permute.xlu0 %7310
        %7312 = vrot.lane.b32.xlu0 %v6086, 16
        %v7313 = vpop.permute.xlu0 %7312
        %7314 = vrot.lane.b32.xlu0 %v6087, 16
        %v7315 = vpop.permute.xlu0 %7314
        %7316 = vrot.lane.b32.xlu0 %v6088, 16
        %v7317 = vpop.permute.xlu0 %7316
        %7318 = vrot.lane.b32.xlu0 %v6089, 16
        %v7319 = vpop.permute.xlu0 %7318
        %7320 = vrot.lane.b32.xlu0 %v6090, 16
        %v7321 = vpop.permute.xlu0 %7320
        %7322 = vrot.lane.b32.xlu0 %v6091, 16
        %v7323 = vpop.permute.xlu0 %7322
        %7324 = vrot.lane.b32.xlu0 %v6092, 16
        %v7325 = vpop.permute.xlu0 %7324
        %7390 = vrot.lane.b32.xlu0 %v7070, 24
        %v7391 = vpop.permute.xlu0 %7390
        %7392 = vrot.lane.b32.xlu0 %v7071, 24
        %v7393 = vpop.permute.xlu0 %7392
        %7394 = vrot.lane.b32.xlu0 %v7072, 24
        %v7395 = vpop.permute.xlu0 %7394
        %7396 = vrot.lane.b32.xlu0 %v7073, 24
        %v7397 = vpop.permute.xlu0 %7396
        %7398 = vrot.lane.b32.xlu0 %v7074, 24
        %v7399 = vpop.permute.xlu0 %7398
        %7400 = vrot.lane.b32.xlu0 %v7075, 24
        %v7401 = vpop.permute.xlu0 %7400
        %7402 = vrot.lane.b32.xlu0 %v7076, 24
        %v7403 = vpop.permute.xlu0 %7402
        %7404 = vrot.lane.b32.xlu0 %v7077, 24
        %v7405 = vpop.permute.xlu0 %7404
        %7406 = vrot.lane.b32.xlu0 %v7078, 24
        %v7407 = vpop.permute.xlu0 %7406
        %7408 = vrot.lane.b32.xlu0 %v7079, 24
        %v7409 = vpop.permute.xlu0 %7408
        %7410 = vrot.lane.b32.xlu0 %v7080, 24
        %v7411 = vpop.permute.xlu0 %7410
        %7412 = vrot.lane.b32.xlu0 %v7081, 24
        %v7413 = vpop.permute.xlu0 %7412
        %7414 = vrot.lane.b32.xlu0 %v7082, 24
        %v7415 = vpop.permute.xlu0 %7414
        %7416 = vrot.lane.b32.xlu0 %v7083, 24
        %v7417 = vpop.permute.xlu0 %7416
        %7418 = vrot.lane.b32.xlu0 %v7084, 24
        %v7419 = vpop.permute.xlu0 %7418
        %7420 = vrot.lane.b32.xlu0 %v7085, 24
        %v7421 = vpop.permute.xlu0 %7420
        %7422 = vrot.lane.b32.xlu0 %v7086, 24
        %v7423 = vpop.permute.xlu0 %7422
        %7424 = vrot.lane.b32.xlu0 %v7087, 24
        %v7425 = vpop.permute.xlu0 %7424
        %7426 = vrot.lane.b32.xlu0 %v7088, 24
        %v7427 = vpop.permute.xlu0 %7426
        %7428 = vrot.lane.b32.xlu0 %v7089, 24
        %v7429 = vpop.permute.xlu0 %7428
        %7430 = vrot.lane.b32.xlu0 %v7090, 24
        %v7431 = vpop.permute.xlu0 %7430
        %7432 = vrot.lane.b32.xlu0 %v7091, 24
        %v7433 = vpop.permute.xlu0 %7432
        %7434 = vrot.lane.b32.xlu0 %v7092, 24
        %v7435 = vpop.permute.xlu0 %7434
        %7436 = vrot.lane.b32.xlu0 %v7093, 24
        %v7437 = vpop.permute.xlu0 %7436
        %7438 = vrot.lane.b32.xlu0 %v7094, 24
        %v7439 = vpop.permute.xlu0 %7438
        %7440 = vrot.lane.b32.xlu0 %v7095, 24
        %v7441 = vpop.permute.xlu0 %7440
        %7442 = vrot.lane.b32.xlu0 %v7096, 24
        %v7443 = vpop.permute.xlu0 %7442
        %7444 = vrot.lane.b32.xlu0 %v7097, 24
        %v7445 = vpop.permute.xlu0 %7444
        %7446 = vrot.lane.b32.xlu0 %v7098, 24
        %v7447 = vpop.permute.xlu0 %7446
        %7448 = vrot.lane.b32.xlu0 %v7099, 24
        %v7449 = vpop.permute.xlu0 %7448
        %7450 = vrot.lane.b32.xlu0 %v7100, 24
        %v7451 = vpop.permute.xlu0 %7450
        %7452 = vrot.lane.b32.xlu0 %v7101, 24
        %v7453 = vpop.permute.xlu0 %7452
        %v7486 = vsel %vm1775, %v697, %v7135
        %v7487 = vsel %vm1775, %v698, %v7137
        %v7488 = vsel %vm1775, %v699, %v7139
        %v7489 = vsel %vm1775, %v700, %v7141
        %v7490 = vsel %vm1775, %v701, %v7143
        %v7491 = vsel %vm1775, %v702, %v7145
        %v7492 = vsel %vm1775, %v703, %v7147
        %v7493 = vsel %vm1775, %v704, %v7149
        %v7494 = vsel %vm1775, %v705, %v7151
        %v7495 = vsel %vm1775, %v706, %v7153
        %v7496 = vsel %vm1775, %v707, %v7155
        %v7497 = vsel %vm1775, %v708, %v7157
        %v7498 = vsel %vm1775, %v709, %v7159
        %v7499 = vsel %vm1775, %v710, %v7161
        %v7500 = vsel %vm1775, %v711, %v7163
        %v7501 = vsel %vm1775, %v712, %v7165
        %v7502 = vsel %vm1775, %v713, %v7167
        %v7503 = vsel %vm1775, %v714, %v7169
        %v7504 = vsel %vm1775, %v715, %v7171
        %v7505 = vsel %vm1775, %v716, %v7173
        %v7506 = vsel %vm1775, %v717, %v7175
        %v7507 = vsel %vm1775, %v718, %v7177
        %v7508 = vsel %vm1775, %v719, %v7179
        %v7509 = vsel %vm1775, %v720, %v7181
        %v7510 = vsel %vm1775, %v721, %v7183
        %v7511 = vsel %vm1775, %v722, %v7185
        %v7512 = vsel %vm1775, %v723, %v7187
        %v7513 = vsel %vm1775, %v724, %v7189
        %v7514 = vsel %vm1775, %v725, %v7191
        %v7515 = vsel %vm1775, %v726, %v7193
        %v7516 = vsel %vm1775, %v727, %v7195
        %v7517 = vsel %vm1775, %v728, %v7197
        %v7518 = vsel %vm1840, %v7486, %v7263
        %v7519 = vsel %vm1840, %v7487, %v7265
        %v7520 = vsel %vm1840, %v7488, %v7267
        %v7521 = vsel %vm1840, %v7489, %v7269
        %v7522 = vsel %vm1840, %v7490, %v7271
        %v7523 = vsel %vm1840, %v7491, %v7273
        %v7524 = vsel %vm1840, %v7492, %v7275
        %v7525 = vsel %vm1840, %v7493, %v7277
        %v7526 = vsel %vm1840, %v7494, %v7279
        %v7527 = vsel %vm1840, %v7495, %v7281
        %v7528 = vsel %vm1840, %v7496, %v7283
        %v7529 = vsel %vm1840, %v7497, %v7285
        %v7530 = vsel %vm1840, %v7498, %v7287
        %v7531 = vsel %vm1840, %v7499, %v7289
        %v7532 = vsel %vm1840, %v7500, %v7291
        %v7533 = vsel %vm1840, %v7501, %v7293
        %v7534 = vsel %vm1840, %v7502, %v7295
        %v7535 = vsel %vm1840, %v7503, %v7297
        %v7536 = vsel %vm1840, %v7504, %v7299
        %v7537 = vsel %vm1840, %v7505, %v7301
        %v7538 = vsel %vm1840, %v7506, %v7303
        %v7539 = vsel %vm1840, %v7507, %v7305
        %v7540 = vsel %vm1840, %v7508, %v7307
        %v7541 = vsel %vm1840, %v7509, %v7309
        %v7542 = vsel %vm1840, %v7510, %v7311
        %v7543 = vsel %vm1840, %v7511, %v7313
        %v7544 = vsel %vm1840, %v7512, %v7315
        %v7545 = vsel %vm1840, %v7513, %v7317
        %v7546 = vsel %vm1840, %v7514, %v7319
        %v7547 = vsel %vm1840, %v7515, %v7321
        %v7548 = vsel %vm1840, %v7516, %v7323
        %v7549 = vsel %vm1840, %v7517, %v7325
        %v7550 = vsel %vm1906, %v7518, %v7391
        %v7551 = vsel %vm1906, %v7519, %v7393
        %v7552 = vsel %vm1906, %v7520, %v7395
        %v7553 = vsel %vm1906, %v7521, %v7397
        %v7554 = vsel %vm1906, %v7522, %v7399
        %v7555 = vsel %vm1906, %v7523, %v7401
        %v7556 = vsel %vm1906, %v7524, %v7403
        %v7557 = vsel %vm1906, %v7525, %v7405
        %v7558 = vsel %vm1906, %v7526, %v7407
        %v7559 = vsel %vm1906, %v7527, %v7409
        %v7560 = vsel %vm1906, %v7528, %v7411
        %v7561 = vsel %vm1906, %v7529, %v7413
        %v7562 = vsel %vm1906, %v7530, %v7415
        %v7563 = vsel %vm1906, %v7531, %v7417
        %v7564 = vsel %vm1906, %v7532, %v7419
        %v7565 = vsel %vm1906, %v7533, %v7421
        %v7566 = vsel %vm1906, %v7534, %v7423
        %v7567 = vsel %vm1906, %v7535, %v7425
        %v7568 = vsel %vm1906, %v7536, %v7427
        %v7569 = vsel %vm1906, %v7537, %v7429
        %v7570 = vsel %vm1906, %v7538, %v7431
        %v7571 = vsel %vm1906, %v7539, %v7433
        %v7572 = vsel %vm1906, %v7540, %v7435
        %v7573 = vsel %vm1906, %v7541, %v7437
        %v7574 = vsel %vm1906, %v7542, %v7439
        %v7575 = vsel %vm1906, %v7543, %v7441
        %v7576 = vsel %vm1906, %v7544, %v7443
        %v7577 = vsel %vm1906, %v7545, %v7445
        %v7578 = vsel %vm1906, %v7546, %v7447
        %v7579 = vsel %vm1906, %v7547, %v7449
        %v7580 = vsel %vm1906, %v7548, %v7451
        %v7581 = vsel %vm1906, %v7549, %v7453
        %7582 = vst.msk [vmem:[%s325] sm:$0xff] %vm1972, %v7550
        %7583 = vst.msk [vmem:[%s325 + $0x8] sm:$0xff] %vm1972, %v7551
        %7584 = vst.msk [vmem:[%s325 + $0x10] sm:$0xff] %vm1972, %v7552
        %7585 = vst.msk [vmem:[%s325 + $0x18] sm:$0xff] %vm1972, %v7553
        %7586 = vst.msk [vmem:[%s325 + $0x20] sm:$0xff] %vm1972, %v7554
        %7587 = vst.msk [vmem:[%s325 + $0x28] sm:$0xff] %vm1972, %v7555
        %7588 = vst.msk [vmem:[%s325 + $0x30] sm:$0xff] %vm1972, %v7556
        %7589 = vst.msk [vmem:[%s325 + $0x38] sm:$0xff] %vm1972, %v7557
        %7590 = vst.msk [vmem:[%s325 + $0x40] sm:$0xff] %vm1972, %v7558
        %7591 = vst.msk [vmem:[%s325 + $0x48] sm:$0xff] %vm1972, %v7559
        %7592 = vst.msk [vmem:[%s325 + $0x50] sm:$0xff] %vm1972, %v7560
        %7593 = vst.msk [vmem:[%s325 + $0x58] sm:$0xff] %vm1972, %v7561
        %7594 = vst.msk [vmem:[%s325 + $0x60] sm:$0xff] %vm1972, %v7562
        %7595 = vst.msk [vmem:[%s325 + $0x68] sm:$0xff] %vm1972, %v7563
        %7596 = vst.msk [vmem:[%s325 + $0x70] sm:$0xff] %vm1972, %v7564
        %7597 = vst.msk [vmem:[%s325 + $0x78] sm:$0xff] %vm1972, %v7565
        %7598 = vst.msk [vmem:[%s325 + $0x80] sm:$0xff] %vm1972, %v7566
        %7599 = vst.msk [vmem:[%s325 + $0x88] sm:$0xff] %vm1972, %v7567
        %7600 = vst.msk [vmem:[%s325 + $0x90] sm:$0xff] %vm1972, %v7568
        %7601 = vst.msk [vmem:[%s325 + $0x98] sm:$0xff] %vm1972, %v7569
        %7602 = vst.msk [vmem:[%s325 + $0xa0] sm:$0xff] %vm1972, %v7570
        %7603 = vst.msk [vmem:[%s325 + $0xa8] sm:$0xff] %vm1972, %v7571
        %7604 = vst.msk [vmem:[%s325 + $0xb0] sm:$0xff] %vm1972, %v7572
        %7605 = vst.msk [vmem:[%s325 + $0xb8] sm:$0xff] %vm1972, %v7573
        %7606 = vst.msk [vmem:[%s325 + $0xc0] sm:$0xff] %vm1972, %v7574
        %7607 = vst.msk [vmem:[%s325 + $0xc8] sm:$0xff] %vm1972, %v7575
        %7608 = vst.msk [vmem:[%s325 + $0xd0] sm:$0xff] %vm1972, %v7576
        %7609 = vst.msk [vmem:[%s325 + $0xd8] sm:$0xff] %vm1972, %v7577
        %7610 = vst.msk [vmem:[%s325 + $0xe0] sm:$0xff] %vm1972, %v7578
        %7611 = vst.msk [vmem:[%s325 + $0xe8] sm:$0xff] %vm1972, %v7579
        %7612 = vst.msk [vmem:[%s325 + $0xf0] sm:$0xff] %vm1972, %v7580
        %7613 = vst.msk [vmem:[%s325 + $0xf8] sm:$0xff] %vm1972, %v7581
        %s7614 = sand.u32 %s225, 1
        %s7615 = scalar_lea.sflag [#allocation3], %s7614
        %s7616 = sand.u32 %s225, 1
        %s7617 = smul.addr %s7616, 256
        %s7618 = scalar_lea.vmem [#allocation2], %s7617
        // Predicated region
        $region57: #{inception_forward.1} parent=55 // pred_check
          %p7619 = pneg %p235
        $region58: #{inception_forward.1} parent=55 // pred_check_branch
          %7621 = sbr.rel (%p7619) target = $region60
        $region59: #{inception_forward.1} parent=55 // pred_region
          %s7623 = ssub.s32 4096, 4096
          %7624 = vsyncadd %s7615, %s7623
          %s7625 = smul.addr %s23, 32
          %s7626 = smul.addr %s7625, 128
          %s7627 = scalar_lea.hbm %s9, %s7626
          %s7628 = sshll.u32 %s7618, 4
          %s7629 = int_to_ptr.vmem [resolvable:$true] %s7628
          %7634 = dma.vmem_to_hbm [thread:$0]  %s7629, 4096, %s7627, %s7615, 128, 128, 8
        $region60: #{inception_forward.1} parent=55 // pred_fallthru
          _
      $region56: #{inception_forward.1} parent=5 // pred_fallthru
        _
      %p7635 = scmp.le.s32.totalorder 2, %s18
      // Predicated region
      $region61: #{inception_forward.1} parent=5 // pred_check
        %p7636 = pneg %p7635
      $region62: #{inception_forward.1} parent=5 // pred_check_branch
        %7638 = sbr.rel (%p7636) target = $region64
      $region63: #{inception_forward.1} parent=5 // pred_region
        %s7639 = ssub.s32 %s18, 2
        // Predicated region
        $region65: #{inception_forward.1} parent=63 // pred_check
          %p7640 = pneg %p241
        $region66: #{inception_forward.1} parent=63 // pred_check_branch
          %7642 = sbr.rel (%p7640) target = $region68
        $region67: #{inception_forward.1} parent=63 // pred_region
          %s7643 = sand.u32 %s226, 1
          %s7644 = scalar_lea.sflag [#allocation3], %s7643
          %s7645 = sand.u32 %s226, 1
          %s7646 = smul.addr %s7645, 256
          %s7647 = scalar_lea.vmem [#allocation2], %s7646
          %7648 = dma.done %s7644, 4096
        $region68: #{inception_forward.1} parent=63 // pred_fallthru
          _
      $region64: #{inception_forward.1} parent=5 // pred_fallthru
        _
    $region6: #{inception_forward.1} parent=1 // loop_footer
      %s22 = sadd.s32 1, %s18
    $region7: #{inception_forward.1} parent=1 // loop_footer_branch
      %17 = sbr.rel target = $region3
    $region8: #{inception_forward.1} parent=1 // loop_exit
      _
    %7649 = vsyncpa [#allocation3], 1
    %s7650 = scalar_lea.sflag [#allocation3], 1
    %7651 = vsyncpa %s7650, 1

</llo_original>
